<compile_context>
chip_gen: v6e
topology: v6e:2x2x1
jax: 0.10.0
libtpu: 0.0.40
codegen_flags: <defaults>
</compile_context>

<pallas_src>
import functools
import math

import jax
import jax.numpy as jnp
from jax.experimental import pallas as pl
from jax.experimental.pallas import tpu as pltpu


# ----------------------------------------------------------------------------
# Tile-size helpers (respect the (8,128) block constraints)
# ----------------------------------------------------------------------------

def _pick_sub_tile(dim, pref):
    """Largest power-of-two tile (>=8) dividing dim, else full dim."""
    t = pref
    while t >= 8:
        if dim % t == 0:
            return t
        t //= 2
    return dim


def _pick_lane_tile(dim, pref):
    """Largest power-of-two tile (>=128) dividing dim, else full dim."""
    t = pref
    while t >= 128:
        if dim % t == 0:
            return t
        t //= 2
    return dim


_VMEM_LIMIT = 64 * 1024 * 1024


# ----------------------------------------------------------------------------
# Tiled linear:  o = act(x @ w + b)
# ----------------------------------------------------------------------------

def _matmul_kernel(x_ref, w_ref, b_ref, o_ref, acc_ref, *, activation):
    @pl.when(pl.program_id(2) == 0)
    def _():
        acc_ref[...] = jnp.zeros_like(acc_ref)

    acc_ref[...] += jnp.dot(x_ref[...], w_ref[...],
                            preferred_element_type=jnp.float32)

    @pl.when(pl.program_id(2) == pl.num_programs(2) - 1)
    def _():
        y = acc_ref[...] + b_ref[...].astype(jnp.float32)
        if activation == "relu":
            y = jnp.maximum(y, 0.0)
        o_ref[...] = y.astype(o_ref.dtype)


def linear(x, w, b, activation="none"):
    """x:[N,Din] (bf16) @ w:[Din,Dout] (bf16) + b:[Dout], f32 accumulation."""
    N, Din = x.shape
    Dout = w.shape[1]
    tm = _pick_sub_tile(N, 256)
    tn = _pick_lane_tile(Dout, 256)
    tk = _pick_lane_tile(Din, 512)
    kern = functools.partial(_matmul_kernel, activation=activation)
    return pl.pallas_call(
        kern,
        out_shape=jax.ShapeDtypeStruct((N, Dout), x.dtype),
        grid=(N // tm, Dout // tn, Din // tk),
        in_specs=[
            pl.BlockSpec((tm, tk), lambda i, j, k: (i, k)),
            pl.BlockSpec((tk, tn), lambda i, j, k: (k, j)),
            pl.BlockSpec((1, tn), lambda i, j, k: (0, j)),
        ],
        out_specs=pl.BlockSpec((tm, tn), lambda i, j, k: (i, j)),
        scratch_shapes=[pltpu.VMEM((tm, tn), jnp.float32)],
        compiler_params=pltpu.CompilerParams(
            dimension_semantics=("parallel", "parallel", "arbitrary"),
            vmem_limit_bytes=_VMEM_LIMIT),
    )(x, w, b.reshape(1, Dout))


# ----------------------------------------------------------------------------
# Fused position-wise FFN:  o = relu(x @ W1 + b1) @ W2 + b2  (h stays in VMEM)
# ----------------------------------------------------------------------------

def _ffn_kernel(x_ref, w1_ref, b1_ref, w2_ref, b2_ref, o_ref):
    x = x_ref[...]
    h = jnp.dot(x, w1_ref[...], preferred_element_type=jnp.float32)
    h = jnp.maximum(h + b1_ref[...].astype(jnp.float32), 0.0).astype(x.dtype)
    y = jnp.dot(h, w2_ref[...], preferred_element_type=jnp.float32)
    y = y + b2_ref[...].astype(jnp.float32)
    o_ref[...] = y.astype(o_ref.dtype)


def ffn(x, w1, b1, w2, b2):
    N, D = x.shape
    F = w1.shape[1]
    tm = _pick_sub_tile(N, 256)
    return pl.pallas_call(
        _ffn_kernel,
        out_shape=jax.ShapeDtypeStruct((N, D), x.dtype),
        grid=(N // tm,),
        in_specs=[
            pl.BlockSpec((tm, D), lambda i: (i, 0)),
            pl.BlockSpec((D, F), lambda i: (0, 0)),
            pl.BlockSpec((1, F), lambda i: (0, 0)),
            pl.BlockSpec((F, D), lambda i: (0, 0)),
            pl.BlockSpec((1, D), lambda i: (0, 0)),
        ],
        out_specs=pl.BlockSpec((tm, D), lambda i: (i, 0)),
        compiler_params=pltpu.CompilerParams(
            dimension_semantics=("parallel",),
            vmem_limit_bytes=_VMEM_LIMIT),
    )(x, w1, b1.reshape(1, F), w2, b2.reshape(1, D))


# ----------------------------------------------------------------------------
# Fused residual-add + LayerNorm (row-tiled)
# ----------------------------------------------------------------------------

def _add_ln_kernel(x_ref, r_ref, g_ref, b_ref, o_ref, *, eps):
    x = x_ref[...].astype(jnp.float32) + r_ref[...].astype(jnp.float32)
    mu = jnp.mean(x, axis=-1, keepdims=True)
    xc = x - mu
    var = jnp.mean(xc * xc, axis=-1, keepdims=True)
    y = xc * jax.lax.rsqrt(var + eps) * g_ref[...] + b_ref[...]
    o_ref[...] = y.astype(o_ref.dtype)


def add_layernorm(x, r, gamma, beta, eps=1e-5):
    N, D = x.shape
    tm = _pick_sub_tile(N, 256)
    kern = functools.partial(_add_ln_kernel, eps=eps)
    return pl.pallas_call(
        kern,
        out_shape=jax.ShapeDtypeStruct((N, D), x.dtype),
        grid=(N // tm,),
        in_specs=[
            pl.BlockSpec((tm, D), lambda i: (i, 0)),
            pl.BlockSpec((tm, D), lambda i: (i, 0)),
            pl.BlockSpec((1, D), lambda i: (0, 0)),
            pl.BlockSpec((1, D), lambda i: (0, 0)),
        ],
        out_specs=pl.BlockSpec((tm, D), lambda i: (i, 0)),
        compiler_params=pltpu.CompilerParams(
            dimension_semantics=("parallel",)),
    )(x, r, gamma.reshape(1, D), beta.reshape(1, D))


# ----------------------------------------------------------------------------
# Flash-style multi-head attention (online softmax, KV tiled)
# ----------------------------------------------------------------------------

def _flash_attn_kernel(q_ref, k_ref, v_ref, o_ref, m_ref, l_ref, acc_ref, *,
                       causal, heads, head_dim, q_tile, kv_tile):
    qi = pl.program_id(1)
    kv = pl.program_id(2)

    @pl.when(kv == 0)
    def _():
        m_ref[...] = jnp.full_like(m_ref, -1e30)
        l_ref[...] = jnp.zeros_like(l_ref)
        acc_ref[...] = jnp.zeros_like(acc_ref)

    def compute():
        q = q_ref[0]                       # [Tq, D]   (1/sqrt(Dh) already in Wq)
        k = k_ref[0]                       # [Tk, D]
        v = v_ref[0]                       # [Tk, D]
        Tq, Tk = q.shape[0], k.shape[0]
        if causal:
            row = jax.lax.broadcasted_iota(jnp.int32, (Tq, Tk), 0) + qi * q_tile
            col = jax.lax.broadcasted_iota(jnp.int32, (Tq, Tk), 1) + kv * kv_tile
            mask = col <= row
        for h in range(heads):
            lo = h * head_dim
            hi = lo + head_dim
            q_h = q[:, lo:hi]
            k_h = k[:, lo:hi]
            v_h = v[:, lo:hi]
            s = jax.lax.dot_general(q_h, k_h, (((1,), (1,)), ((), ())),
                                    preferred_element_type=jnp.float32)
            if causal:
                s = jnp.where(mask, s, jnp.float32(-1e30))
            m_old = m_ref[h]
            m_new = jnp.maximum(m_old, jnp.max(s, axis=-1, keepdims=True))
            alpha = jnp.exp(m_old - m_new)
            p = jnp.exp(s - m_new)
            l_ref[h] = alpha * l_ref[h] + jnp.sum(p, axis=-1, keepdims=True)
            acc_ref[h] = alpha * acc_ref[h] + jnp.dot(
                p.astype(v_h.dtype), v_h, preferred_element_type=jnp.float32)
            m_ref[h] = m_new

    if causal:
        # Skip KV tiles that are entirely in the future of this Q tile.
        @pl.when(kv * kv_tile <= qi * q_tile + (q_tile - 1))
        def _():
            compute()
    else:
        compute()

    @pl.when(kv == pl.num_programs(2) - 1)
    def _():
        outs = []
        for h in range(heads):
            inv = pl.reciprocal(l_ref[h], approx=True)
            outs.append(acc_ref[h] * inv)
        o_ref[0] = jnp.concatenate(outs, axis=-1).astype(o_ref.dtype)


def flash_attention(q_arr, q_col, k_arr, k_col, v_arr, v_col, *,
                    Sq, Sk, D, heads, causal):
    """q_arr:[B,Sq,*], k_arr/v_arr:[B,Sk,*]; *_col selects a D-wide column block."""
    B = q_arr.shape[0]
    Dh = D // heads
    Tq = _pick_sub_tile(Sq, 256)
    Tk = _pick_sub_tile(Sk, 128)
    kern = functools.partial(_flash_attn_kernel, causal=causal, heads=heads,
                             head_dim=Dh, q_tile=Tq, kv_tile=Tk)
    return pl.pallas_call(
        kern,
        out_shape=jax.ShapeDtypeStruct((B, Sq, D), q_arr.dtype),
        grid=(B, Sq // Tq, Sk // Tk),
        in_specs=[
            pl.BlockSpec((1, Tq, D), lambda b, qi, kv: (b, qi, q_col)),
            pl.BlockSpec((1, Tk, D), lambda b, qi, kv: (b, kv, k_col)),
            pl.BlockSpec((1, Tk, D), lambda b, qi, kv: (b, kv, v_col)),
        ],
        out_specs=pl.BlockSpec((1, Tq, D), lambda b, qi, kv: (b, qi, 0)),
        scratch_shapes=[
            pltpu.VMEM((heads, Tq, 1), jnp.float32),   # running max
            pltpu.VMEM((heads, Tq, 1), jnp.float32),   # running denom
            pltpu.VMEM((heads, Tq, Dh), jnp.float32),  # output accumulator
        ],
        compiler_params=pltpu.CompilerParams(
            dimension_semantics=("parallel", "parallel", "arbitrary"),
            vmem_limit_bytes=_VMEM_LIMIT),
    )(q_arr, k_arr, v_arr)


def _attn_operands(packed, D, n):
    """Return n (array, column-block) pairs for flash_attention.

    If D is lane-aligned (multiple of 128) the packed projection output is fed
    directly and head-group columns are selected by the BlockSpec index_map
    (free DMA stride, no extra HBM pass).  Otherwise fall back to XLA column
    slices (a block narrower than the array's last dim must be 128-aligned).
    """
    if D % 128 == 0:
        return [(packed, i) for i in range(n)]
    return [(packed[..., i * D:(i + 1) * D], 0) for i in range(n)]


# ----------------------------------------------------------------------------
# Decoder block / decoder stack
# ----------------------------------------------------------------------------

def decoder_block(enc, dec, p, config):
    B, S_dec, D = dec.shape
    S_enc = enc.shape[1]
    H = config["heads"]
    eps = config["eps"]

    x2d = dec.reshape(B * S_dec, D)
    e2d = enc.reshape(B * S_enc, D)

    # --- masked (causal) self-attention --------------------------------------
    qkv = linear(x2d, p["wqkv1"], p["bqkv1"])                 # [N, 3D]
    qkv3 = qkv.reshape(B, S_dec, 3 * D)
    (qa, qc), (ka, kc), (va, vc) = _attn_operands(qkv3, D, 3)
    attn = flash_attention(qa, qc, ka, kc, va, vc,
                           Sq=S_dec, Sk=S_dec, D=D, heads=H, causal=True)
    a = linear(attn.reshape(B * S_dec, D), p["wo1"], p["bo1"])
    x2d = add_layernorm(x2d, a, p["g1"], p["be1"], eps)

    # --- cross-attention (K/V from encoder) ----------------------------------
    q = linear(x2d, p["wq2"], p["bq2"])                       # [N, D]
    kv = linear(e2d, p["wkv2"], p["bkv2"])                    # [Ne, 2D]
    q3 = q.reshape(B, S_dec, D)
    kv3 = kv.reshape(B, S_enc, 2 * D)
    (ka, kc), (va, vc) = _attn_operands(kv3, D, 2)
    attn = flash_attention(q3, 0, ka, kc, va, vc,
                           Sq=S_dec, Sk=S_enc, D=D, heads=H, causal=False)
    a = linear(attn.reshape(B * S_dec, D), p["wo2"], p["bo2"])
    x2d = add_layernorm(x2d, a, p["g2"], p["be2"], eps)

    # --- position-wise FFN ----------------------------------------------------
    h = ffn(x2d, p["wf1"], p["bf1"], p["wf2"], p["bf2"])
    x2d = add_layernorm(x2d, h, p["g3"], p["be3"], eps)

    return x2d.reshape(B, S_dec, D)


def decoder_forward(enc, dec, params, config):
    """Equivalent of Decoder.forward: loop DecoderNo blocks over DecoderInput."""
    out_dtype = dec.dtype
    enc = enc.astype(jnp.bfloat16)   # bf16 operands on the MXU, f32 accumulation
    dec = dec.astype(jnp.bfloat16)
    for p in params:
        dec = decoder_block(enc, dec, p, config)
    return dec.astype(out_dtype)


# ----------------------------------------------------------------------------
# Deterministic parameter init (bf16 weights, f32 LN params)
# ----------------------------------------------------------------------------

def _init_linear(key, din, dout, dtype=jnp.bfloat16):
    w = (0.02 * jax.random.normal(key, (din, dout), jnp.float32)).astype(dtype)
    b = jnp.zeros((dout,), dtype)
    return w, b


def init_params(key, config):
    D, F, H = config["d_model"], config["d_ff"], config["heads"]
    scale = 1.0 / math.sqrt(D // H)
    params = []
    for blk in range(config["DecoderNo"]):
        keys = jax.random.split(jax.random.fold_in(key, blk), 10)
        p = {}
        # Fused QKV for self-attention; 1/sqrt(Dh) folded into the Q projection.
        wq1, bq1 = _init_linear(keys[0], D, D)
        wk1, bk1 = _init_linear(keys[1], D, D)
        wv1, bv1 = _init_linear(keys[2], D, D)
        p["wqkv1"] = jnp.concatenate(
            [(wq1.astype(jnp.float32) * scale).astype(wq1.dtype), wk1, wv1], axis=1)
        p["bqkv1"] = jnp.concatenate(
            [(bq1.astype(jnp.float32) * scale).astype(bq1.dtype), bk1, bv1], axis=0)
        p["wo1"], p["bo1"] = _init_linear(keys[3], D, D)
        # Cross-attention: scaled Q projection + fused K/V projection.
        wq2, bq2 = _init_linear(keys[4], D, D)
        p["wq2"] = (wq2.astype(jnp.float32) * scale).astype(wq2.dtype)
        p["bq2"] = (bq2.astype(jnp.float32) * scale).astype(bq2.dtype)
        wk2, bk2 = _init_linear(keys[5], D, D)
        wv2, bv2 = _init_linear(keys[6], D, D)
        p["wkv2"] = jnp.concatenate([wk2, wv2], axis=1)
        p["bkv2"] = jnp.concatenate([bk2, bv2], axis=0)
        p["wo2"], p["bo2"] = _init_linear(keys[7], D, D)
        # FFN
        p["wf1"], p["bf1"] = _init_linear(keys[8], D, F)
        p["wf2"], p["bf2"] = _init_linear(keys[9], F, D)
        # LayerNorms (f32)
        for n in ("1", "2", "3"):
            p["g" + n] = jnp.ones((D,), jnp.float32)
            p["be" + n] = jnp.zeros((D,), jnp.float32)
        params.append(p)
    return params


# ----------------------------------------------------------------------------

if __name__ == "__main__":
    config = {"DecoderNo": 2, "d_model": 32, "heads": 4, "d_ff": 64, "eps": 1e-5}
    B, S_enc, S_dec, D = 2, 8, 8, config["d_model"]

    key = jax.random.PRNGKey(0)
    k_enc, k_dec, k_par = jax.random.split(key, 3)
    encoder_input = jax.random.normal(k_enc, (B, S_enc, D), jnp.float32)
    decoder_input = jax.random.normal(k_dec, (B, S_dec, D), jnp.float32)
    params = init_params(k_par, config)

    fwd = jax.jit(functools.partial(decoder_forward, config=config))
    out = fwd(encoder_input, decoder_input, params)
    out = jax.block_until_ready(out)

    assert out.shape == (B, S_dec, D), out.shape
    assert bool(jnp.all(jnp.isfinite(out)))
    print("KERNEL_OK")
</pallas_src>

<mosaic_0001>
module attributes {stable_mosaic.version = 11 : i64} {
  func.func @_flash_attn_kernel(%arg0: i32, %arg1: i32, %arg2: i32, %arg3: memref<1x8x32xbf16, #tpu.memory_space<vmem>>, %arg4: memref<1x8x32xbf16, #tpu.memory_space<vmem>>, %arg5: memref<1x8x32xbf16, #tpu.memory_space<vmem>>, %arg6: memref<1x8x32xbf16, #tpu.memory_space<vmem>>, %arg7: memref<4x8x1xf32, #tpu.memory_space<vmem>>, %arg8: memref<4x8x1xf32, #tpu.memory_space<vmem>>, %arg9: memref<4x8x8xf32, #tpu.memory_space<vmem>>) attributes {dimension_semantics = [#tpu.dimension_semantics<parallel>, #tpu.dimension_semantics<parallel>, #tpu.dimension_semantics<arbitrary>], iteration_bounds = array<i64: 2, 1, 1>, scalar_prefetch = 0 : i64, scratch_operands = 3 : i64, tpu.core_type = #tpu.core_type<tc>, window_params = [{transform_indices = @transform_0, window_bounds = array<i64: 1, 8, 32>}, {transform_indices = @transform_1, window_bounds = array<i64: 1, 8, 32>}, {transform_indices = @transform_2, window_bounds = array<i64: 1, 8, 32>}, {transform_indices = @transform_3, window_bounds = array<i64: 1, 8, 32>}]} {
    %c0_i32 = arith.constant 0 : i32
    %0 = arith.cmpi eq, %arg2, %c0_i32 : i32
    %1 = arith.extui %0 : i1 to i32
    %c0_i32_0 = arith.constant 0 : i32
    %2 = arith.cmpi ne, %1, %c0_i32_0 : i32
    scf.if %2 {
      %cst = arith.constant -1.000000e+30 : f32
      %12 = vector.broadcast %cst : f32 to vector<4x8x1xf32>
      %c0 = arith.constant 0 : index
      %c0_5 = arith.constant 0 : index
      %c0_6 = arith.constant 0 : index
      %13 = vector.load %arg7[%c0, %c0_5, %c0_6] : memref<4x8x1xf32, #tpu.memory_space<vmem>>, vector<4x8x1xf32>
      tpu.vector_store %arg7[%c0, %c0_5, %c0_6], %12 {strides = array<i32>} : memref<4x8x1xf32, #tpu.memory_space<vmem>>, vector<4x8x1xf32>,
      %cst_7 = arith.constant 0.000000e+00 : f32
      %14 = vector.broadcast %cst_7 : f32 to vector<4x8x1xf32>
      %c0_8 = arith.constant 0 : index
      %c0_9 = arith.constant 0 : index
      %c0_10 = arith.constant 0 : index
      %15 = vector.load %arg8[%c0_8, %c0_9, %c0_10] : memref<4x8x1xf32, #tpu.memory_space<vmem>>, vector<4x8x1xf32>
      tpu.vector_store %arg8[%c0_8, %c0_9, %c0_10], %14 {strides = array<i32>} : memref<4x8x1xf32, #tpu.memory_space<vmem>>, vector<4x8x1xf32>,
      %cst_11 = arith.constant 0.000000e+00 : f32
      %16 = vector.broadcast %cst_11 : f32 to vector<4x8x8xf32>
      %c0_12 = arith.constant 0 : index
      %c0_13 = arith.constant 0 : index
      %c0_14 = arith.constant 0 : index
      %17 = vector.load %arg9[%c0_12, %c0_13, %c0_14] : memref<4x8x8xf32, #tpu.memory_space<vmem>>, vector<4x8x8xf32>
      tpu.vector_store %arg9[%c0_12, %c0_13, %c0_14], %16 {strides = array<i32>} : memref<4x8x8xf32, #tpu.memory_space<vmem>>, vector<4x8x8xf32>,
    } else {
    }
    %c8_i32 = arith.constant 8 : i32
    %3 = arith.muli %arg2, %c8_i32 : i32
    %c8_i32_1 = arith.constant 8 : i32
    %4 = arith.muli %arg1, %c8_i32_1 : i32
    %c7_i32 = arith.constant 7 : i32
    %5 = arith.addi %4, %c7_i32 : i32
    %6 = arith.cmpi sle, %3, %5 : i32
    %7 = arith.extui %6 : i1 to i32
    %c0_i32_2 = arith.constant 0 : i32
    %8 = arith.cmpi ne, %7, %c0_i32_2 : i32
    scf.if %8 {
      %c0 = arith.constant 0 : index
      %c0_5 = arith.constant 0 : index
      %c0_6 = arith.constant 0 : index
      %12 = vector.load %arg3[%c0, %c0_5, %c0_6] : memref<1x8x32xbf16, #tpu.memory_space<vmem>>, vector<1x8x32xbf16>
      %13 = vector.shape_cast %12 : vector<1x8x32xbf16> to vector<8x32xbf16>
      %c0_7 = arith.constant 0 : index
      %c0_8 = arith.constant 0 : index
      %c0_9 = arith.constant 0 : index
      %14 = vector.load %arg4[%c0_7, %c0_8, %c0_9] : memref<1x8x32xbf16, #tpu.memory_space<vmem>>, vector<1x8x32xbf16>
      %15 = vector.shape_cast %14 : vector<1x8x32xbf16> to vector<8x32xbf16>
      %c0_10 = arith.constant 0 : index
      %c0_11 = arith.constant 0 : index
      %c0_12 = arith.constant 0 : index
      %16 = vector.load %arg5[%c0_10, %c0_11, %c0_12] : memref<1x8x32xbf16, #tpu.memory_space<vmem>>, vector<1x8x32xbf16>
      %17 = vector.shape_cast %16 : vector<1x8x32xbf16> to vector<8x32xbf16>
      %18 = tpu.iota {dimensions = array<i32: 0>} : vector<8x8xi32>
      %c8_i32_13 = arith.constant 8 : i32
      %19 = arith.muli %arg1, %c8_i32_13 : i32
      %20 = vector.broadcast %19 : i32 to vector<8x8xi32>
      %21 = arith.addi %18, %20 : vector<8x8xi32>
      %22 = tpu.iota {dimensions = array<i32: 1>} : vector<8x8xi32>
      %c8_i32_14 = arith.constant 8 : i32
      %23 = arith.muli %arg2, %c8_i32_14 : i32
      %24 = vector.broadcast %23 : i32 to vector<8x8xi32>
      %25 = arith.addi %22, %24 : vector<8x8xi32>
      %26 = arith.cmpi sle, %25, %21 : vector<8x8xi32>
      %27 = vector.extract_strided_slice %13 {offsets = [0, 0], sizes = [8, 8], strides = [1, 1]} : vector<8x32xbf16> to vector<8x8xbf16>
      %28 = vector.extract_strided_slice %15 {offsets = [0, 0], sizes = [8, 8], strides = [1, 1]} : vector<8x32xbf16> to vector<8x8xbf16>
      %29 = vector.extract_strided_slice %17 {offsets = [0, 0], sizes = [8, 8], strides = [1, 1]} : vector<8x32xbf16> to vector<8x8xbf16>
      %cst = arith.constant dense<0.000000e+00> : vector<8x8xf32>
      %30 = tpu.matmul %27, %28, %cst {dimension_numbers = #tpu.dot_dimension_numbers<[1], [1], [0], [0], [0, 0, 1, 0], [], []>} : vector<8x8xbf16>, vector<8x8xbf16>, vector<8x8xf32> -> vector<8x8xf32>
      %cst_15 = arith.constant -1.000000e+30 : f32
      %31 = vector.broadcast %cst_15 : f32 to vector<8x8xf32>
      %32 = arith.select %26, %30, %31 : vector<8x8xi1>, vector<8x8xf32>
      %c0_16 = arith.constant 0 : index
      %c0_17 = arith.constant 0 : index
      %c0_18 = arith.constant 0 : index
      %33 = vector.load %arg7[%c0_16, %c0_17, %c0_18] : memref<4x8x1xf32, #tpu.memory_space<vmem>>, vector<1x8x1xf32>
      %34 = vector.shape_cast %33 : vector<1x8x1xf32> to vector<8x1xf32>
      %cst_19 = arith.constant dense<0xFF800000> : vector<8xf32>
      %35 = vector.multi_reduction <maximumf>, %32, %cst_19 [1] : vector<8x8xf32> to vector<8xf32>
      %36 = vector.shape_cast %35 : vector<8xf32> to vector<8x1xf32>
      %37 = arith.maximumf %34, %36 : vector<8x1xf32>
      %38 = arith.subf %34, %37 : vector<8x1xf32>
      %39 = math.exp %38 : vector<8x1xf32>
      %40 = vector.broadcast %37 : vector<8x1xf32> to vector<8x8xf32>
      %41 = arith.subf %32, %40 : vector<8x8xf32>
      %42 = math.exp %41 : vector<8x8xf32>
      %c0_20 = arith.constant 0 : index
      %c0_21 = arith.constant 0 : index
      %c0_22 = arith.constant 0 : index
      %43 = vector.load %arg8[%c0_20, %c0_21, %c0_22] : memref<4x8x1xf32, #tpu.memory_space<vmem>>, vector<1x8x1xf32>
      %44 = vector.shape_cast %43 : vector<1x8x1xf32> to vector<8x1xf32>
      %45 = arith.mulf %39, %44 : vector<8x1xf32>
      %cst_23 = arith.constant dense<0.000000e+00> : vector<8xf32>
      %46 = vector.multi_reduction <add>, %42, %cst_23 [1] : vector<8x8xf32> to vector<8xf32>
      %47 = vector.shape_cast %46 : vector<8xf32> to vector<8x1xf32>
      %48 = arith.addf %45, %47 : vector<8x1xf32>
      %c0_24 = arith.constant 0 : index
      %c0_25 = arith.constant 0 : index
      %c0_26 = arith.constant 0 : index
      %49 = vector.load %arg8[%c0_24, %c0_25, %c0_26] : memref<4x8x1xf32, #tpu.memory_space<vmem>>, vector<1x8x1xf32>
      %50 = vector.shape_cast %49 : vector<1x8x1xf32> to vector<8x1xf32>
      %51 = vector.shape_cast %48 : vector<8x1xf32> to vector<1x8x1xf32>
      tpu.vector_store %arg8[%c0_24, %c0_25, %c0_26], %51 {strides = array<i32>} : memref<4x8x1xf32, #tpu.memory_space<vmem>>, vector<1x8x1xf32>,
      %c0_27 = arith.constant 0 : index
      %c0_28 = arith.constant 0 : index
      %c0_29 = arith.constant 0 : index
      %52 = vector.load %arg9[%c0_27, %c0_28, %c0_29] : memref<4x8x8xf32, #tpu.memory_space<vmem>>, vector<1x8x8xf32>
      %53 = vector.shape_cast %52 : vector<1x8x8xf32> to vector<8x8xf32>
      %54 = vector.broadcast %39 : vector<8x1xf32> to vector<8x8xf32>
      %55 = arith.mulf %54, %53 : vector<8x8xf32>
      %56 = arith.truncf %42 : vector<8x8xf32> to vector<8x8xbf16>
      %cst_30 = arith.constant dense<0.000000e+00> : vector<8x8xf32>
      %57 = tpu.matmul %56, %29, %cst_30 {dimension_numbers = #tpu.dot_dimension_numbers<[1], [0], [0], [1], [0, 0, 1, 1], [], []>} : vector<8x8xbf16>, vector<8x8xbf16>, vector<8x8xf32> -> vector<8x8xf32>
      %58 = arith.addf %55, %57 : vector<8x8xf32>
      %c0_31 = arith.constant 0 : index
      %c0_32 = arith.constant 0 : index
      %c0_33 = arith.constant 0 : index
      %59 = vector.load %arg9[%c0_31, %c0_32, %c0_33] : memref<4x8x8xf32, #tpu.memory_space<vmem>>, vector<1x8x8xf32>
      %60 = vector.shape_cast %59 : vector<1x8x8xf32> to vector<8x8xf32>
      %61 = vector.shape_cast %58 : vector<8x8xf32> to vector<1x8x8xf32>
      tpu.vector_store %arg9[%c0_31, %c0_32, %c0_33], %61 {strides = array<i32>} : memref<4x8x8xf32, #tpu.memory_space<vmem>>, vector<1x8x8xf32>,
      %c0_34 = arith.constant 0 : index
      %c0_35 = arith.constant 0 : index
      %c0_36 = arith.constant 0 : index
      %62 = vector.load %arg7[%c0_34, %c0_35, %c0_36] : memref<4x8x1xf32, #tpu.memory_space<vmem>>, vector<1x8x1xf32>
      %63 = vector.shape_cast %62 : vector<1x8x1xf32> to vector<8x1xf32>
      %64 = vector.shape_cast %37 : vector<8x1xf32> to vector<1x8x1xf32>
      tpu.vector_store %arg7[%c0_34, %c0_35, %c0_36], %64 {strides = array<i32>} : memref<4x8x1xf32, #tpu.memory_space<vmem>>, vector<1x8x1xf32>,
      %65 = vector.extract_strided_slice %13 {offsets = [0, 8], sizes = [8, 8], strides = [1, 1]} : vector<8x32xbf16> to vector<8x8xbf16>
      %66 = vector.extract_strided_slice %15 {offsets = [0, 8], sizes = [8, 8], strides = [1, 1]} : vector<8x32xbf16> to vector<8x8xbf16>
      %67 = vector.extract_strided_slice %17 {offsets = [0, 8], sizes = [8, 8], strides = [1, 1]} : vector<8x32xbf16> to vector<8x8xbf16>
      %cst_37 = arith.constant dense<0.000000e+00> : vector<8x8xf32>
      %68 = tpu.matmul %65, %66, %cst_37 {dimension_numbers = #tpu.dot_dimension_numbers<[1], [1], [0], [0], [0, 0, 1, 0], [], []>} : vector<8x8xbf16>, vector<8x8xbf16>, vector<8x8xf32> -> vector<8x8xf32>
      %cst_38 = arith.constant -1.000000e+30 : f32
      %69 = vector.broadcast %cst_38 : f32 to vector<8x8xf32>
      %70 = arith.select %26, %68, %69 : vector<8x8xi1>, vector<8x8xf32>
      %c1 = arith.constant 1 : index
      %c0_39 = arith.constant 0 : index
      %c0_40 = arith.constant 0 : index
      %71 = vector.load %arg7[%c1, %c0_39, %c0_40] : memref<4x8x1xf32, #tpu.memory_space<vmem>>, vector<1x8x1xf32>
      %72 = vector.shape_cast %71 : vector<1x8x1xf32> to vector<8x1xf32>
      %cst_41 = arith.constant dense<0xFF800000> : vector<8xf32>
      %73 = vector.multi_reduction <maximumf>, %70, %cst_41 [1] : vector<8x8xf32> to vector<8xf32>
      %74 = vector.shape_cast %73 : vector<8xf32> to vector<8x1xf32>
      %75 = arith.maximumf %72, %74 : vector<8x1xf32>
      %76 = arith.subf %72, %75 : vector<8x1xf32>
      %77 = math.exp %76 : vector<8x1xf32>
      %78 = vector.broadcast %75 : vector<8x1xf32> to vector<8x8xf32>
      %79 = arith.subf %70, %78 : vector<8x8xf32>
      %80 = math.exp %79 : vector<8x8xf32>
      %c1_42 = arith.constant 1 : index
      %c0_43 = arith.constant 0 : index
      %c0_44 = arith.constant 0 : index
      %81 = vector.load %arg8[%c1_42, %c0_43, %c0_44] : memref<4x8x1xf32, #tpu.memory_space<vmem>>, vector<1x8x1xf32>
      %82 = vector.shape_cast %81 : vector<1x8x1xf32> to vector<8x1xf32>
      %83 = arith.mulf %77, %82 : vector<8x1xf32>
      %cst_45 = arith.constant dense<0.000000e+00> : vector<8xf32>
      %84 = vector.multi_reduction <add>, %80, %cst_45 [1] : vector<8x8xf32> to vector<8xf32>
      %85 = vector.shape_cast %84 : vector<8xf32> to vector<8x1xf32>
      %86 = arith.addf %83, %85 : vector<8x1xf32>
      %c1_46 = arith.constant 1 : index
      %c0_47 = arith.constant 0 : index
      %c0_48 = arith.constant 0 : index
      %87 = vector.load %arg8[%c1_46, %c0_47, %c0_48] : memref<4x8x1xf32, #tpu.memory_space<vmem>>, vector<1x8x1xf32>
      %88 = vector.shape_cast %87 : vector<1x8x1xf32> to vector<8x1xf32>
      %89 = vector.shape_cast %86 : vector<8x1xf32> to vector<1x8x1xf32>
      tpu.vector_store %arg8[%c1_46, %c0_47, %c0_48], %89 {strides = array<i32>} : memref<4x8x1xf32, #tpu.memory_space<vmem>>, vector<1x8x1xf32>,
      %c1_49 = arith.constant 1 : index
      %c0_50 = arith.constant 0 : index
      %c0_51 = arith.constant 0 : index
      %90 = vector.load %arg9[%c1_49, %c0_50, %c0_51] : memref<4x8x8xf32, #tpu.memory_space<vmem>>, vector<1x8x8xf32>
      %91 = vector.shape_cast %90 : vector<1x8x8xf32> to vector<8x8xf32>
      %92 = vector.broadcast %77 : vector<8x1xf32> to vector<8x8xf32>
      %93 = arith.mulf %92, %91 : vector<8x8xf32>
      %94 = arith.truncf %80 : vector<8x8xf32> to vector<8x8xbf16>
      %cst_52 = arith.constant dense<0.000000e+00> : vector<8x8xf32>
      %95 = tpu.matmul %94, %67, %cst_52 {dimension_numbers = #tpu.dot_dimension_numbers<[1], [0], [0], [1], [0, 0, 1, 1], [], []>} : vector<8x8xbf16>, vector<8x8xbf16>, vector<8x8xf32> -> vector<8x8xf32>
      %96 = arith.addf %93, %95 : vector<8x8xf32>
      %c1_53 = arith.constant 1 : index
      %c0_54 = arith.constant 0 : index
      %c0_55 = arith.constant 0 : index
      %97 = vector.load %arg9[%c1_53, %c0_54, %c0_55] : memref<4x8x8xf32, #tpu.memory_space<vmem>>, vector<1x8x8xf32>
      %98 = vector.shape_cast %97 : vector<1x8x8xf32> to vector<8x8xf32>
      %99 = vector.shape_cast %96 : vector<8x8xf32> to vector<1x8x8xf32>
      tpu.vector_store %arg9[%c1_53, %c0_54, %c0_55], %99 {strides = array<i32>} : memref<4x8x8xf32, #tpu.memory_space<vmem>>, vector<1x8x8xf32>,
      %c1_56 = arith.constant 1 : index
      %c0_57 = arith.constant 0 : index
      %c0_58 = arith.constant 0 : index
      %100 = vector.load %arg7[%c1_56, %c0_57, %c0_58] : memref<4x8x1xf32, #tpu.memory_space<vmem>>, vector<1x8x1xf32>
      %101 = vector.shape_cast %100 : vector<1x8x1xf32> to vector<8x1xf32>
      %102 = vector.shape_cast %75 : vector<8x1xf32> to vector<1x8x1xf32>
      tpu.vector_store %arg7[%c1_56, %c0_57, %c0_58], %102 {strides = array<i32>} : memref<4x8x1xf32, #tpu.memory_space<vmem>>, vector<1x8x1xf32>,
      %103 = vector.extract_strided_slice %13 {offsets = [0, 16], sizes = [8, 8], strides = [1, 1]} : vector<8x32xbf16> to vector<8x8xbf16>
      %104 = vector.extract_strided_slice %15 {offsets = [0, 16], sizes = [8, 8], strides = [1, 1]} : vector<8x32xbf16> to vector<8x8xbf16>
      %105 = vector.extract_strided_slice %17 {offsets = [0, 16], sizes = [8, 8], strides = [1, 1]} : vector<8x32xbf16> to vector<8x8xbf16>
      %cst_59 = arith.constant dense<0.000000e+00> : vector<8x8xf32>
      %106 = tpu.matmul %103, %104, %cst_59 {dimension_numbers = #tpu.dot_dimension_numbers<[1], [1], [0], [0], [0, 0, 1, 0], [], []>} : vector<8x8xbf16>, vector<8x8xbf16>, vector<8x8xf32> -> vector<8x8xf32>
      %cst_60 = arith.constant -1.000000e+30 : f32
      %107 = vector.broadcast %cst_60 : f32 to vector<8x8xf32>
      %108 = arith.select %26, %106, %107 : vector<8x8xi1>, vector<8x8xf32>
      %c2 = arith.constant 2 : index
      %c0_61 = arith.constant 0 : index
      %c0_62 = arith.constant 0 : index
      %109 = vector.load %arg7[%c2, %c0_61, %c0_62] : memref<4x8x1xf32, #tpu.memory_space<vmem>>, vector<1x8x1xf32>
      %110 = vector.shape_cast %109 : vector<1x8x1xf32> to vector<8x1xf32>
      %cst_63 = arith.constant dense<0xFF800000> : vector<8xf32>
      %111 = vector.multi_reduction <maximumf>, %108, %cst_63 [1] : vector<8x8xf32> to vector<8xf32>
      %112 = vector.shape_cast %111 : vector<8xf32> to vector<8x1xf32>
      %113 = arith.maximumf %110, %112 : vector<8x1xf32>
      %114 = arith.subf %110, %113 : vector<8x1xf32>
      %115 = math.exp %114 : vector<8x1xf32>
      %116 = vector.broadcast %113 : vector<8x1xf32> to vector<8x8xf32>
      %117 = arith.subf %108, %116 : vector<8x8xf32>
      %118 = math.exp %117 : vector<8x8xf32>
      %c2_64 = arith.constant 2 : index
      %c0_65 = arith.constant 0 : index
      %c0_66 = arith.constant 0 : index
      %119 = vector.load %arg8[%c2_64, %c0_65, %c0_66] : memref<4x8x1xf32, #tpu.memory_space<vmem>>, vector<1x8x1xf32>
      %120 = vector.shape_cast %119 : vector<1x8x1xf32> to vector<8x1xf32>
      %121 = arith.mulf %115, %120 : vector<8x1xf32>
      %cst_67 = arith.constant dense<0.000000e+00> : vector<8xf32>
      %122 = vector.multi_reduction <add>, %118, %cst_67 [1] : vector<8x8xf32> to vector<8xf32>
      %123 = vector.shape_cast %122 : vector<8xf32> to vector<8x1xf32>
      %124 = arith.addf %121, %123 : vector<8x1xf32>
      %c2_68 = arith.constant 2 : index
      %c0_69 = arith.constant 0 : index
      %c0_70 = arith.constant 0 : index
      %125 = vector.load %arg8[%c2_68, %c0_69, %c0_70] : memref<4x8x1xf32, #tpu.memory_space<vmem>>, vector<1x8x1xf32>
      %126 = vector.shape_cast %125 : vector<1x8x1xf32> to vector<8x1xf32>
      %127 = vector.shape_cast %124 : vector<8x1xf32> to vector<1x8x1xf32>
      tpu.vector_store %arg8[%c2_68, %c0_69, %c0_70], %127 {strides = array<i32>} : memref<4x8x1xf32, #tpu.memory_space<vmem>>, vector<1x8x1xf32>,
      %c2_71 = arith.constant 2 : index
      %c0_72 = arith.constant 0 : index
      %c0_73 = arith.constant 0 : index
      %128 = vector.load %arg9[%c2_71, %c0_72, %c0_73] : memref<4x8x8xf32, #tpu.memory_space<vmem>>, vector<1x8x8xf32>
      %129 = vector.shape_cast %128 : vector<1x8x8xf32> to vector<8x8xf32>
      %130 = vector.broadcast %115 : vector<8x1xf32> to vector<8x8xf32>
      %131 = arith.mulf %130, %129 : vector<8x8xf32>
      %132 = arith.truncf %118 : vector<8x8xf32> to vector<8x8xbf16>
      %cst_74 = arith.constant dense<0.000000e+00> : vector<8x8xf32>
      %133 = tpu.matmul %132, %105, %cst_74 {dimension_numbers = #tpu.dot_dimension_numbers<[1], [0], [0], [1], [0, 0, 1, 1], [], []>} : vector<8x8xbf16>, vector<8x8xbf16>, vector<8x8xf32> -> vector<8x8xf32>
      %134 = arith.addf %131, %133 : vector<8x8xf32>
      %c2_75 = arith.constant 2 : index
      %c0_76 = arith.constant 0 : index
      %c0_77 = arith.constant 0 : index
      %135 = vector.load %arg9[%c2_75, %c0_76, %c0_77] : memref<4x8x8xf32, #tpu.memory_space<vmem>>, vector<1x8x8xf32>
      %136 = vector.shape_cast %135 : vector<1x8x8xf32> to vector<8x8xf32>
      %137 = vector.shape_cast %134 : vector<8x8xf32> to vector<1x8x8xf32>
      tpu.vector_store %arg9[%c2_75, %c0_76, %c0_77], %137 {strides = array<i32>} : memref<4x8x8xf32, #tpu.memory_space<vmem>>, vector<1x8x8xf32>,
      %c2_78 = arith.constant 2 : index
      %c0_79 = arith.constant 0 : index
      %c0_80 = arith.constant 0 : index
      %138 = vector.load %arg7[%c2_78, %c0_79, %c0_80] : memref<4x8x1xf32, #tpu.memory_space<vmem>>, vector<1x8x1xf32>
      %139 = vector.shape_cast %138 : vector<1x8x1xf32> to vector<8x1xf32>
      %140 = vector.shape_cast %113 : vector<8x1xf32> to vector<1x8x1xf32>
      tpu.vector_store %arg7[%c2_78, %c0_79, %c0_80], %140 {strides = array<i32>} : memref<4x8x1xf32, #tpu.memory_space<vmem>>, vector<1x8x1xf32>,
      %141 = vector.extract_strided_slice %13 {offsets = [0, 24], sizes = [8, 8], strides = [1, 1]} : vector<8x32xbf16> to vector<8x8xbf16>
      %142 = vector.extract_strided_slice %15 {offsets = [0, 24], sizes = [8, 8], strides = [1, 1]} : vector<8x32xbf16> to vector<8x8xbf16>
      %143 = vector.extract_strided_slice %17 {offsets = [0, 24], sizes = [8, 8], strides = [1, 1]} : vector<8x32xbf16> to vector<8x8xbf16>
      %cst_81 = arith.constant dense<0.000000e+00> : vector<8x8xf32>
      %144 = tpu.matmul %141, %142, %cst_81 {dimension_numbers = #tpu.dot_dimension_numbers<[1], [1], [0], [0], [0, 0, 1, 0], [], []>} : vector<8x8xbf16>, vector<8x8xbf16>, vector<8x8xf32> -> vector<8x8xf32>
      %cst_82 = arith.constant -1.000000e+30 : f32
      %145 = vector.broadcast %cst_82 : f32 to vector<8x8xf32>
      %146 = arith.select %26, %144, %145 : vector<8x8xi1>, vector<8x8xf32>
      %c3 = arith.constant 3 : index
      %c0_83 = arith.constant 0 : index
      %c0_84 = arith.constant 0 : index
      %147 = vector.load %arg7[%c3, %c0_83, %c0_84] : memref<4x8x1xf32, #tpu.memory_space<vmem>>, vector<1x8x1xf32>
      %148 = vector.shape_cast %147 : vector<1x8x1xf32> to vector<8x1xf32>
      %cst_85 = arith.constant dense<0xFF800000> : vector<8xf32>
      %149 = vector.multi_reduction <maximumf>, %146, %cst_85 [1] : vector<8x8xf32> to vector<8xf32>
      %150 = vector.shape_cast %149 : vector<8xf32> to vector<8x1xf32>
      %151 = arith.maximumf %148, %150 : vector<8x1xf32>
      %152 = arith.subf %148, %151 : vector<8x1xf32>
      %153 = math.exp %152 : vector<8x1xf32>
      %154 = vector.broadcast %151 : vector<8x1xf32> to vector<8x8xf32>
      %155 = arith.subf %146, %154 : vector<8x8xf32>
      %156 = math.exp %155 : vector<8x8xf32>
      %c3_86 = arith.constant 3 : index
      %c0_87 = arith.constant 0 : index
      %c0_88 = arith.constant 0 : index
      %157 = vector.load %arg8[%c3_86, %c0_87, %c0_88] : memref<4x8x1xf32, #tpu.memory_space<vmem>>, vector<1x8x1xf32>
      %158 = vector.shape_cast %157 : vector<1x8x1xf32> to vector<8x1xf32>
      %159 = arith.mulf %153, %158 : vector<8x1xf32>
      %cst_89 = arith.constant dense<0.000000e+00> : vector<8xf32>
      %160 = vector.multi_reduction <add>, %156, %cst_89 [1] : vector<8x8xf32> to vector<8xf32>
      %161 = vector.shape_cast %160 : vector<8xf32> to vector<8x1xf32>
      %162 = arith.addf %159, %161 : vector<8x1xf32>
      %c3_90 = arith.constant 3 : index
      %c0_91 = arith.constant 0 : index
      %c0_92 = arith.constant 0 : index
      %163 = vector.load %arg8[%c3_90, %c0_91, %c0_92] : memref<4x8x1xf32, #tpu.memory_space<vmem>>, vector<1x8x1xf32>
      %164 = vector.shape_cast %163 : vector<1x8x1xf32> to vector<8x1xf32>
      %165 = vector.shape_cast %162 : vector<8x1xf32> to vector<1x8x1xf32>
      tpu.vector_store %arg8[%c3_90, %c0_91, %c0_92], %165 {strides = array<i32>} : memref<4x8x1xf32, #tpu.memory_space<vmem>>, vector<1x8x1xf32>,
      %c3_93 = arith.constant 3 : index
      %c0_94 = arith.constant 0 : index
      %c0_95 = arith.constant 0 : index
      %166 = vector.load %arg9[%c3_93, %c0_94, %c0_95] : memref<4x8x8xf32, #tpu.memory_space<vmem>>, vector<1x8x8xf32>
      %167 = vector.shape_cast %166 : vector<1x8x8xf32> to vector<8x8xf32>
      %168 = vector.broadcast %153 : vector<8x1xf32> to vector<8x8xf32>
      %169 = arith.mulf %168, %167 : vector<8x8xf32>
      %170 = arith.truncf %156 : vector<8x8xf32> to vector<8x8xbf16>
      %cst_96 = arith.constant dense<0.000000e+00> : vector<8x8xf32>
      %171 = tpu.matmul %170, %143, %cst_96 {dimension_numbers = #tpu.dot_dimension_numbers<[1], [0], [0], [1], [0, 0, 1, 1], [], []>} : vector<8x8xbf16>, vector<8x8xbf16>, vector<8x8xf32> -> vector<8x8xf32>
      %172 = arith.addf %169, %171 : vector<8x8xf32>
      %c3_97 = arith.constant 3 : index
      %c0_98 = arith.constant 0 : index
      %c0_99 = arith.constant 0 : index
      %173 = vector.load %arg9[%c3_97, %c0_98, %c0_99] : memref<4x8x8xf32, #tpu.memory_space<vmem>>, vector<1x8x8xf32>
      %174 = vector.shape_cast %173 : vector<1x8x8xf32> to vector<8x8xf32>
      %175 = vector.shape_cast %172 : vector<8x8xf32> to vector<1x8x8xf32>
      tpu.vector_store %arg9[%c3_97, %c0_98, %c0_99], %175 {strides = array<i32>} : memref<4x8x8xf32, #tpu.memory_space<vmem>>, vector<1x8x8xf32>,
      %c3_100 = arith.constant 3 : index
      %c0_101 = arith.constant 0 : index
      %c0_102 = arith.constant 0 : index
      %176 = vector.load %arg7[%c3_100, %c0_101, %c0_102] : memref<4x8x1xf32, #tpu.memory_space<vmem>>, vector<1x8x1xf32>
      %177 = vector.shape_cast %176 : vector<1x8x1xf32> to vector<8x1xf32>
      %178 = vector.shape_cast %151 : vector<8x1xf32> to vector<1x8x1xf32>
      tpu.vector_store %arg7[%c3_100, %c0_101, %c0_102], %178 {strides = array<i32>} : memref<4x8x1xf32, #tpu.memory_space<vmem>>, vector<1x8x1xf32>,
    } else {
    }
    %c0_i32_3 = arith.constant 0 : i32
    %9 = arith.cmpi eq, %arg2, %c0_i32_3 : i32
    %10 = arith.extui %9 : i1 to i32
    %c0_i32_4 = arith.constant 0 : i32
    %11 = arith.cmpi ne, %10, %c0_i32_4 : i32
    scf.if %11 {
      %c0 = arith.constant 0 : index
      %c0_5 = arith.constant 0 : index
      %c0_6 = arith.constant 0 : index
      %12 = vector.load %arg8[%c0, %c0_5, %c0_6] : memref<4x8x1xf32, #tpu.memory_space<vmem>>, vector<1x8x1xf32>
      %13 = vector.shape_cast %12 : vector<1x8x1xf32> to vector<8x1xf32>
      %14 = tpu.reciprocal %13 {approx = true} : vector<8x1xf32> -> vector<8x1xf32>
      %c0_7 = arith.constant 0 : index
      %c0_8 = arith.constant 0 : index
      %c0_9 = arith.constant 0 : index
      %15 = vector.load %arg9[%c0_7, %c0_8, %c0_9] : memref<4x8x8xf32, #tpu.memory_space<vmem>>, vector<1x8x8xf32>
      %16 = vector.shape_cast %15 : vector<1x8x8xf32> to vector<8x8xf32>
      %17 = vector.broadcast %14 : vector<8x1xf32> to vector<8x8xf32>
      %18 = arith.mulf %16, %17 : vector<8x8xf32>
      %c1 = arith.constant 1 : index
      %c0_10 = arith.constant 0 : index
      %c0_11 = arith.constant 0 : index
      %19 = vector.load %arg8[%c1, %c0_10, %c0_11] : memref<4x8x1xf32, #tpu.memory_space<vmem>>, vector<1x8x1xf32>
      %20 = vector.shape_cast %19 : vector<1x8x1xf32> to vector<8x1xf32>
      %21 = tpu.reciprocal %20 {approx = true} : vector<8x1xf32> -> vector<8x1xf32>
      %c1_12 = arith.constant 1 : index
      %c0_13 = arith.constant 0 : index
      %c0_14 = arith.constant 0 : index
      %22 = vector.load %arg9[%c1_12, %c0_13, %c0_14] : memref<4x8x8xf32, #tpu.memory_space<vmem>>, vector<1x8x8xf32>
      %23 = vector.shape_cast %22 : vector<1x8x8xf32> to vector<8x8xf32>
      %24 = vector.broadcast %21 : vector<8x1xf32> to vector<8x8xf32>
      %25 = arith.mulf %23, %24 : vector<8x8xf32>
      %c2 = arith.constant 2 : index
      %c0_15 = arith.constant 0 : index
      %c0_16 = arith.constant 0 : index
      %26 = vector.load %arg8[%c2, %c0_15, %c0_16] : memref<4x8x1xf32, #tpu.memory_space<vmem>>, vector<1x8x1xf32>
      %27 = vector.shape_cast %26 : vector<1x8x1xf32> to vector<8x1xf32>
      %28 = tpu.reciprocal %27 {approx = true} : vector<8x1xf32> -> vector<8x1xf32>
      %c2_17 = arith.constant 2 : index
      %c0_18 = arith.constant 0 : index
      %c0_19 = arith.constant 0 : index
      %29 = vector.load %arg9[%c2_17, %c0_18, %c0_19] : memref<4x8x8xf32, #tpu.memory_space<vmem>>, vector<1x8x8xf32>
      %30 = vector.shape_cast %29 : vector<1x8x8xf32> to vector<8x8xf32>
      %31 = vector.broadcast %28 : vector<8x1xf32> to vector<8x8xf32>
      %32 = arith.mulf %30, %31 : vector<8x8xf32>
      %c3 = arith.constant 3 : index
      %c0_20 = arith.constant 0 : index
      %c0_21 = arith.constant 0 : index
      %33 = vector.load %arg8[%c3, %c0_20, %c0_21] : memref<4x8x1xf32, #tpu.memory_space<vmem>>, vector<1x8x1xf32>
      %34 = vector.shape_cast %33 : vector<1x8x1xf32> to vector<8x1xf32>
      %35 = tpu.reciprocal %34 {approx = true} : vector<8x1xf32> -> vector<8x1xf32>
      %c3_22 = arith.constant 3 : index
      %c0_23 = arith.constant 0 : index
      %c0_24 = arith.constant 0 : index
      %36 = vector.load %arg9[%c3_22, %c0_23, %c0_24] : memref<4x8x8xf32, #tpu.memory_space<vmem>>, vector<1x8x8xf32>
      %37 = vector.shape_cast %36 : vector<1x8x8xf32> to vector<8x8xf32>
      %38 = vector.broadcast %35 : vector<8x1xf32> to vector<8x8xf32>
      %39 = arith.mulf %37, %38 : vector<8x8xf32>
      %40 = tpu.concatenate %18, %25, %32, %39 in 1 : vector<8x8xf32>, vector<8x8xf32>, vector<8x8xf32>, vector<8x8xf32> -> vector<8x32xf32>
      %41 = arith.truncf %40 : vector<8x32xf32> to vector<8x32xbf16>
      %c0_25 = arith.constant 0 : index
      %c0_26 = arith.constant 0 : index
      %c0_27 = arith.constant 0 : index
      %42 = vector.load %arg6[%c0_25, %c0_26, %c0_27] : memref<1x8x32xbf16, #tpu.memory_space<vmem>>, vector<1x8x32xbf16>
      %43 = vector.shape_cast %42 : vector<1x8x32xbf16> to vector<8x32xbf16>
      %44 = vector.shape_cast %41 : vector<8x32xbf16> to vector<1x8x32xbf16>
      tpu.vector_store %arg6[%c0_25, %c0_26, %c0_27], %44 {strides = array<i32>} : memref<1x8x32xbf16, #tpu.memory_space<vmem>>, vector<1x8x32xbf16>,
    } else {
    }
    return
  }
  func.func @transform_0(%arg0: i32, %arg1: i32, %arg2: i32) -> (i32, i32, i32) {
    %c0_i32 = arith.constant 0 : i32
    %c0_i32_0 = arith.constant 0 : i32
    return %arg0, %arg1, %c0_i32 : i32, i32, i32
  }
  func.func @transform_1(%arg0: i32, %arg1: i32, %arg2: i32) -> (i32, i32, i32) {
    %c0_i32 = arith.constant 0 : i32
    %c0_i32_0 = arith.constant 0 : i32
    return %arg0, %arg2, %c0_i32 : i32, i32, i32
  }
  func.func @transform_2(%arg0: i32, %arg1: i32, %arg2: i32) -> (i32, i32, i32) {
    %c0_i32 = arith.constant 0 : i32
    %c0_i32_0 = arith.constant 0 : i32
    return %arg0, %arg2, %c0_i32 : i32, i32, i32
  }
  func.func @transform_3(%arg0: i32, %arg1: i32, %arg2: i32) -> (i32, i32, i32) {
    %c0_i32 = arith.constant 0 : i32
    %c0_i32_0 = arith.constant 0 : i32
    return %arg0, %arg1, %c0_i32 : i32, i32, i32
  }
}

module attributes {stable_mosaic.version = 11 : i64} {
  func.func @_matmul_kernel(%arg0: i32, %arg1: i32, %arg2: i32, %arg3: memref<16x32xbf16, #tpu.memory_space<vmem>>, %arg4: memref<32x96xbf16, #tpu.memory_space<vmem>>, %arg5: memref<1x96xbf16, #tpu.memory_space<vmem>>, %arg6: memref<16x96xbf16, #tpu.memory_space<vmem>>, %arg7: memref<16x96xf32, #tpu.memory_space<vmem>>) attributes {dimension_semantics = [#tpu.dimension_semantics<parallel>, #tpu.dimension_semantics<parallel>, #tpu.dimension_semantics<arbitrary>], iteration_bounds = array<i64: 1, 1, 1>, scalar_prefetch = 0 : i64, scratch_operands = 1 : i64, tpu.core_type = #tpu.core_type<tc>, window_params = [{transform_indices = @transform_0, window_bounds = array<i64: 16, 32>}, {transform_indices = @transform_1, window_bounds = array<i64: 32, 96>}, {transform_indices = @transform_2, window_bounds = array<i64: 1, 96>}, {transform_indices = @transform_3, window_bounds = array<i64: 16, 96>}]} {
    %c0_i32 = arith.constant 0 : i32
    %0 = arith.cmpi eq, %arg2, %c0_i32 : i32
    %1 = arith.extui %0 : i1 to i32
    %c0_i32_0 = arith.constant 0 : i32
    %2 = arith.cmpi ne, %1, %c0_i32_0 : i32
    scf.if %2 {
      %cst_10 = arith.constant 0.000000e+00 : f32
      %12 = vector.broadcast %cst_10 : f32 to vector<16x96xf32>
      %c0_11 = arith.constant 0 : index
      %c0_12 = arith.constant 0 : index
      %13 = vector.load %arg7[%c0_11, %c0_12] : memref<16x96xf32, #tpu.memory_space<vmem>>, vector<16x96xf32>
      tpu.vector_store %arg7[%c0_11, %c0_12], %12 {strides = array<i32>} : memref<16x96xf32, #tpu.memory_space<vmem>>, vector<16x96xf32>,
    } else {
    }
    %c0 = arith.constant 0 : index
    %c0_1 = arith.constant 0 : index
    %3 = vector.load %arg7[%c0, %c0_1] : memref<16x96xf32, #tpu.memory_space<vmem>>, vector<16x96xf32>
    %c0_2 = arith.constant 0 : index
    %c0_3 = arith.constant 0 : index
    %4 = vector.load %arg3[%c0_2, %c0_3] : memref<16x32xbf16, #tpu.memory_space<vmem>>, vector<16x32xbf16>
    %c0_4 = arith.constant 0 : index
    %c0_5 = arith.constant 0 : index
    %5 = vector.load %arg4[%c0_4, %c0_5] : memref<32x96xbf16, #tpu.memory_space<vmem>>, vector<32x96xbf16>
    %cst = arith.constant dense<0.000000e+00> : vector<16x96xf32>
    %6 = tpu.matmul %4, %5, %cst {dimension_numbers = #tpu.dot_dimension_numbers<[1], [0], [0], [1], [0, 0, 1, 1], [], []>} : vector<16x32xbf16>, vector<32x96xbf16>, vector<16x96xf32> -> vector<16x96xf32>
    %7 = arith.addf %3, %6 : vector<16x96xf32>
    %c0_6 = arith.constant 0 : index
    %c0_7 = arith.constant 0 : index
    %8 = vector.load %arg7[%c0_6, %c0_7] : memref<16x96xf32, #tpu.memory_space<vmem>>, vector<16x96xf32>
    tpu.vector_store %arg7[%c0_6, %c0_7], %7 {strides = array<i32>} : memref<16x96xf32, #tpu.memory_space<vmem>>, vector<16x96xf32>,
    %c0_i32_8 = arith.constant 0 : i32
    %9 = arith.cmpi eq, %arg2, %c0_i32_8 : i32
    %10 = arith.extui %9 : i1 to i32
    %c0_i32_9 = arith.constant 0 : i32
    %11 = arith.cmpi ne, %10, %c0_i32_9 : i32
    scf.if %11 {
      %c0_10 = arith.constant 0 : index
      %c0_11 = arith.constant 0 : index
      %12 = vector.load %arg7[%c0_10, %c0_11] : memref<16x96xf32, #tpu.memory_space<vmem>>, vector<16x96xf32>
      %c0_12 = arith.constant 0 : index
      %c0_13 = arith.constant 0 : index
      %13 = vector.load %arg5[%c0_12, %c0_13] : memref<1x96xbf16, #tpu.memory_space<vmem>>, vector<1x96xbf16>
      %14 = arith.extf %13 : vector<1x96xbf16> to vector<1x96xf32>
      %15 = vector.broadcast %14 : vector<1x96xf32> to vector<16x96xf32>
      %16 = arith.addf %12, %15 : vector<16x96xf32>
      %17 = arith.truncf %16 : vector<16x96xf32> to vector<16x96xbf16>
      %c0_14 = arith.constant 0 : index
      %c0_15 = arith.constant 0 : index
      %18 = vector.load %arg6[%c0_14, %c0_15] : memref<16x96xbf16, #tpu.memory_space<vmem>>, vector<16x96xbf16>
      tpu.vector_store %arg6[%c0_14, %c0_15], %17 {strides = array<i32>} : memref<16x96xbf16, #tpu.memory_space<vmem>>, vector<16x96xbf16>,
    } else {
    }
    return
  }
  func.func @transform_0(%arg0: i32, %arg1: i32, %arg2: i32) -> (i32, i32) {
    %c0_i32 = arith.constant 0 : i32
    return %arg0, %arg2 : i32, i32
  }
  func.func @transform_1(%arg0: i32, %arg1: i32, %arg2: i32) -> (i32, i32) {
    %c0_i32 = arith.constant 0 : i32
    return %arg2, %arg1 : i32, i32
  }
  func.func @transform_2(%arg0: i32, %arg1: i32, %arg2: i32) -> (i32, i32) {
    %c0_i32 = arith.constant 0 : i32
    %c0_i32_0 = arith.constant 0 : i32
    return %c0_i32, %arg1 : i32, i32
  }
  func.func @transform_3(%arg0: i32, %arg1: i32, %arg2: i32) -> (i32, i32) {
    %c0_i32 = arith.constant 0 : i32
    return %arg0, %arg1 : i32, i32
  }
}

module attributes {stable_mosaic.version = 11 : i64} {
  func.func @_add_ln_kernel(%arg0: i32, %arg1: memref<16x32xbf16, #tpu.memory_space<vmem>>, %arg2: memref<16x32xbf16, #tpu.memory_space<vmem>>, %arg3: memref<1x32xf32, #tpu.memory_space<vmem>>, %arg4: memref<1x32xf32, #tpu.memory_space<vmem>>, %arg5: memref<16x32xbf16, #tpu.memory_space<vmem>>) attributes {dimension_semantics = [#tpu.dimension_semantics<parallel>], iteration_bounds = array<i64: 1>, scalar_prefetch = 0 : i64, scratch_operands = 0 : i64, tpu.core_type = #tpu.core_type<tc>, window_params = [{transform_indices = @transform_0, window_bounds = array<i64: 16, 32>}, {transform_indices = @transform_1, window_bounds = array<i64: 16, 32>}, {pipeline_mode = #tpu.pipeline_mode<synchronous>, transform_indices = @transform_2, window_bounds = array<i64: 1, 32>}, {pipeline_mode = #tpu.pipeline_mode<synchronous>, transform_indices = @transform_3, window_bounds = array<i64: 1, 32>}, {transform_indices = @transform_4, window_bounds = array<i64: 16, 32>}]} {
    %c0 = arith.constant 0 : index
    %c0_0 = arith.constant 0 : index
    %0 = vector.load %arg1[%c0, %c0_0] : memref<16x32xbf16, #tpu.memory_space<vmem>>, vector<16x32xbf16>
    %1 = arith.extf %0 : vector<16x32xbf16> to vector<16x32xf32>
    %c0_1 = arith.constant 0 : index
    %c0_2 = arith.constant 0 : index
    %2 = vector.load %arg2[%c0_1, %c0_2] : memref<16x32xbf16, #tpu.memory_space<vmem>>, vector<16x32xbf16>
    %3 = arith.extf %2 : vector<16x32xbf16> to vector<16x32xf32>
    %4 = arith.addf %1, %3 : vector<16x32xf32>
    %cst = arith.constant dense<0.000000e+00> : vector<16xf32>
    %5 = vector.multi_reduction <add>, %4, %cst [1] : vector<16x32xf32> to vector<16xf32>
    %6 = vector.shape_cast %5 : vector<16xf32> to vector<16x1xf32>
    %cst_3 = arith.constant 3.200000e+01 : f32
    %7 = vector.broadcast %cst_3 : f32 to vector<16x1xf32>
    %8 = arith.divf %6, %7 : vector<16x1xf32>
    %9 = vector.broadcast %8 : vector<16x1xf32> to vector<16x32xf32>
    %10 = arith.subf %4, %9 : vector<16x32xf32>
    %11 = arith.mulf %10, %10 : vector<16x32xf32>
    %cst_4 = arith.constant dense<0.000000e+00> : vector<16xf32>
    %12 = vector.multi_reduction <add>, %11, %cst_4 [1] : vector<16x32xf32> to vector<16xf32>
    %13 = vector.shape_cast %12 : vector<16xf32> to vector<16x1xf32>
    %cst_5 = arith.constant 3.200000e+01 : f32
    %14 = vector.broadcast %cst_5 : f32 to vector<16x1xf32>
    %15 = arith.divf %13, %14 : vector<16x1xf32>
    %cst_6 = arith.constant 9.99999974E-6 : f32
    %16 = vector.broadcast %cst_6 : f32 to vector<16x1xf32>
    %17 = arith.addf %15, %16 : vector<16x1xf32>
    %18 = math.rsqrt %17 : vector<16x1xf32>
    %19 = vector.broadcast %18 : vector<16x1xf32> to vector<16x32xf32>
    %20 = arith.mulf %10, %19 : vector<16x32xf32>
    %c0_7 = arith.constant 0 : index
    %c0_8 = arith.constant 0 : index
    %21 = vector.load %arg3[%c0_7, %c0_8] : memref<1x32xf32, #tpu.memory_space<vmem>>, vector<1x32xf32>
    %22 = vector.broadcast %21 : vector<1x32xf32> to vector<16x32xf32>
    %23 = arith.mulf %20, %22 : vector<16x32xf32>
    %c0_9 = arith.constant 0 : index
    %c0_10 = arith.constant 0 : index
    %24 = vector.load %arg4[%c0_9, %c0_10] : memref<1x32xf32, #tpu.memory_space<vmem>>, vector<1x32xf32>
    %25 = vector.broadcast %24 : vector<1x32xf32> to vector<16x32xf32>
    %26 = arith.addf %23, %25 : vector<16x32xf32>
    %27 = arith.truncf %26 : vector<16x32xf32> to vector<16x32xbf16>
    %c0_11 = arith.constant 0 : index
    %c0_12 = arith.constant 0 : index
    %28 = vector.load %arg5[%c0_11, %c0_12] : memref<16x32xbf16, #tpu.memory_space<vmem>>, vector<16x32xbf16>
    tpu.vector_store %arg5[%c0_11, %c0_12], %27 {strides = array<i32>} : memref<16x32xbf16, #tpu.memory_space<vmem>>, vector<16x32xbf16>,
    return
  }
  func.func @transform_0(%arg0: i32) -> (i32, i32) {
    %c0_i32 = arith.constant 0 : i32
    %c0_i32_0 = arith.constant 0 : i32
    return %arg0, %c0_i32 : i32, i32
  }
  func.func @transform_1(%arg0: i32) -> (i32, i32) {
    %c0_i32 = arith.constant 0 : i32
    %c0_i32_0 = arith.constant 0 : i32
    return %arg0, %c0_i32 : i32, i32
  }
  func.func @transform_2(%arg0: i32) -> (i32, i32) {
    %c0_i32 = arith.constant 0 : i32
    %c0_i32_0 = arith.constant 0 : i32
    %c0_i32_1 = arith.constant 0 : i32
    return %c0_i32, %c0_i32_0 : i32, i32
  }
  func.func @transform_3(%arg0: i32) -> (i32, i32) {
    %c0_i32 = arith.constant 0 : i32
    %c0_i32_0 = arith.constant 0 : i32
    %c0_i32_1 = arith.constant 0 : i32
    return %c0_i32, %c0_i32_0 : i32, i32
  }
  func.func @transform_4(%arg0: i32) -> (i32, i32) {
    %c0_i32 = arith.constant 0 : i32
    %c0_i32_0 = arith.constant 0 : i32
    return %arg0, %c0_i32 : i32, i32
  }
}

module attributes {stable_mosaic.version = 11 : i64} {
  func.func @_matmul_kernel(%arg0: i32, %arg1: i32, %arg2: i32, %arg3: memref<16x32xbf16, #tpu.memory_space<vmem>>, %arg4: memref<32x32xbf16, #tpu.memory_space<vmem>>, %arg5: memref<1x32xbf16, #tpu.memory_space<vmem>>, %arg6: memref<16x32xbf16, #tpu.memory_space<vmem>>, %arg7: memref<16x32xf32, #tpu.memory_space<vmem>>) attributes {dimension_semantics = [#tpu.dimension_semantics<parallel>, #tpu.dimension_semantics<parallel>, #tpu.dimension_semantics<arbitrary>], iteration_bounds = array<i64: 1, 1, 1>, scalar_prefetch = 0 : i64, scratch_operands = 1 : i64, tpu.core_type = #tpu.core_type<tc>, window_params = [{transform_indices = @transform_0, window_bounds = array<i64: 16, 32>}, {transform_indices = @transform_1, window_bounds = array<i64: 32, 32>}, {transform_indices = @transform_2, window_bounds = array<i64: 1, 32>}, {transform_indices = @transform_3, window_bounds = array<i64: 16, 32>}]} {
    %c0_i32 = arith.constant 0 : i32
    %0 = arith.cmpi eq, %arg2, %c0_i32 : i32
    %1 = arith.extui %0 : i1 to i32
    %c0_i32_0 = arith.constant 0 : i32
    %2 = arith.cmpi ne, %1, %c0_i32_0 : i32
    scf.if %2 {
      %cst_10 = arith.constant 0.000000e+00 : f32
      %12 = vector.broadcast %cst_10 : f32 to vector<16x32xf32>
      %c0_11 = arith.constant 0 : index
      %c0_12 = arith.constant 0 : index
      %13 = vector.load %arg7[%c0_11, %c0_12] : memref<16x32xf32, #tpu.memory_space<vmem>>, vector<16x32xf32>
      tpu.vector_store %arg7[%c0_11, %c0_12], %12 {strides = array<i32>} : memref<16x32xf32, #tpu.memory_space<vmem>>, vector<16x32xf32>,
    } else {
    }
    %c0 = arith.constant 0 : index
    %c0_1 = arith.constant 0 : index
    %3 = vector.load %arg7[%c0, %c0_1] : memref<16x32xf32, #tpu.memory_space<vmem>>, vector<16x32xf32>
    %c0_2 = arith.constant 0 : index
    %c0_3 = arith.constant 0 : index
    %4 = vector.load %arg3[%c0_2, %c0_3] : memref<16x32xbf16, #tpu.memory_space<vmem>>, vector<16x32xbf16>
    %c0_4 = arith.constant 0 : index
    %c0_5 = arith.constant 0 : index
    %5 = vector.load %arg4[%c0_4, %c0_5] : memref<32x32xbf16, #tpu.memory_space<vmem>>, vector<32x32xbf16>
    %cst = arith.constant dense<0.000000e+00> : vector<16x32xf32>
    %6 = tpu.matmul %4, %5, %cst {dimension_numbers = #tpu.dot_dimension_numbers<[1], [0], [0], [1], [0, 0, 1, 1], [], []>} : vector<16x32xbf16>, vector<32x32xbf16>, vector<16x32xf32> -> vector<16x32xf32>
    %7 = arith.addf %3, %6 : vector<16x32xf32>
    %c0_6 = arith.constant 0 : index
    %c0_7 = arith.constant 0 : index
    %8 = vector.load %arg7[%c0_6, %c0_7] : memref<16x32xf32, #tpu.memory_space<vmem>>, vector<16x32xf32>
    tpu.vector_store %arg7[%c0_6, %c0_7], %7 {strides = array<i32>} : memref<16x32xf32, #tpu.memory_space<vmem>>, vector<16x32xf32>,
    %c0_i32_8 = arith.constant 0 : i32
    %9 = arith.cmpi eq, %arg2, %c0_i32_8 : i32
    %10 = arith.extui %9 : i1 to i32
    %c0_i32_9 = arith.constant 0 : i32
    %11 = arith.cmpi ne, %10, %c0_i32_9 : i32
    scf.if %11 {
      %c0_10 = arith.constant 0 : index
      %c0_11 = arith.constant 0 : index
      %12 = vector.load %arg7[%c0_10, %c0_11] : memref<16x32xf32, #tpu.memory_space<vmem>>, vector<16x32xf32>
      %c0_12 = arith.constant 0 : index
      %c0_13 = arith.constant 0 : index
      %13 = vector.load %arg5[%c0_12, %c0_13] : memref<1x32xbf16, #tpu.memory_space<vmem>>, vector<1x32xbf16>
      %14 = arith.extf %13 : vector<1x32xbf16> to vector<1x32xf32>
      %15 = vector.broadcast %14 : vector<1x32xf32> to vector<16x32xf32>
      %16 = arith.addf %12, %15 : vector<16x32xf32>
      %17 = arith.truncf %16 : vector<16x32xf32> to vector<16x32xbf16>
      %c0_14 = arith.constant 0 : index
      %c0_15 = arith.constant 0 : index
      %18 = vector.load %arg6[%c0_14, %c0_15] : memref<16x32xbf16, #tpu.memory_space<vmem>>, vector<16x32xbf16>
      tpu.vector_store %arg6[%c0_14, %c0_15], %17 {strides = array<i32>} : memref<16x32xbf16, #tpu.memory_space<vmem>>, vector<16x32xbf16>,
    } else {
    }
    return
  }
  func.func @transform_0(%arg0: i32, %arg1: i32, %arg2: i32) -> (i32, i32) {
    %c0_i32 = arith.constant 0 : i32
    return %arg0, %arg2 : i32, i32
  }
  func.func @transform_1(%arg0: i32, %arg1: i32, %arg2: i32) -> (i32, i32) {
    %c0_i32 = arith.constant 0 : i32
    return %arg2, %arg1 : i32, i32
  }
  func.func @transform_2(%arg0: i32, %arg1: i32, %arg2: i32) -> (i32, i32) {
    %c0_i32 = arith.constant 0 : i32
    %c0_i32_0 = arith.constant 0 : i32
    return %c0_i32, %arg1 : i32, i32
  }
  func.func @transform_3(%arg0: i32, %arg1: i32, %arg2: i32) -> (i32, i32) {
    %c0_i32 = arith.constant 0 : i32
    return %arg0, %arg1 : i32, i32
  }
}

module attributes {stable_mosaic.version = 11 : i64} {
  func.func @_ffn_kernel(%arg0: i32, %arg1: memref<16x32xbf16, #tpu.memory_space<vmem>>, %arg2: memref<32x64xbf16, #tpu.memory_space<vmem>>, %arg3: memref<1x64xbf16, #tpu.memory_space<vmem>>, %arg4: memref<64x32xbf16, #tpu.memory_space<vmem>>, %arg5: memref<1x32xbf16, #tpu.memory_space<vmem>>, %arg6: memref<16x32xbf16, #tpu.memory_space<vmem>>) attributes {dimension_semantics = [#tpu.dimension_semantics<parallel>], iteration_bounds = array<i64: 1>, scalar_prefetch = 0 : i64, scratch_operands = 0 : i64, tpu.core_type = #tpu.core_type<tc>, window_params = [{transform_indices = @transform_0, window_bounds = array<i64: 16, 32>}, {pipeline_mode = #tpu.pipeline_mode<synchronous>, transform_indices = @transform_1, window_bounds = array<i64: 32, 64>}, {pipeline_mode = #tpu.pipeline_mode<synchronous>, transform_indices = @transform_2, window_bounds = array<i64: 1, 64>}, {pipeline_mode = #tpu.pipeline_mode<synchronous>, transform_indices = @transform_3, window_bounds = array<i64: 64, 32>}, {pipeline_mode = #tpu.pipeline_mode<synchronous>, transform_indices = @transform_4, window_bounds = array<i64: 1, 32>}, {transform_indices = @transform_5, window_bounds = array<i64: 16, 32>}]} {
    %c0 = arith.constant 0 : index
    %c0_0 = arith.constant 0 : index
    %0 = vector.load %arg1[%c0, %c0_0] : memref<16x32xbf16, #tpu.memory_space<vmem>>, vector<16x32xbf16>
    %c0_1 = arith.constant 0 : index
    %c0_2 = arith.constant 0 : index
    %1 = vector.load %arg2[%c0_1, %c0_2] : memref<32x64xbf16, #tpu.memory_space<vmem>>, vector<32x64xbf16>
    %cst = arith.constant dense<0.000000e+00> : vector<16x64xf32>
    %2 = tpu.matmul %0, %1, %cst {dimension_numbers = #tpu.dot_dimension_numbers<[1], [0], [0], [1], [0, 0, 1, 1], [], []>} : vector<16x32xbf16>, vector<32x64xbf16>, vector<16x64xf32> -> vector<16x64xf32>
    %c0_3 = arith.constant 0 : index
    %c0_4 = arith.constant 0 : index
    %3 = vector.load %arg3[%c0_3, %c0_4] : memref<1x64xbf16, #tpu.memory_space<vmem>>, vector<1x64xbf16>
    %4 = arith.extf %3 : vector<1x64xbf16> to vector<1x64xf32>
    %5 = vector.broadcast %4 : vector<1x64xf32> to vector<16x64xf32>
    %6 = arith.addf %2, %5 : vector<16x64xf32>
    %cst_5 = arith.constant 0.000000e+00 : f32
    %7 = vector.broadcast %cst_5 : f32 to vector<16x64xf32>
    %8 = arith.maximumf %6, %7 : vector<16x64xf32>
    %9 = arith.truncf %8 : vector<16x64xf32> to vector<16x64xbf16>
    %c0_6 = arith.constant 0 : index
    %c0_7 = arith.constant 0 : index
    %10 = vector.load %arg4[%c0_6, %c0_7] : memref<64x32xbf16, #tpu.memory_space<vmem>>, vector<64x32xbf16>
    %cst_8 = arith.constant dense<0.000000e+00> : vector<16x32xf32>
    %11 = tpu.matmul %9, %10, %cst_8 {dimension_numbers = #tpu.dot_dimension_numbers<[1], [0], [0], [1], [0, 0, 1, 1], [], []>} : vector<16x64xbf16>, vector<64x32xbf16>, vector<16x32xf32> -> vector<16x32xf32>
    %c0_9 = arith.constant 0 : index
    %c0_10 = arith.constant 0 : index
    %12 = vector.load %arg5[%c0_9, %c0_10] : memref<1x32xbf16, #tpu.memory_space<vmem>>, vector<1x32xbf16>
    %13 = arith.extf %12 : vector<1x32xbf16> to vector<1x32xf32>
    %14 = vector.broadcast %13 : vector<1x32xf32> to vector<16x32xf32>
    %15 = arith.addf %11, %14 : vector<16x32xf32>
    %16 = arith.truncf %15 : vector<16x32xf32> to vector<16x32xbf16>
    %c0_11 = arith.constant 0 : index
    %c0_12 = arith.constant 0 : index
    %17 = vector.load %arg6[%c0_11, %c0_12] : memref<16x32xbf16, #tpu.memory_space<vmem>>, vector<16x32xbf16>
    tpu.vector_store %arg6[%c0_11, %c0_12], %16 {strides = array<i32>} : memref<16x32xbf16, #tpu.memory_space<vmem>>, vector<16x32xbf16>,
    return
  }
  func.func @transform_0(%arg0: i32) -> (i32, i32) {
    %c0_i32 = arith.constant 0 : i32
    %c0_i32_0 = arith.constant 0 : i32
    return %arg0, %c0_i32 : i32, i32
  }
  func.func @transform_1(%arg0: i32) -> (i32, i32) {
    %c0_i32 = arith.constant 0 : i32
    %c0_i32_0 = arith.constant 0 : i32
    %c0_i32_1 = arith.constant 0 : i32
    return %c0_i32, %c0_i32_0 : i32, i32
  }
  func.func @transform_2(%arg0: i32) -> (i32, i32) {
    %c0_i32 = arith.constant 0 : i32
    %c0_i32_0 = arith.constant 0 : i32
    %c0_i32_1 = arith.constant 0 : i32
    return %c0_i32, %c0_i32_0 : i32, i32
  }
  func.func @transform_3(%arg0: i32) -> (i32, i32) {
    %c0_i32 = arith.constant 0 : i32
    %c0_i32_0 = arith.constant 0 : i32
    %c0_i32_1 = arith.constant 0 : i32
    return %c0_i32, %c0_i32_0 : i32, i32
  }
  func.func @transform_4(%arg0: i32) -> (i32, i32) {
    %c0_i32 = arith.constant 0 : i32
    %c0_i32_0 = arith.constant 0 : i32
    %c0_i32_1 = arith.constant 0 : i32
    return %c0_i32, %c0_i32_0 : i32, i32
  }
  func.func @transform_5(%arg0: i32) -> (i32, i32) {
    %c0_i32 = arith.constant 0 : i32
    %c0_i32_0 = arith.constant 0 : i32
    return %arg0, %c0_i32 : i32, i32
  }
}

module attributes {stable_mosaic.version = 11 : i64} {
  func.func @_matmul_kernel(%arg0: i32, %arg1: i32, %arg2: i32, %arg3: memref<16x32xbf16, #tpu.memory_space<vmem>>, %arg4: memref<32x64xbf16, #tpu.memory_space<vmem>>, %arg5: memref<1x64xbf16, #tpu.memory_space<vmem>>, %arg6: memref<16x64xbf16, #tpu.memory_space<vmem>>, %arg7: memref<16x64xf32, #tpu.memory_space<vmem>>) attributes {dimension_semantics = [#tpu.dimension_semantics<parallel>, #tpu.dimension_semantics<parallel>, #tpu.dimension_semantics<arbitrary>], iteration_bounds = array<i64: 1, 1, 1>, scalar_prefetch = 0 : i64, scratch_operands = 1 : i64, tpu.core_type = #tpu.core_type<tc>, window_params = [{transform_indices = @transform_0, window_bounds = array<i64: 16, 32>}, {transform_indices = @transform_1, window_bounds = array<i64: 32, 64>}, {transform_indices = @transform_2, window_bounds = array<i64: 1, 64>}, {transform_indices = @transform_3, window_bounds = array<i64: 16, 64>}]} {
    %c0_i32 = arith.constant 0 : i32
    %0 = arith.cmpi eq, %arg2, %c0_i32 : i32
    %1 = arith.extui %0 : i1 to i32
    %c0_i32_0 = arith.constant 0 : i32
    %2 = arith.cmpi ne, %1, %c0_i32_0 : i32
    scf.if %2 {
      %cst_10 = arith.constant 0.000000e+00 : f32
      %12 = vector.broadcast %cst_10 : f32 to vector<16x64xf32>
      %c0_11 = arith.constant 0 : index
      %c0_12 = arith.constant 0 : index
      %13 = vector.load %arg7[%c0_11, %c0_12] : memref<16x64xf32, #tpu.memory_space<vmem>>, vector<16x64xf32>
      tpu.vector_store %arg7[%c0_11, %c0_12], %12 {strides = array<i32>} : memref<16x64xf32, #tpu.memory_space<vmem>>, vector<16x64xf32>,
    } else {
    }
    %c0 = arith.constant 0 : index
    %c0_1 = arith.constant 0 : index
    %3 = vector.load %arg7[%c0, %c0_1] : memref<16x64xf32, #tpu.memory_space<vmem>>, vector<16x64xf32>
    %c0_2 = arith.constant 0 : index
    %c0_3 = arith.constant 0 : index
    %4 = vector.load %arg3[%c0_2, %c0_3] : memref<16x32xbf16, #tpu.memory_space<vmem>>, vector<16x32xbf16>
    %c0_4 = arith.constant 0 : index
    %c0_5 = arith.constant 0 : index
    %5 = vector.load %arg4[%c0_4, %c0_5] : memref<32x64xbf16, #tpu.memory_space<vmem>>, vector<32x64xbf16>
    %cst = arith.constant dense<0.000000e+00> : vector<16x64xf32>
    %6 = tpu.matmul %4, %5, %cst {dimension_numbers = #tpu.dot_dimension_numbers<[1], [0], [0], [1], [0, 0, 1, 1], [], []>} : vector<16x32xbf16>, vector<32x64xbf16>, vector<16x64xf32> -> vector<16x64xf32>
    %7 = arith.addf %3, %6 : vector<16x64xf32>
    %c0_6 = arith.constant 0 : index
    %c0_7 = arith.constant 0 : index
    %8 = vector.load %arg7[%c0_6, %c0_7] : memref<16x64xf32, #tpu.memory_space<vmem>>, vector<16x64xf32>
    tpu.vector_store %arg7[%c0_6, %c0_7], %7 {strides = array<i32>} : memref<16x64xf32, #tpu.memory_space<vmem>>, vector<16x64xf32>,
    %c0_i32_8 = arith.constant 0 : i32
    %9 = arith.cmpi eq, %arg2, %c0_i32_8 : i32
    %10 = arith.extui %9 : i1 to i32
    %c0_i32_9 = arith.constant 0 : i32
    %11 = arith.cmpi ne, %10, %c0_i32_9 : i32
    scf.if %11 {
      %c0_10 = arith.constant 0 : index
      %c0_11 = arith.constant 0 : index
      %12 = vector.load %arg7[%c0_10, %c0_11] : memref<16x64xf32, #tpu.memory_space<vmem>>, vector<16x64xf32>
      %c0_12 = arith.constant 0 : index
      %c0_13 = arith.constant 0 : index
      %13 = vector.load %arg5[%c0_12, %c0_13] : memref<1x64xbf16, #tpu.memory_space<vmem>>, vector<1x64xbf16>
      %14 = arith.extf %13 : vector<1x64xbf16> to vector<1x64xf32>
      %15 = vector.broadcast %14 : vector<1x64xf32> to vector<16x64xf32>
      %16 = arith.addf %12, %15 : vector<16x64xf32>
      %17 = arith.truncf %16 : vector<16x64xf32> to vector<16x64xbf16>
      %c0_14 = arith.constant 0 : index
      %c0_15 = arith.constant 0 : index
      %18 = vector.load %arg6[%c0_14, %c0_15] : memref<16x64xbf16, #tpu.memory_space<vmem>>, vector<16x64xbf16>
      tpu.vector_store %arg6[%c0_14, %c0_15], %17 {strides = array<i32>} : memref<16x64xbf16, #tpu.memory_space<vmem>>, vector<16x64xbf16>,
    } else {
    }
    return
  }
  func.func @transform_0(%arg0: i32, %arg1: i32, %arg2: i32) -> (i32, i32) {
    %c0_i32 = arith.constant 0 : i32
    return %arg0, %arg2 : i32, i32
  }
  func.func @transform_1(%arg0: i32, %arg1: i32, %arg2: i32) -> (i32, i32) {
    %c0_i32 = arith.constant 0 : i32
    return %arg2, %arg1 : i32, i32
  }
  func.func @transform_2(%arg0: i32, %arg1: i32, %arg2: i32) -> (i32, i32) {
    %c0_i32 = arith.constant 0 : i32
    %c0_i32_0 = arith.constant 0 : i32
    return %c0_i32, %arg1 : i32, i32
  }
  func.func @transform_3(%arg0: i32, %arg1: i32, %arg2: i32) -> (i32, i32) {
    %c0_i32 = arith.constant 0 : i32
    return %arg0, %arg1 : i32, i32
  }
}

module attributes {stable_mosaic.version = 11 : i64} {
  func.func @_flash_attn_kernel(%arg0: i32, %arg1: i32, %arg2: i32, %arg3: memref<1x8x32xbf16, #tpu.memory_space<vmem>>, %arg4: memref<1x8x32xbf16, #tpu.memory_space<vmem>>, %arg5: memref<1x8x32xbf16, #tpu.memory_space<vmem>>, %arg6: memref<1x8x32xbf16, #tpu.memory_space<vmem>>, %arg7: memref<4x8x1xf32, #tpu.memory_space<vmem>>, %arg8: memref<4x8x1xf32, #tpu.memory_space<vmem>>, %arg9: memref<4x8x8xf32, #tpu.memory_space<vmem>>) attributes {dimension_semantics = [#tpu.dimension_semantics<parallel>, #tpu.dimension_semantics<parallel>, #tpu.dimension_semantics<arbitrary>], iteration_bounds = array<i64: 2, 1, 1>, scalar_prefetch = 0 : i64, scratch_operands = 3 : i64, tpu.core_type = #tpu.core_type<tc>, window_params = [{transform_indices = @transform_0, window_bounds = array<i64: 1, 8, 32>}, {transform_indices = @transform_1, window_bounds = array<i64: 1, 8, 32>}, {transform_indices = @transform_2, window_bounds = array<i64: 1, 8, 32>}, {transform_indices = @transform_3, window_bounds = array<i64: 1, 8, 32>}]} {
    %c0_i32 = arith.constant 0 : i32
    %0 = arith.cmpi eq, %arg2, %c0_i32 : i32
    %1 = arith.extui %0 : i1 to i32
    %c0_i32_0 = arith.constant 0 : i32
    %2 = arith.cmpi ne, %1, %c0_i32_0 : i32
    scf.if %2 {
      %cst_95 = arith.constant -1.000000e+30 : f32
      %156 = vector.broadcast %cst_95 : f32 to vector<4x8x1xf32>
      %c0_96 = arith.constant 0 : index
      %c0_97 = arith.constant 0 : index
      %c0_98 = arith.constant 0 : index
      %157 = vector.load %arg7[%c0_96, %c0_97, %c0_98] : memref<4x8x1xf32, #tpu.memory_space<vmem>>, vector<4x8x1xf32>
      tpu.vector_store %arg7[%c0_96, %c0_97, %c0_98], %156 {strides = array<i32>} : memref<4x8x1xf32, #tpu.memory_space<vmem>>, vector<4x8x1xf32>,
      %cst_99 = arith.constant 0.000000e+00 : f32
      %158 = vector.broadcast %cst_99 : f32 to vector<4x8x1xf32>
      %c0_100 = arith.constant 0 : index
      %c0_101 = arith.constant 0 : index
      %c0_102 = arith.constant 0 : index
      %159 = vector.load %arg8[%c0_100, %c0_101, %c0_102] : memref<4x8x1xf32, #tpu.memory_space<vmem>>, vector<4x8x1xf32>
      tpu.vector_store %arg8[%c0_100, %c0_101, %c0_102], %158 {strides = array<i32>} : memref<4x8x1xf32, #tpu.memory_space<vmem>>, vector<4x8x1xf32>,
      %cst_103 = arith.constant 0.000000e+00 : f32
      %160 = vector.broadcast %cst_103 : f32 to vector<4x8x8xf32>
      %c0_104 = arith.constant 0 : index
      %c0_105 = arith.constant 0 : index
      %c0_106 = arith.constant 0 : index
      %161 = vector.load %arg9[%c0_104, %c0_105, %c0_106] : memref<4x8x8xf32, #tpu.memory_space<vmem>>, vector<4x8x8xf32>
      tpu.vector_store %arg9[%c0_104, %c0_105, %c0_106], %160 {strides = array<i32>} : memref<4x8x8xf32, #tpu.memory_space<vmem>>, vector<4x8x8xf32>,
    } else {
    }
    %c0 = arith.constant 0 : index
    %c0_1 = arith.constant 0 : index
    %c0_2 = arith.constant 0 : index
    %3 = vector.load %arg3[%c0, %c0_1, %c0_2] : memref<1x8x32xbf16, #tpu.memory_space<vmem>>, vector<1x8x32xbf16>
    %4 = vector.shape_cast %3 : vector<1x8x32xbf16> to vector<8x32xbf16>
    %c0_3 = arith.constant 0 : index
    %c0_4 = arith.constant 0 : index
    %c0_5 = arith.constant 0 : index
    %5 = vector.load %arg4[%c0_3, %c0_4, %c0_5] : memref<1x8x32xbf16, #tpu.memory_space<vmem>>, vector<1x8x32xbf16>
    %6 = vector.shape_cast %5 : vector<1x8x32xbf16> to vector<8x32xbf16>
    %c0_6 = arith.constant 0 : index
    %c0_7 = arith.constant 0 : index
    %c0_8 = arith.constant 0 : index
    %7 = vector.load %arg5[%c0_6, %c0_7, %c0_8] : memref<1x8x32xbf16, #tpu.memory_space<vmem>>, vector<1x8x32xbf16>
    %8 = vector.shape_cast %7 : vector<1x8x32xbf16> to vector<8x32xbf16>
    %9 = vector.extract_strided_slice %4 {offsets = [0, 0], sizes = [8, 8], strides = [1, 1]} : vector<8x32xbf16> to vector<8x8xbf16>
    %10 = vector.extract_strided_slice %6 {offsets = [0, 0], sizes = [8, 8], strides = [1, 1]} : vector<8x32xbf16> to vector<8x8xbf16>
    %11 = vector.extract_strided_slice %8 {offsets = [0, 0], sizes = [8, 8], strides = [1, 1]} : vector<8x32xbf16> to vector<8x8xbf16>
    %cst = arith.constant dense<0.000000e+00> : vector<8x8xf32>
    %12 = tpu.matmul %9, %10, %cst {dimension_numbers = #tpu.dot_dimension_numbers<[1], [1], [0], [0], [0, 0, 1, 0], [], []>} : vector<8x8xbf16>, vector<8x8xbf16>, vector<8x8xf32> -> vector<8x8xf32>
    %c0_9 = arith.constant 0 : index
    %c0_10 = arith.constant 0 : index
    %c0_11 = arith.constant 0 : index
    %13 = vector.load %arg7[%c0_9, %c0_10, %c0_11] : memref<4x8x1xf32, #tpu.memory_space<vmem>>, vector<1x8x1xf32>
    %14 = vector.shape_cast %13 : vector<1x8x1xf32> to vector<8x1xf32>
    %cst_12 = arith.constant dense<0xFF800000> : vector<8xf32>
    %15 = vector.multi_reduction <maximumf>, %12, %cst_12 [1] : vector<8x8xf32> to vector<8xf32>
    %16 = vector.shape_cast %15 : vector<8xf32> to vector<8x1xf32>
    %17 = arith.maximumf %14, %16 : vector<8x1xf32>
    %18 = arith.subf %14, %17 : vector<8x1xf32>
    %19 = math.exp %18 : vector<8x1xf32>
    %20 = vector.broadcast %17 : vector<8x1xf32> to vector<8x8xf32>
    %21 = arith.subf %12, %20 : vector<8x8xf32>
    %22 = math.exp %21 : vector<8x8xf32>
    %c0_13 = arith.constant 0 : index
    %c0_14 = arith.constant 0 : index
    %c0_15 = arith.constant 0 : index
    %23 = vector.load %arg8[%c0_13, %c0_14, %c0_15] : memref<4x8x1xf32, #tpu.memory_space<vmem>>, vector<1x8x1xf32>
    %24 = vector.shape_cast %23 : vector<1x8x1xf32> to vector<8x1xf32>
    %25 = arith.mulf %19, %24 : vector<8x1xf32>
    %cst_16 = arith.constant dense<0.000000e+00> : vector<8xf32>
    %26 = vector.multi_reduction <add>, %22, %cst_16 [1] : vector<8x8xf32> to vector<8xf32>
    %27 = vector.shape_cast %26 : vector<8xf32> to vector<8x1xf32>
    %28 = arith.addf %25, %27 : vector<8x1xf32>
    %c0_17 = arith.constant 0 : index
    %c0_18 = arith.constant 0 : index
    %c0_19 = arith.constant 0 : index
    %29 = vector.load %arg8[%c0_17, %c0_18, %c0_19] : memref<4x8x1xf32, #tpu.memory_space<vmem>>, vector<1x8x1xf32>
    %30 = vector.shape_cast %29 : vector<1x8x1xf32> to vector<8x1xf32>
    %31 = vector.shape_cast %28 : vector<8x1xf32> to vector<1x8x1xf32>
    tpu.vector_store %arg8[%c0_17, %c0_18, %c0_19], %31 {strides = array<i32>} : memref<4x8x1xf32, #tpu.memory_space<vmem>>, vector<1x8x1xf32>,
    %c0_20 = arith.constant 0 : index
    %c0_21 = arith.constant 0 : index
    %c0_22 = arith.constant 0 : index
    %32 = vector.load %arg9[%c0_20, %c0_21, %c0_22] : memref<4x8x8xf32, #tpu.memory_space<vmem>>, vector<1x8x8xf32>
    %33 = vector.shape_cast %32 : vector<1x8x8xf32> to vector<8x8xf32>
    %34 = vector.broadcast %19 : vector<8x1xf32> to vector<8x8xf32>
    %35 = arith.mulf %34, %33 : vector<8x8xf32>
    %36 = arith.truncf %22 : vector<8x8xf32> to vector<8x8xbf16>
    %cst_23 = arith.constant dense<0.000000e+00> : vector<8x8xf32>
    %37 = tpu.matmul %36, %11, %cst_23 {dimension_numbers = #tpu.dot_dimension_numbers<[1], [0], [0], [1], [0, 0, 1, 1], [], []>} : vector<8x8xbf16>, vector<8x8xbf16>, vector<8x8xf32> -> vector<8x8xf32>
    %38 = arith.addf %35, %37 : vector<8x8xf32>
    %c0_24 = arith.constant 0 : index
    %c0_25 = arith.constant 0 : index
    %c0_26 = arith.constant 0 : index
    %39 = vector.load %arg9[%c0_24, %c0_25, %c0_26] : memref<4x8x8xf32, #tpu.memory_space<vmem>>, vector<1x8x8xf32>
    %40 = vector.shape_cast %39 : vector<1x8x8xf32> to vector<8x8xf32>
    %41 = vector.shape_cast %38 : vector<8x8xf32> to vector<1x8x8xf32>
    tpu.vector_store %arg9[%c0_24, %c0_25, %c0_26], %41 {strides = array<i32>} : memref<4x8x8xf32, #tpu.memory_space<vmem>>, vector<1x8x8xf32>,
    %c0_27 = arith.constant 0 : index
    %c0_28 = arith.constant 0 : index
    %c0_29 = arith.constant 0 : index
    %42 = vector.load %arg7[%c0_27, %c0_28, %c0_29] : memref<4x8x1xf32, #tpu.memory_space<vmem>>, vector<1x8x1xf32>
    %43 = vector.shape_cast %42 : vector<1x8x1xf32> to vector<8x1xf32>
    %44 = vector.shape_cast %17 : vector<8x1xf32> to vector<1x8x1xf32>
    tpu.vector_store %arg7[%c0_27, %c0_28, %c0_29], %44 {strides = array<i32>} : memref<4x8x1xf32, #tpu.memory_space<vmem>>, vector<1x8x1xf32>,
    %45 = vector.extract_strided_slice %4 {offsets = [0, 8], sizes = [8, 8], strides = [1, 1]} : vector<8x32xbf16> to vector<8x8xbf16>
    %46 = vector.extract_strided_slice %6 {offsets = [0, 8], sizes = [8, 8], strides = [1, 1]} : vector<8x32xbf16> to vector<8x8xbf16>
    %47 = vector.extract_strided_slice %8 {offsets = [0, 8], sizes = [8, 8], strides = [1, 1]} : vector<8x32xbf16> to vector<8x8xbf16>
    %cst_30 = arith.constant dense<0.000000e+00> : vector<8x8xf32>
    %48 = tpu.matmul %45, %46, %cst_30 {dimension_numbers = #tpu.dot_dimension_numbers<[1], [1], [0], [0], [0, 0, 1, 0], [], []>} : vector<8x8xbf16>, vector<8x8xbf16>, vector<8x8xf32> -> vector<8x8xf32>
    %c1 = arith.constant 1 : index
    %c0_31 = arith.constant 0 : index
    %c0_32 = arith.constant 0 : index
    %49 = vector.load %arg7[%c1, %c0_31, %c0_32] : memref<4x8x1xf32, #tpu.memory_space<vmem>>, vector<1x8x1xf32>
    %50 = vector.shape_cast %49 : vector<1x8x1xf32> to vector<8x1xf32>
    %cst_33 = arith.constant dense<0xFF800000> : vector<8xf32>
    %51 = vector.multi_reduction <maximumf>, %48, %cst_33 [1] : vector<8x8xf32> to vector<8xf32>
    %52 = vector.shape_cast %51 : vector<8xf32> to vector<8x1xf32>
    %53 = arith.maximumf %50, %52 : vector<8x1xf32>
    %54 = arith.subf %50, %53 : vector<8x1xf32>
    %55 = math.exp %54 : vector<8x1xf32>
    %56 = vector.broadcast %53 : vector<8x1xf32> to vector<8x8xf32>
    %57 = arith.subf %48, %56 : vector<8x8xf32>
    %58 = math.exp %57 : vector<8x8xf32>
    %c1_34 = arith.constant 1 : index
    %c0_35 = arith.constant 0 : index
    %c0_36 = arith.constant 0 : index
    %59 = vector.load %arg8[%c1_34, %c0_35, %c0_36] : memref<4x8x1xf32, #tpu.memory_space<vmem>>, vector<1x8x1xf32>
    %60 = vector.shape_cast %59 : vector<1x8x1xf32> to vector<8x1xf32>
    %61 = arith.mulf %55, %60 : vector<8x1xf32>
    %cst_37 = arith.constant dense<0.000000e+00> : vector<8xf32>
    %62 = vector.multi_reduction <add>, %58, %cst_37 [1] : vector<8x8xf32> to vector<8xf32>
    %63 = vector.shape_cast %62 : vector<8xf32> to vector<8x1xf32>
    %64 = arith.addf %61, %63 : vector<8x1xf32>
    %c1_38 = arith.constant 1 : index
    %c0_39 = arith.constant 0 : index
    %c0_40 = arith.constant 0 : index
    %65 = vector.load %arg8[%c1_38, %c0_39, %c0_40] : memref<4x8x1xf32, #tpu.memory_space<vmem>>, vector<1x8x1xf32>
    %66 = vector.shape_cast %65 : vector<1x8x1xf32> to vector<8x1xf32>
    %67 = vector.shape_cast %64 : vector<8x1xf32> to vector<1x8x1xf32>
    tpu.vector_store %arg8[%c1_38, %c0_39, %c0_40], %67 {strides = array<i32>} : memref<4x8x1xf32, #tpu.memory_space<vmem>>, vector<1x8x1xf32>,
    %c1_41 = arith.constant 1 : index
    %c0_42 = arith.constant 0 : index
    %c0_43 = arith.constant 0 : index
    %68 = vector.load %arg9[%c1_41, %c0_42, %c0_43] : memref<4x8x8xf32, #tpu.memory_space<vmem>>, vector<1x8x8xf32>
    %69 = vector.shape_cast %68 : vector<1x8x8xf32> to vector<8x8xf32>
    %70 = vector.broadcast %55 : vector<8x1xf32> to vector<8x8xf32>
    %71 = arith.mulf %70, %69 : vector<8x8xf32>
    %72 = arith.truncf %58 : vector<8x8xf32> to vector<8x8xbf16>
    %cst_44 = arith.constant dense<0.000000e+00> : vector<8x8xf32>
    %73 = tpu.matmul %72, %47, %cst_44 {dimension_numbers = #tpu.dot_dimension_numbers<[1], [0], [0], [1], [0, 0, 1, 1], [], []>} : vector<8x8xbf16>, vector<8x8xbf16>, vector<8x8xf32> -> vector<8x8xf32>
    %74 = arith.addf %71, %73 : vector<8x8xf32>
    %c1_45 = arith.constant 1 : index
    %c0_46 = arith.constant 0 : index
    %c0_47 = arith.constant 0 : index
    %75 = vector.load %arg9[%c1_45, %c0_46, %c0_47] : memref<4x8x8xf32, #tpu.memory_space<vmem>>, vector<1x8x8xf32>
    %76 = vector.shape_cast %75 : vector<1x8x8xf32> to vector<8x8xf32>
    %77 = vector.shape_cast %74 : vector<8x8xf32> to vector<1x8x8xf32>
    tpu.vector_store %arg9[%c1_45, %c0_46, %c0_47], %77 {strides = array<i32>} : memref<4x8x8xf32, #tpu.memory_space<vmem>>, vector<1x8x8xf32>,
    %c1_48 = arith.constant 1 : index
    %c0_49 = arith.constant 0 : index
    %c0_50 = arith.constant 0 : index
    %78 = vector.load %arg7[%c1_48, %c0_49, %c0_50] : memref<4x8x1xf32, #tpu.memory_space<vmem>>, vector<1x8x1xf32>
    %79 = vector.shape_cast %78 : vector<1x8x1xf32> to vector<8x1xf32>
    %80 = vector.shape_cast %53 : vector<8x1xf32> to vector<1x8x1xf32>
    tpu.vector_store %arg7[%c1_48, %c0_49, %c0_50], %80 {strides = array<i32>} : memref<4x8x1xf32, #tpu.memory_space<vmem>>, vector<1x8x1xf32>,
    %81 = vector.extract_strided_slice %4 {offsets = [0, 16], sizes = [8, 8], strides = [1, 1]} : vector<8x32xbf16> to vector<8x8xbf16>
    %82 = vector.extract_strided_slice %6 {offsets = [0, 16], sizes = [8, 8], strides = [1, 1]} : vector<8x32xbf16> to vector<8x8xbf16>
    %83 = vector.extract_strided_slice %8 {offsets = [0, 16], sizes = [8, 8], strides = [1, 1]} : vector<8x32xbf16> to vector<8x8xbf16>
    %cst_51 = arith.constant dense<0.000000e+00> : vector<8x8xf32>
    %84 = tpu.matmul %81, %82, %cst_51 {dimension_numbers = #tpu.dot_dimension_numbers<[1], [1], [0], [0], [0, 0, 1, 0], [], []>} : vector<8x8xbf16>, vector<8x8xbf16>, vector<8x8xf32> -> vector<8x8xf32>
    %c2 = arith.constant 2 : index
    %c0_52 = arith.constant 0 : index
    %c0_53 = arith.constant 0 : index
    %85 = vector.load %arg7[%c2, %c0_52, %c0_53] : memref<4x8x1xf32, #tpu.memory_space<vmem>>, vector<1x8x1xf32>
    %86 = vector.shape_cast %85 : vector<1x8x1xf32> to vector<8x1xf32>
    %cst_54 = arith.constant dense<0xFF800000> : vector<8xf32>
    %87 = vector.multi_reduction <maximumf>, %84, %cst_54 [1] : vector<8x8xf32> to vector<8xf32>
    %88 = vector.shape_cast %87 : vector<8xf32> to vector<8x1xf32>
    %89 = arith.maximumf %86, %88 : vector<8x1xf32>
    %90 = arith.subf %86, %89 : vector<8x1xf32>
    %91 = math.exp %90 : vector<8x1xf32>
    %92 = vector.broadcast %89 : vector<8x1xf32> to vector<8x8xf32>
    %93 = arith.subf %84, %92 : vector<8x8xf32>
    %94 = math.exp %93 : vector<8x8xf32>
    %c2_55 = arith.constant 2 : index
    %c0_56 = arith.constant 0 : index
    %c0_57 = arith.constant 0 : index
    %95 = vector.load %arg8[%c2_55, %c0_56, %c0_57] : memref<4x8x1xf32, #tpu.memory_space<vmem>>, vector<1x8x1xf32>
    %96 = vector.shape_cast %95 : vector<1x8x1xf32> to vector<8x1xf32>
    %97 = arith.mulf %91, %96 : vector<8x1xf32>
    %cst_58 = arith.constant dense<0.000000e+00> : vector<8xf32>
    %98 = vector.multi_reduction <add>, %94, %cst_58 [1] : vector<8x8xf32> to vector<8xf32>
    %99 = vector.shape_cast %98 : vector<8xf32> to vector<8x1xf32>
    %100 = arith.addf %97, %99 : vector<8x1xf32>
    %c2_59 = arith.constant 2 : index
    %c0_60 = arith.constant 0 : index
    %c0_61 = arith.constant 0 : index
    %101 = vector.load %arg8[%c2_59, %c0_60, %c0_61] : memref<4x8x1xf32, #tpu.memory_space<vmem>>, vector<1x8x1xf32>
    %102 = vector.shape_cast %101 : vector<1x8x1xf32> to vector<8x1xf32>
    %103 = vector.shape_cast %100 : vector<8x1xf32> to vector<1x8x1xf32>
    tpu.vector_store %arg8[%c2_59, %c0_60, %c0_61], %103 {strides = array<i32>} : memref<4x8x1xf32, #tpu.memory_space<vmem>>, vector<1x8x1xf32>,
    %c2_62 = arith.constant 2 : index
    %c0_63 = arith.constant 0 : index
    %c0_64 = arith.constant 0 : index
    %104 = vector.load %arg9[%c2_62, %c0_63, %c0_64] : memref<4x8x8xf32, #tpu.memory_space<vmem>>, vector<1x8x8xf32>
    %105 = vector.shape_cast %104 : vector<1x8x8xf32> to vector<8x8xf32>
    %106 = vector.broadcast %91 : vector<8x1xf32> to vector<8x8xf32>
    %107 = arith.mulf %106, %105 : vector<8x8xf32>
    %108 = arith.truncf %94 : vector<8x8xf32> to vector<8x8xbf16>
    %cst_65 = arith.constant dense<0.000000e+00> : vector<8x8xf32>
    %109 = tpu.matmul %108, %83, %cst_65 {dimension_numbers = #tpu.dot_dimension_numbers<[1], [0], [0], [1], [0, 0, 1, 1], [], []>} : vector<8x8xbf16>, vector<8x8xbf16>, vector<8x8xf32> -> vector<8x8xf32>
    %110 = arith.addf %107, %109 : vector<8x8xf32>
    %c2_66 = arith.constant 2 : index
    %c0_67 = arith.constant 0 : index
    %c0_68 = arith.constant 0 : index
    %111 = vector.load %arg9[%c2_66, %c0_67, %c0_68] : memref<4x8x8xf32, #tpu.memory_space<vmem>>, vector<1x8x8xf32>
    %112 = vector.shape_cast %111 : vector<1x8x8xf32> to vector<8x8xf32>
    %113 = vector.shape_cast %110 : vector<8x8xf32> to vector<1x8x8xf32>
    tpu.vector_store %arg9[%c2_66, %c0_67, %c0_68], %113 {strides = array<i32>} : memref<4x8x8xf32, #tpu.memory_space<vmem>>, vector<1x8x8xf32>,
    %c2_69 = arith.constant 2 : index
    %c0_70 = arith.constant 0 : index
    %c0_71 = arith.constant 0 : index
    %114 = vector.load %arg7[%c2_69, %c0_70, %c0_71] : memref<4x8x1xf32, #tpu.memory_space<vmem>>, vector<1x8x1xf32>
    %115 = vector.shape_cast %114 : vector<1x8x1xf32> to vector<8x1xf32>
    %116 = vector.shape_cast %89 : vector<8x1xf32> to vector<1x8x1xf32>
    tpu.vector_store %arg7[%c2_69, %c0_70, %c0_71], %116 {strides = array<i32>} : memref<4x8x1xf32, #tpu.memory_space<vmem>>, vector<1x8x1xf32>,
    %117 = vector.extract_strided_slice %4 {offsets = [0, 24], sizes = [8, 8], strides = [1, 1]} : vector<8x32xbf16> to vector<8x8xbf16>
    %118 = vector.extract_strided_slice %6 {offsets = [0, 24], sizes = [8, 8], strides = [1, 1]} : vector<8x32xbf16> to vector<8x8xbf16>
    %119 = vector.extract_strided_slice %8 {offsets = [0, 24], sizes = [8, 8], strides = [1, 1]} : vector<8x32xbf16> to vector<8x8xbf16>
    %cst_72 = arith.constant dense<0.000000e+00> : vector<8x8xf32>
    %120 = tpu.matmul %117, %118, %cst_72 {dimension_numbers = #tpu.dot_dimension_numbers<[1], [1], [0], [0], [0, 0, 1, 0], [], []>} : vector<8x8xbf16>, vector<8x8xbf16>, vector<8x8xf32> -> vector<8x8xf32>
    %c3 = arith.constant 3 : index
    %c0_73 = arith.constant 0 : index
    %c0_74 = arith.constant 0 : index
    %121 = vector.load %arg7[%c3, %c0_73, %c0_74] : memref<4x8x1xf32, #tpu.memory_space<vmem>>, vector<1x8x1xf32>
    %122 = vector.shape_cast %121 : vector<1x8x1xf32> to vector<8x1xf32>
    %cst_75 = arith.constant dense<0xFF800000> : vector<8xf32>
    %123 = vector.multi_reduction <maximumf>, %120, %cst_75 [1] : vector<8x8xf32> to vector<8xf32>
    %124 = vector.shape_cast %123 : vector<8xf32> to vector<8x1xf32>
    %125 = arith.maximumf %122, %124 : vector<8x1xf32>
    %126 = arith.subf %122, %125 : vector<8x1xf32>
    %127 = math.exp %126 : vector<8x1xf32>
    %128 = vector.broadcast %125 : vector<8x1xf32> to vector<8x8xf32>
    %129 = arith.subf %120, %128 : vector<8x8xf32>
    %130 = math.exp %129 : vector<8x8xf32>
    %c3_76 = arith.constant 3 : index
    %c0_77 = arith.constant 0 : index
    %c0_78 = arith.constant 0 : index
    %131 = vector.load %arg8[%c3_76, %c0_77, %c0_78] : memref<4x8x1xf32, #tpu.memory_space<vmem>>, vector<1x8x1xf32>
    %132 = vector.shape_cast %131 : vector<1x8x1xf32> to vector<8x1xf32>
    %133 = arith.mulf %127, %132 : vector<8x1xf32>
    %cst_79 = arith.constant dense<0.000000e+00> : vector<8xf32>
    %134 = vector.multi_reduction <add>, %130, %cst_79 [1] : vector<8x8xf32> to vector<8xf32>
    %135 = vector.shape_cast %134 : vector<8xf32> to vector<8x1xf32>
    %136 = arith.addf %133, %135 : vector<8x1xf32>
    %c3_80 = arith.constant 3 : index
    %c0_81 = arith.constant 0 : index
    %c0_82 = arith.constant 0 : index
    %137 = vector.load %arg8[%c3_80, %c0_81, %c0_82] : memref<4x8x1xf32, #tpu.memory_space<vmem>>, vector<1x8x1xf32>
    %138 = vector.shape_cast %137 : vector<1x8x1xf32> to vector<8x1xf32>
    %139 = vector.shape_cast %136 : vector<8x1xf32> to vector<1x8x1xf32>
    tpu.vector_store %arg8[%c3_80, %c0_81, %c0_82], %139 {strides = array<i32>} : memref<4x8x1xf32, #tpu.memory_space<vmem>>, vector<1x8x1xf32>,
    %c3_83 = arith.constant 3 : index
    %c0_84 = arith.constant 0 : index
    %c0_85 = arith.constant 0 : index
    %140 = vector.load %arg9[%c3_83, %c0_84, %c0_85] : memref<4x8x8xf32, #tpu.memory_space<vmem>>, vector<1x8x8xf32>
    %141 = vector.shape_cast %140 : vector<1x8x8xf32> to vector<8x8xf32>
    %142 = vector.broadcast %127 : vector<8x1xf32> to vector<8x8xf32>
    %143 = arith.mulf %142, %141 : vector<8x8xf32>
    %144 = arith.truncf %130 : vector<8x8xf32> to vector<8x8xbf16>
    %cst_86 = arith.constant dense<0.000000e+00> : vector<8x8xf32>
    %145 = tpu.matmul %144, %119, %cst_86 {dimension_numbers = #tpu.dot_dimension_numbers<[1], [0], [0], [1], [0, 0, 1, 1], [], []>} : vector<8x8xbf16>, vector<8x8xbf16>, vector<8x8xf32> -> vector<8x8xf32>
    %146 = arith.addf %143, %145 : vector<8x8xf32>
    %c3_87 = arith.constant 3 : index
    %c0_88 = arith.constant 0 : index
    %c0_89 = arith.constant 0 : index
    %147 = vector.load %arg9[%c3_87, %c0_88, %c0_89] : memref<4x8x8xf32, #tpu.memory_space<vmem>>, vector<1x8x8xf32>
    %148 = vector.shape_cast %147 : vector<1x8x8xf32> to vector<8x8xf32>
    %149 = vector.shape_cast %146 : vector<8x8xf32> to vector<1x8x8xf32>
    tpu.vector_store %arg9[%c3_87, %c0_88, %c0_89], %149 {strides = array<i32>} : memref<4x8x8xf32, #tpu.memory_space<vmem>>, vector<1x8x8xf32>,
    %c3_90 = arith.constant 3 : index
    %c0_91 = arith.constant 0 : index
    %c0_92 = arith.constant 0 : index
    %150 = vector.load %arg7[%c3_90, %c0_91, %c0_92] : memref<4x8x1xf32, #tpu.memory_space<vmem>>, vector<1x8x1xf32>
    %151 = vector.shape_cast %150 : vector<1x8x1xf32> to vector<8x1xf32>
    %152 = vector.shape_cast %125 : vector<8x1xf32> to vector<1x8x1xf32>
    tpu.vector_store %arg7[%c3_90, %c0_91, %c0_92], %152 {strides = array<i32>} : memref<4x8x1xf32, #tpu.memory_space<vmem>>, vector<1x8x1xf32>,
    %c0_i32_93 = arith.constant 0 : i32
    %153 = arith.cmpi eq, %arg2, %c0_i32_93 : i32
    %154 = arith.extui %153 : i1 to i32
    %c0_i32_94 = arith.constant 0 : i32
    %155 = arith.cmpi ne, %154, %c0_i32_94 : i32
    scf.if %155 {
      %c0_95 = arith.constant 0 : index
      %c0_96 = arith.constant 0 : index
      %c0_97 = arith.constant 0 : index
      %156 = vector.load %arg8[%c0_95, %c0_96, %c0_97] : memref<4x8x1xf32, #tpu.memory_space<vmem>>, vector<1x8x1xf32>
      %157 = vector.shape_cast %156 : vector<1x8x1xf32> to vector<8x1xf32>
      %158 = tpu.reciprocal %157 {approx = true} : vector<8x1xf32> -> vector<8x1xf32>
      %c0_98 = arith.constant 0 : index
      %c0_99 = arith.constant 0 : index
      %c0_100 = arith.constant 0 : index
      %159 = vector.load %arg9[%c0_98, %c0_99, %c0_100] : memref<4x8x8xf32, #tpu.memory_space<vmem>>, vector<1x8x8xf32>
      %160 = vector.shape_cast %159 : vector<1x8x8xf32> to vector<8x8xf32>
      %161 = vector.broadcast %158 : vector<8x1xf32> to vector<8x8xf32>
      %162 = arith.mulf %160, %161 : vector<8x8xf32>
      %c1_101 = arith.constant 1 : index
      %c0_102 = arith.constant 0 : index
      %c0_103 = arith.constant 0 : index
      %163 = vector.load %arg8[%c1_101, %c0_102, %c0_103] : memref<4x8x1xf32, #tpu.memory_space<vmem>>, vector<1x8x1xf32>
      %164 = vector.shape_cast %163 : vector<1x8x1xf32> to vector<8x1xf32>
      %165 = tpu.reciprocal %164 {approx = true} : vector<8x1xf32> -> vector<8x1xf32>
      %c1_104 = arith.constant 1 : index
      %c0_105 = arith.constant 0 : index
      %c0_106 = arith.constant 0 : index
      %166 = vector.load %arg9[%c1_104, %c0_105, %c0_106] : memref<4x8x8xf32, #tpu.memory_space<vmem>>, vector<1x8x8xf32>
      %167 = vector.shape_cast %166 : vector<1x8x8xf32> to vector<8x8xf32>
      %168 = vector.broadcast %165 : vector<8x1xf32> to vector<8x8xf32>
      %169 = arith.mulf %167, %168 : vector<8x8xf32>
      %c2_107 = arith.constant 2 : index
      %c0_108 = arith.constant 0 : index
      %c0_109 = arith.constant 0 : index
      %170 = vector.load %arg8[%c2_107, %c0_108, %c0_109] : memref<4x8x1xf32, #tpu.memory_space<vmem>>, vector<1x8x1xf32>
      %171 = vector.shape_cast %170 : vector<1x8x1xf32> to vector<8x1xf32>
      %172 = tpu.reciprocal %171 {approx = true} : vector<8x1xf32> -> vector<8x1xf32>
      %c2_110 = arith.constant 2 : index
      %c0_111 = arith.constant 0 : index
      %c0_112 = arith.constant 0 : index
      %173 = vector.load %arg9[%c2_110, %c0_111, %c0_112] : memref<4x8x8xf32, #tpu.memory_space<vmem>>, vector<1x8x8xf32>
      %174 = vector.shape_cast %173 : vector<1x8x8xf32> to vector<8x8xf32>
      %175 = vector.broadcast %172 : vector<8x1xf32> to vector<8x8xf32>
      %176 = arith.mulf %174, %175 : vector<8x8xf32>
      %c3_113 = arith.constant 3 : index
      %c0_114 = arith.constant 0 : index
      %c0_115 = arith.constant 0 : index
      %177 = vector.load %arg8[%c3_113, %c0_114, %c0_115] : memref<4x8x1xf32, #tpu.memory_space<vmem>>, vector<1x8x1xf32>
      %178 = vector.shape_cast %177 : vector<1x8x1xf32> to vector<8x1xf32>
      %179 = tpu.reciprocal %178 {approx = true} : vector<8x1xf32> -> vector<8x1xf32>
      %c3_116 = arith.constant 3 : index
      %c0_117 = arith.constant 0 : index
      %c0_118 = arith.constant 0 : index
      %180 = vector.load %arg9[%c3_116, %c0_117, %c0_118] : memref<4x8x8xf32, #tpu.memory_space<vmem>>, vector<1x8x8xf32>
      %181 = vector.shape_cast %180 : vector<1x8x8xf32> to vector<8x8xf32>
      %182 = vector.broadcast %179 : vector<8x1xf32> to vector<8x8xf32>
      %183 = arith.mulf %181, %182 : vector<8x8xf32>
      %184 = tpu.concatenate %162, %169, %176, %183 in 1 : vector<8x8xf32>, vector<8x8xf32>, vector<8x8xf32>, vector<8x8xf32> -> vector<8x32xf32>
      %185 = arith.truncf %184 : vector<8x32xf32> to vector<8x32xbf16>
      %c0_119 = arith.constant 0 : index
      %c0_120 = arith.constant 0 : index
      %c0_121 = arith.constant 0 : index
      %186 = vector.load %arg6[%c0_119, %c0_120, %c0_121] : memref<1x8x32xbf16, #tpu.memory_space<vmem>>, vector<1x8x32xbf16>
      %187 = vector.shape_cast %186 : vector<1x8x32xbf16> to vector<8x32xbf16>
      %188 = vector.shape_cast %185 : vector<8x32xbf16> to vector<1x8x32xbf16>
      tpu.vector_store %arg6[%c0_119, %c0_120, %c0_121], %188 {strides = array<i32>} : memref<1x8x32xbf16, #tpu.memory_space<vmem>>, vector<1x8x32xbf16>,
    } else {
    }
    return
  }
  func.func @transform_0(%arg0: i32, %arg1: i32, %arg2: i32) -> (i32, i32, i32) {
    %c0_i32 = arith.constant 0 : i32
    %c0_i32_0 = arith.constant 0 : i32
    return %arg0, %arg1, %c0_i32 : i32, i32, i32
  }
  func.func @transform_1(%arg0: i32, %arg1: i32, %arg2: i32) -> (i32, i32, i32) {
    %c0_i32 = arith.constant 0 : i32
    %c0_i32_0 = arith.constant 0 : i32
    return %arg0, %arg2, %c0_i32 : i32, i32, i32
  }
  func.func @transform_2(%arg0: i32, %arg1: i32, %arg2: i32) -> (i32, i32, i32) {
    %c0_i32 = arith.constant 0 : i32
    %c0_i32_0 = arith.constant 0 : i32
    return %arg0, %arg2, %c0_i32 : i32, i32, i32
  }
  func.func @transform_3(%arg0: i32, %arg1: i32, %arg2: i32) -> (i32, i32, i32) {
    %c0_i32 = arith.constant 0 : i32
    %c0_i32_0 = arith.constant 0 : i32
    return %arg0, %arg1, %c0_i32 : i32, i32, i32
  }
}

</mosaic_0001>

<llo_original>
// kernel: decoder_forward.22
$region0: #{decoder_forward.22}
  #allocation0 [shape = 'u32[]', space=smem, size = 0x4, offset = 0x4, fixed_abs, tag = 'smem constant byte address 0x4 - core index']
  #allocation1 [shape = 'u32[144,128]{1,0:T(1,128)}', space=vmem, size = 0x12000, scoped, tag = 'internal scratch']
  #allocation2 [shape = 'f32[16,96]{1,0:T(8,128)}', space=vmem, size = 0x2000, scoped, tag = 'scratch operand']
  %s0 = inlined_call_operand.vmem [shape: bf16[16,32], index: 0, kind: input, shape index: {}]
  %s1 = inlined_call_operand.vmem [shape: bf16[32,96], index: 1, kind: input, shape index: {}]
  %s2 = inlined_call_operand.vmem [shape: bf16[1,96], index: 2, kind: input, shape index: {}]
  %s3 = inlined_call_operand.vmem [shape: bf16[16,96], index: 3, kind: output, shape index: {}]
  %s4 = sld [smem:[#allocation0]]
  $region30: #{decoder_forward.22} parent=0
    _
  %s6 = ssub.s32 1, %s4
  %s7 = scalar_select 0, %s6, %s4
  // Predicated region
  $region2: #{decoder_forward.22} parent=0 // pred_check
    _
  $region3: #{decoder_forward.22} parent=0 // pred_check_branch
    %9 = sbr.rel (0) target = $region5
  $region4: #{decoder_forward.22} parent=0 // pred_region
    _
  $region5: #{decoder_forward.22} parent=0 // pred_fallthru
    _
  // Predicated region
  $region6: #{decoder_forward.22} parent=0 // pred_check
    _
  $region7: #{decoder_forward.22} parent=0 // pred_check_branch
    %11 = sbr.rel (0) target = $region9
  $region8: #{decoder_forward.22} parent=0 // pred_region
    _
  $region9: #{decoder_forward.22} parent=0 // pred_fallthru
    _
  // Predicated region
  $region10: #{decoder_forward.22} parent=0 // pred_check
    _
  $region11: #{decoder_forward.22} parent=0 // pred_check_branch
    %13 = sbr.rel (0) target = $region13
  $region12: #{decoder_forward.22} parent=0 // pred_region
    _
  $region13: #{decoder_forward.22} parent=0 // pred_fallthru
    _
  %p15 = scmp.eq.s32.totalorder 0, 0
  // Predicated region
  $region14: #{decoder_forward.22} parent=0 // pred_check
    %p16 = pneg %p15
  $region15: #{decoder_forward.22} parent=0 // pred_check_branch
    %18 = sbr.rel (%p16) target = $region17
  $region16: #{decoder_forward.22} parent=0 // pred_region
    %vm19 = vcmask 785408
    %20 = vst.msk [vmem:[#allocation2] sm:$0xff] %vm19, 0.0
    %21 = vst.msk [vmem:[#allocation2 + $0x8] sm:$0xff] %vm19, 0.0
  $region17: #{decoder_forward.22} parent=0 // pred_fallthru
    _
  %v22 = vld [vmem:[#allocation2] sm:$0xff]
  %v23 = vld [vmem:[#allocation2 + $0x8] sm:$0xff]
  %v24 = vld [vmem:[%s0] sm:$0xf]
  %v25 = vld [vmem:[%s0 + $0x4] sm:$0xf]
  %v26 = vld [vmem:[%s1] sm:$0xf]
  %v27 = vld [vmem:[%s1 + $0x4] sm:$0xf]
  %v28 = vld [vmem:[%s1 + $0x8] sm:$0xf]
  %v29 = vld [vmem:[%s1 + $0xc] sm:$0xf]
  %v32 = vunpack.c.l.b16 %v24
  %v33 = vunpack.c.l.b16 %v25
  %v34 = vpack.c.b16 %v33, %v32
  %v39 = vunpack.c.l.b16 %v26
  %v40 = vunpack.c.l.b16 %v27
  %v41 = vunpack.c.l.b16 %v28
  %v42 = vunpack.c.l.b16 %v29
  %v43 = vpack.c.b16 %v40, %v39
  %v44 = vpack.c.b16 %v42, %v41
  %vm47 = vcmask 261120
  %v49 = vsel %vm47, %v34, 0
  %51 = vmatprep.subr.bf16.mxu0 0
  %52 = vmatpush1.bf16.msra.mxu0 0
  %53 = vmatprep.subr.bf16.mxu0 0
  %54 = vmatpush1.bf16.msra.mxu0 0
  %55 = vmatprep.subr.bf16.mxu0 0
  %56 = vmatpush1.bf16.msra.mxu0 0
  %57 = vmatprep.subr.bf16.mxu0 0
  %58 = vmatpush1.bf16.msra.mxu0 0
  %59 = vmatprep.subr.bf16.mxu0 0
  %60 = vmatpush1.bf16.msra.mxu0 0
  %61 = vmatprep.subr.bf16.mxu0 0
  %62 = vmatpush1.bf16.msra.mxu0 0
  %63 = vmatprep.subr.bf16.mxu0 0
  %64 = vmatpush1.bf16.msra.mxu0 %v44
  %65 = vmatprep.subr.bf16.mxu0 0
  %66 = vmatpush1.bf16.msra.mxu0 %v43
  %67 = vmatprep.subr.bf16.mxu0 0
  %68 = vmatpush2.bf16.msra.mxu0 0
  %69 = vmatprep.subr.bf16.mxu0 0
  %70 = vmatpush2.bf16.msra.mxu0 0
  %71 = vmatprep.subr.bf16.mxu0 0
  %72 = vmatpush2.bf16.msra.mxu0 0
  %73 = vmatprep.subr.bf16.mxu0 0
  %74 = vmatpush2.bf16.msra.mxu0 0
  %75 = vmatprep.subr.bf16.mxu0 0
  %76 = vmatpush2.bf16.msra.mxu0 0
  %77 = vmatprep.subr.bf16.mxu0 0
  %78 = vmatpush2.bf16.msra.mxu0 0
  %79 = vmatprep.subr.bf16.mxu0 0
  %80 = vmatpush2.bf16.msra.mxu0 0
  %81 = vmatprep.subr.bf16.mxu0 0
  %82 = vmatpush2.bf16.msra.mxu0 0
  %83 = vmatprep.mubr.bf16.mxu0 0
  %84 = vmatmul.mubr.bf16.gmra.mxu0 %v49
  %v85 = vpop.f32.mrf.mxu0
  %v86 = vadd.f32 0.0, %v85
  %v87 = vpop.f32.mrf.mxu0
  %v88 = vpop.f32.mrf.mxu0
  %v89 = vadd.f32 0.0, %v88
  %v90 = vpop.f32.mrf.mxu0
  %91 = vdwg.mxu0
  %v92 = vadd.f32 %v22, %v86
  %v93 = vadd.f32 %v23, %v89
  %vm94 = vcmask 785408
  %95 = vst.msk [vmem:[#allocation2] sm:$0xff] %vm94, %v92
  %96 = vst.msk [vmem:[#allocation2 + $0x8] sm:$0xff] %vm94, %v93
  // Predicated region
  $region18: #{decoder_forward.22} parent=0 // pred_check
    %p97 = pneg %p15
  $region19: #{decoder_forward.22} parent=0 // pred_check_branch
    %99 = sbr.rel (%p97) target = $region21
  $region20: #{decoder_forward.22} parent=0 // pred_region
    %v100 = vld [vmem:[#allocation2] sm:$0xff]
    %v101 = vld [vmem:[#allocation2 + $0x8] sm:$0xff]
    %v102 = vld [vmem:[%s2] sm:$0x1]
    %v103 = vunpack.c.l.bf16 %v102
    %v104 = vlaneseq
    %v105 = vshrl.u32 %v104, 7
    %v106 = vsub.s32 0, %v105
    %v107 = vrot.slane %v103, %v106
    %v108 = vadd.f32 %v100, %v107
    %v109 = vadd.f32 %v101, %v107
    %v110 = vpack.c.bf16 %v109, %v108
    %v112 = vunpack.c.l.b16 %v110
    %v113 = vunpack.c.h.b16 %v110
    %v114 = vpack.c.b16 %v112, %v112
    %v115 = vpack.c.b16 %v113, %v113
    %vm118 = vcmask 781312
    %119 = vst.msk [vmem:[%s3] sm:$0xf] %vm118, %v114
    %120 = vst.msk [vmem:[%s3 + $0x4] sm:$0xf] %vm118, %v115
  $region21: #{decoder_forward.22} parent=0 // pred_fallthru
    _
  // Predicated region
  $region22: #{decoder_forward.22} parent=0 // pred_check
    _
  $region23: #{decoder_forward.22} parent=0 // pred_check_branch
    %122 = sbr.rel (0) target = $region25
  $region24: #{decoder_forward.22} parent=0 // pred_region
    _
  $region25: #{decoder_forward.22} parent=0 // pred_fallthru
    _
  // Predicated region
  $region26: #{decoder_forward.22} parent=0 // pred_check
    _
  $region27: #{decoder_forward.22} parent=0 // pred_check_branch
    %124 = sbr.rel (0) target = $region29
  $region28: #{decoder_forward.22} parent=0 // pred_region
    _
  $region29: #{decoder_forward.22} parent=0 // pred_fallthru
    _

// kernel: decoder_forward.25
$region0: #{decoder_forward.25}
  #allocation0 [shape = 'u32[]', space=smem, size = 0x4, offset = 0x4, fixed_abs, tag = 'smem constant byte address 0x4 - core index']
  #allocation1 [shape = 'u32[144,128]{1,0:T(1,128)}', space=vmem, size = 0x12000, scoped, tag = 'internal scratch']
  %s0 = inlined_call_operand.vmem [shape: bf16[16,32], index: 0, kind: input, shape index: {}]
  %s1 = inlined_call_operand.vmem [shape: bf16[16,32], index: 1, kind: input, shape index: {}]
  %s2 = inlined_call_operand.vmem [shape: f32[1,32], index: 2, kind: input, shape index: {}]
  %s3 = inlined_call_operand.vmem [shape: f32[1,32], index: 3, kind: input, shape index: {}]
  %s4 = inlined_call_operand.vmem [shape: bf16[16,32], index: 4, kind: output, shape index: {}]
  %s5 = sld [smem:[#allocation0]]
  $region26: #{decoder_forward.25} parent=0
    _
  %s7 = ssub.s32 1, %s5
  %s8 = scalar_select 0, %s7, %s5
  // Predicated region
  $region2: #{decoder_forward.25} parent=0 // pred_check
    _
  $region3: #{decoder_forward.25} parent=0 // pred_check_branch
    %10 = sbr.rel (0) target = $region5
  $region4: #{decoder_forward.25} parent=0 // pred_region
    _
  $region5: #{decoder_forward.25} parent=0 // pred_fallthru
    _
  // Predicated region
  $region6: #{decoder_forward.25} parent=0 // pred_check
    _
  $region7: #{decoder_forward.25} parent=0 // pred_check_branch
    %12 = sbr.rel (0) target = $region9
  $region8: #{decoder_forward.25} parent=0 // pred_region
    _
  $region9: #{decoder_forward.25} parent=0 // pred_fallthru
    _
  // Predicated region
  $region10: #{decoder_forward.25} parent=0 // pred_check
    _
  $region11: #{decoder_forward.25} parent=0 // pred_check_branch
    %14 = sbr.rel (0) target = $region13
  $region12: #{decoder_forward.25} parent=0 // pred_region
    _
  $region13: #{decoder_forward.25} parent=0 // pred_fallthru
    _
  // Predicated region
  $region14: #{decoder_forward.25} parent=0 // pred_check
    _
  $region15: #{decoder_forward.25} parent=0 // pred_check_branch
    %16 = sbr.rel (0) target = $region17
  $region16: #{decoder_forward.25} parent=0 // pred_region
    _
  $region17: #{decoder_forward.25} parent=0 // pred_fallthru
    _
  %v17 = vld [vmem:[%s0] sm:$0xf]
  %v18 = vld [vmem:[%s0 + $0x4] sm:$0xf]
  %v19 = vunpack.c.l.bf16 %v17
  %v20 = vunpack.c.l.bf16 %v18
  %v21 = vld [vmem:[%s1] sm:$0xf]
  %v22 = vld [vmem:[%s1 + $0x4] sm:$0xf]
  %v23 = vunpack.c.l.bf16 %v21
  %v24 = vunpack.c.l.bf16 %v22
  %v25 = vadd.f32 %v19, %v23
  %v26 = vadd.f32 %v20, %v24
  %vm27 = vcmask 261120
  %v28 = vsel %vm27, %v25, 0.0
  %29 = vadd.xlane.f32.xlu0 %v28
  %v30 = vpop.xlane.xlu0 %29
  %v31 = vsel %vm27, %v26, 0.0
  %32 = vadd.xlane.f32.xlu0 %v31
  %v33 = vpop.xlane.xlu0 %32
  %v34 = vrcp.pop 32.0
  %v35 = vmul.f32 %v30, %v34
  %v36 = vmul.f32 %v33, %v34
  %v37 = vsub.f32 %v25, %v35
  %v38 = vsub.f32 %v26, %v36
  %v39 = vmul.f32 %v37, %v37
  %v40 = vmul.f32 %v38, %v38
  %v41 = vsel %vm27, %v39, 0.0
  %42 = vadd.xlane.f32.xlu0 %v41
  %v43 = vpop.xlane.xlu0 %42
  %v44 = vsel %vm27, %v40, 0.0
  %45 = vadd.xlane.f32.xlu0 %v44
  %v46 = vpop.xlane.xlu0 %45
  %v47 = vmul.f32 %v43, %v34
  %v48 = vmul.f32 %v46, %v34
  %v49 = vadd.f32 %v47, 1e-05
  %v50 = vadd.f32 %v48, 1e-05
  %v51 = vrsqrt.pop %v49
  %v52 = vrsqrt.pop %v50
  %v53 = vmul.f32 %v37, %v51
  %v54 = vmul.f32 %v38, %v52
  %v55 = vld [vmem:[%s2] sm:$0x1]
  %v57 = vlaneseq
  %v58 = vshrl.u32 %v57, 7
  %v59 = vsub.s32 0, %v58
  %v60 = vrot.slane %v55, %v59
  %v62 = vmul.f32 %v53, %v60
  %v63 = vmul.f32 %v54, %v60
  %v64 = vld [vmem:[%s3] sm:$0x1]
  %v66 = vlaneseq
  %v67 = vshrl.u32 %v66, 7
  %v68 = vsub.s32 0, %v67
  %v69 = vrot.slane %v64, %v68
  %v71 = vadd.f32 %v62, %v69
  %v72 = vadd.f32 %v63, %v69
  %v73 = vpack.c.bf16 %v72, %v71
  %v75 = vunpack.c.l.b16 %v73
  %v76 = vunpack.c.h.b16 %v73
  %v77 = vpack.c.b16 %v75, %v75
  %v78 = vpack.c.b16 %v76, %v76
  %vm81 = vcmask 257024
  %82 = vst.msk [vmem:[%s4] sm:$0xf] %vm81, %v77
  %83 = vst.msk [vmem:[%s4 + $0x4] sm:$0xf] %vm81, %v78
  // Predicated region
  $region18: #{decoder_forward.25} parent=0 // pred_check
    _
  $region19: #{decoder_forward.25} parent=0 // pred_check_branch
    %85 = sbr.rel (0) target = $region21
  $region20: #{decoder_forward.25} parent=0 // pred_region
    _
  $region21: #{decoder_forward.25} parent=0 // pred_fallthru
    _
  // Predicated region
  $region22: #{decoder_forward.25} parent=0 // pred_check
    _
  $region23: #{decoder_forward.25} parent=0 // pred_check_branch
    %87 = sbr.rel (0) target = $region25
  $region24: #{decoder_forward.25} parent=0 // pred_region
    _
  $region25: #{decoder_forward.25} parent=0 // pred_fallthru
    _

// kernel: decoder_forward.23
$region0: #{decoder_forward.23}
  #allocation0 [shape = 'u32[]', space=smem, size = 0x4, offset = 0x4, fixed_abs, tag = 'smem constant byte address 0x4 - core index']
  #allocation1 [shape = 'u32[144,128]{1,0:T(1,128)}', space=vmem, size = 0x12000, scoped, tag = 'internal scratch']
  #allocation2 [shape = 'f32[4,8,1]{2,1,0:T(8,128)}', space=vmem, size = 0x4000, scoped, tag = 'scratch operand']
  #allocation3 [shape = 'f32[4,8,1]{2,1,0:T(8,128)}', space=vmem, size = 0x4000, scoped, tag = 'scratch operand']
  #allocation4 [shape = 'f32[4,8,8]{2,1,0:T(8,128)}', space=vmem, size = 0x4000, scoped, tag = 'scratch operand']
  %s0 = inlined_call_operand.vmem [shape: bf16[2,8,32], index: 0, kind: input, shape index: {}]
  %s1 = inlined_call_operand.vmem [shape: bf16[2,8,32], index: 1, kind: input, shape index: {}]
  %s2 = inlined_call_operand.vmem [shape: bf16[2,8,32], index: 2, kind: input, shape index: {}]
  %s3 = inlined_call_operand.vmem [shape: bf16[2,8,32], index: 3, kind: output, shape index: {}]
  %s4 = sld [smem:[#allocation0]]
  $region57: #{decoder_forward.23} parent=0
    _
  %s6 = ssub.s32 1, %s4
  %s7 = scalar_select 0, %s6, %s4
  loop: start=0, step=1, limit=4
  $region2: #{decoder_forward.23} parent=0 // loop_pre_header
    _
  $region3: #{decoder_forward.23} parent=0 // loop_header
    %s9 = sphi 0, %s13
    %p10 = scmp.ge.s32.totalorder %s9, 4
    %s16 = sphi 0, %s35
    %s17 = sphi 0, %s31
    %s18 = sphi 0, %s27
    %s19 = sphi 0, %s16
    %s20 = sphi 0, %s17
    %s21 = sphi 0, %s18
    %s22 = sphi 0, %s19
    %s23 = sphi 0, %s20
    %s24 = sphi 0, %s21
    %s40 = sphi 0, %s42
    %s43 = sphi 0, %s40
    %s44 = sphi 0, %s43
    %s60 = sphi 0, %s44
    %s68 = sphi 0, %s70
    %s71 = sphi 0, %s68
    %s72 = sphi 0, %s71
    %s88 = sphi 0, %s72
    %s96 = sphi 0, %s98
    %s99 = sphi 0, %s96
    %s100 = sphi 0, %s99
    %s116 = sphi 0, %s100
    %s124 = sphi 0, %s126
    %s127 = sphi 0, %s124
    %s128 = sphi 0, %s127
    %s144 = sphi 0, %s128
  $region4: #{decoder_forward.23} parent=0 // loop_header_branch
    %12 = sbr.rel (%p10) target = $region8
  $region5: #{decoder_forward.23} parent=0 // loop_body
    %s14 = ssub.s32 %s9, 1
    %s15 = ssub.s32 %s9, 2
    %s25 = sadd.s32 1, %s18
    %p26 = scmp.ge.s32.totalorder %s25, 1
    %s27 = scalar_select %p26, 0, %s25
    %s28 = sadd.s32 1, %s17
    %s29 = scalar_select %p26, %s28, %s17
    %p30 = scmp.ge.s32.totalorder %s29, 1
    %s31 = scalar_select %p30, 0, %s29
    %s32 = sadd.s32 1, %s16
    %s33 = scalar_select %p30, %s32, %s16
    %p34 = scmp.ge.s32.totalorder %s33, 2
    %s35 = scalar_select %p34, 0, %s33
    %s36 = ssub.s32 %s16, %s35
    %s37 = ssub.s32 %s17, %s31
    %s38 = sor.u32 %s36, %s37
    %p39 = scmp.eq.s32.totalorder %s38, 0
    %s41 = sadd.s32 %s40, 1
    %s42 = scalar_select %p39, %s40, %s41
    %p45 = pneg %p39
    %p46 = scmp.eq.s32.totalorder %s9, 1
    %p47 = por %p45, %p46
    %p48 = scmp.ne.s32.totalorder %s40, %s43
    %p49 = scmp.eq.s32.totalorder %s9, 0
    %p50 = por %p48, %p49
    %p51 = scmp.ne.s32.totalorder %s40, %s43
    %p52 = scmp.eq.s32.totalorder %s14, 1
    %p53 = por %p51, %p52
    %p54 = scmp.ne.s32.totalorder %s43, %s44
    %p55 = scmp.eq.s32.totalorder %s14, 0
    %p56 = por %p54, %p55
    %p57 = scmp.ne.s32.totalorder %s43, %s44
    %p58 = scmp.eq.s32.totalorder %s15, 1
    %p59 = por %p57, %p58
    %p61 = scmp.ne.s32.totalorder %s44, %s60
    %p62 = scmp.eq.s32.totalorder %s15, 0
    %p63 = por %p61, %p62
    %s64 = ssub.s32 %s16, %s35
    %s65 = ssub.s32 %s18, %s27
    %s66 = sor.u32 %s64, %s65
    %p67 = scmp.eq.s32.totalorder %s66, 0
    %s69 = sadd.s32 %s68, 1
    %s70 = scalar_select %p67, %s68, %s69
    %p73 = pneg %p67
    %p74 = scmp.eq.s32.totalorder %s9, 1
    %p75 = por %p73, %p74
    %p76 = scmp.ne.s32.totalorder %s68, %s71
    %p77 = scmp.eq.s32.totalorder %s9, 0
    %p78 = por %p76, %p77
    %p79 = scmp.ne.s32.totalorder %s68, %s71
    %p80 = scmp.eq.s32.totalorder %s14, 1
    %p81 = por %p79, %p80
    %p82 = scmp.ne.s32.totalorder %s71, %s72
    %p83 = scmp.eq.s32.totalorder %s14, 0
    %p84 = por %p82, %p83
    %p85 = scmp.ne.s32.totalorder %s71, %s72
    %p86 = scmp.eq.s32.totalorder %s15, 1
    %p87 = por %p85, %p86
    %p89 = scmp.ne.s32.totalorder %s72, %s88
    %p90 = scmp.eq.s32.totalorder %s15, 0
    %p91 = por %p89, %p90
    %s92 = ssub.s32 %s16, %s35
    %s93 = ssub.s32 %s18, %s27
    %s94 = sor.u32 %s92, %s93
    %p95 = scmp.eq.s32.totalorder %s94, 0
    %s97 = sadd.s32 %s96, 1
    %s98 = scalar_select %p95, %s96, %s97
    %p101 = pneg %p95
    %p102 = scmp.eq.s32.totalorder %s9, 1
    %p103 = por %p101, %p102
    %p104 = scmp.ne.s32.totalorder %s96, %s99
    %p105 = scmp.eq.s32.totalorder %s9, 0
    %p106 = por %p104, %p105
    %p107 = scmp.ne.s32.totalorder %s96, %s99
    %p108 = scmp.eq.s32.totalorder %s14, 1
    %p109 = por %p107, %p108
    %p110 = scmp.ne.s32.totalorder %s99, %s100
    %p111 = scmp.eq.s32.totalorder %s14, 0
    %p112 = por %p110, %p111
    %p113 = scmp.ne.s32.totalorder %s99, %s100
    %p114 = scmp.eq.s32.totalorder %s15, 1
    %p115 = por %p113, %p114
    %p117 = scmp.ne.s32.totalorder %s100, %s116
    %p118 = scmp.eq.s32.totalorder %s15, 0
    %p119 = por %p117, %p118
    %s120 = ssub.s32 %s16, %s35
    %s121 = ssub.s32 %s17, %s31
    %s122 = sor.u32 %s120, %s121
    %p123 = scmp.eq.s32.totalorder %s122, 0
    %s125 = sadd.s32 %s124, 1
    %s126 = scalar_select %p123, %s124, %s125
    %p129 = pneg %p123
    %p130 = scmp.eq.s32.totalorder %s9, 1
    %p131 = por %p129, %p130
    %p132 = scmp.ne.s32.totalorder %s124, %s127
    %p133 = scmp.eq.s32.totalorder %s9, 0
    %p134 = por %p132, %p133
    %p135 = scmp.ne.s32.totalorder %s124, %s127
    %p136 = scmp.eq.s32.totalorder %s14, 1
    %p137 = por %p135, %p136
    %p138 = scmp.ne.s32.totalorder %s127, %s128
    %p139 = scmp.eq.s32.totalorder %s14, 0
    %p140 = por %p138, %p139
    %p141 = scmp.ne.s32.totalorder %s127, %s128
    %p142 = scmp.eq.s32.totalorder %s15, 1
    %p143 = por %p141, %p142
    %p145 = scmp.ne.s32.totalorder %s128, %s144
    %p146 = scmp.eq.s32.totalorder %s15, 0
    %p147 = por %p145, %p146
    %p148 = scmp.le.s32.totalorder 1, %s9
    %p149 = scmp.lt.s32.totalorder %s9, 3
    %p150 = pnand %p148, %p149
    %p151 = pneg %p150
    // Predicated region
    $region9: #{decoder_forward.23} parent=5 // pred_check
      _
    $region10: #{decoder_forward.23} parent=5 // pred_check_branch
      %153 = sbr.rel (%p150) target = $region12
    $region11: #{decoder_forward.23} parent=5 // pred_region
      %s154 = ssub.s32 %s9, 1
    $region12: #{decoder_forward.23} parent=5 // pred_fallthru
      _
    %p155 = scmp.lt.s32.totalorder %s9, 2
    // Predicated region
    $region13: #{decoder_forward.23} parent=5 // pred_check
      %p156 = pneg %p155
    $region14: #{decoder_forward.23} parent=5 // pred_check_branch
      %158 = sbr.rel (%p156) target = $region16
    $region15: #{decoder_forward.23} parent=5 // pred_region
      // Predicated region
      $region17: #{decoder_forward.23} parent=15 // pred_check
        %p159 = pneg %p50
      $region18: #{decoder_forward.23} parent=15 // pred_check_branch
        %161 = sbr.rel (%p159) target = $region20
      $region19: #{decoder_forward.23} parent=15 // pred_region
        %p162 = scmp.lt.s32.totalorder %s16, 1
        %s163 = scalar_select %p162, %s16, 1
        %p164 = scmp.lt.s32.totalorder %s17, 0
        %s165 = scalar_select %p164, %s17, 0
        %s166 = sadd.s32 %s165, %s163
        %s167 = smul.addr %s166, 4
        %s168 = scalar_lea.vmem %s0, %s167
      $region20: #{decoder_forward.23} parent=15 // pred_fallthru
        _
      // Predicated region
      $region21: #{decoder_forward.23} parent=15 // pred_check
        %p169 = pneg %p78
      $region22: #{decoder_forward.23} parent=15 // pred_check_branch
        %171 = sbr.rel (%p169) target = $region24
      $region23: #{decoder_forward.23} parent=15 // pred_region
        %p172 = scmp.lt.s32.totalorder %s16, 1
        %s173 = scalar_select %p172, %s16, 1
        %p174 = scmp.lt.s32.totalorder %s18, 0
        %s175 = scalar_select %p174, %s18, 0
        %s176 = sadd.s32 %s175, %s173
        %s177 = smul.addr %s176, 4
        %s178 = scalar_lea.vmem %s1, %s177
      $region24: #{decoder_forward.23} parent=15 // pred_fallthru
        _
      // Predicated region
      $region25: #{decoder_forward.23} parent=15 // pred_check
        %p179 = pneg %p106
      $region26: #{decoder_forward.23} parent=15 // pred_check_branch
        %181 = sbr.rel (%p179) target = $region28
      $region27: #{decoder_forward.23} parent=15 // pred_region
        %p182 = scmp.lt.s32.totalorder %s16, 1
        %s183 = scalar_select %p182, %s16, 1
        %p184 = scmp.lt.s32.totalorder %s18, 0
        %s185 = scalar_select %p184, %s18, 0
        %s186 = sadd.s32 %s185, %s183
        %s187 = smul.addr %s186, 4
        %s188 = scalar_lea.vmem %s2, %s187
      $region28: #{decoder_forward.23} parent=15 // pred_fallthru
        _
    $region16: #{decoder_forward.23} parent=5 // pred_fallthru
      _
    %p189 = scmp.le.s32.totalorder 1, %s9
    %p190 = scmp.lt.s32.totalorder %s9, 3
    %p191 = pnand %p189, %p190
    %p192 = pneg %p191
    // Predicated region
    $region29: #{decoder_forward.23} parent=5 // pred_check
      _
    $region30: #{decoder_forward.23} parent=5 // pred_check_branch
      %194 = sbr.rel (%p191) target = $region32
    $region31: #{decoder_forward.23} parent=5 // pred_region
      %s195 = ssub.s32 %s9, 1
      %p196 = scmp.lt.s32.totalorder %s19, 1
      %s197 = scalar_select %p196, %s19, 1
      %p198 = scmp.lt.s32.totalorder %s20, 0
      %s199 = scalar_select %p198, %s20, 0
      %s200 = sadd.s32 %s199, %s197
      %s201 = smul.addr %s200, 4
      %s202 = scalar_lea.vmem %s0, %s201
      %p203 = pneg %p56
      %p204 = pneg %p53
      %p205 = scmp.lt.s32.totalorder %s19, 1
      %s206 = scalar_select %p205, %s19, 1
      %p207 = scmp.lt.s32.totalorder %s21, 0
      %s208 = scalar_select %p207, %s21, 0
      %s209 = sadd.s32 %s208, %s206
      %s210 = smul.addr %s209, 4
      %s211 = scalar_lea.vmem %s1, %s210
      %p212 = pneg %p84
      %p213 = pneg %p81
      %p214 = scmp.lt.s32.totalorder %s19, 1
      %s215 = scalar_select %p214, %s19, 1
      %p216 = scmp.lt.s32.totalorder %s21, 0
      %s217 = scalar_select %p216, %s21, 0
      %s218 = sadd.s32 %s217, %s215
      %s219 = smul.addr %s218, 4
      %s220 = scalar_lea.vmem %s2, %s219
      %p221 = pneg %p112
      %p222 = pneg %p109
      %p223 = pneg %p140
      %p224 = pneg %p137
      %p225 = scmp.lt.s32.totalorder %s19, 1
      %s226 = scalar_select %p225, %s19, 1
      %p227 = scmp.lt.s32.totalorder %s20, 0
      %s228 = scalar_select %p227, %s20, 0
      %s229 = sadd.s32 %s228, %s226
      %s230 = smul.addr %s229, 4
      %s231 = scalar_lea.vmem %s3, %s230
      %p232 = scmp.lt.s32.totalorder %s19, 1
      %s233 = scalar_select %p232, %s19, 1
      %p234 = scmp.lt.s32.totalorder %s20, 0
      %s235 = scalar_select %p234, %s20, 0
      %s236 = sadd.s32 %s235, %s233
      %s237 = smul.addr %s236, 4
      %s238 = scalar_lea.vmem %s0, %s237
      %p239 = scmp.lt.s32.totalorder %s19, 1
      %s240 = scalar_select %p239, %s19, 1
      %p241 = scmp.lt.s32.totalorder %s21, 0
      %s242 = scalar_select %p241, %s21, 0
      %s243 = sadd.s32 %s242, %s240
      %s244 = smul.addr %s243, 4
      %s245 = scalar_lea.vmem %s1, %s244
      %p246 = scmp.lt.s32.totalorder %s19, 1
      %s247 = scalar_select %p246, %s19, 1
      %p248 = scmp.lt.s32.totalorder %s21, 0
      %s249 = scalar_select %p248, %s21, 0
      %s250 = sadd.s32 %s249, %s247
      %s251 = smul.addr %s250, 4
      %s252 = scalar_lea.vmem %s2, %s251
      %p253 = scmp.lt.s32.totalorder %s19, 1
      %s254 = scalar_select %p253, %s19, 1
      %p255 = scmp.lt.s32.totalorder %s20, 0
      %s256 = scalar_select %p255, %s20, 0
      %s257 = sadd.s32 %s256, %s254
      %s258 = smul.addr %s257, 4
      %s259 = scalar_lea.vmem %s3, %s258
      %p261 = scmp.eq.s32.totalorder %s21, 0
      // Predicated region
      $region33: #{decoder_forward.23} parent=31 // pred_check
        %p262 = pneg %p261
      $region34: #{decoder_forward.23} parent=31 // pred_check_branch
        %264 = sbr.rel (%p262) target = $region36
      $region35: #{decoder_forward.23} parent=31 // pred_region
        %vm265 = vcmask 7168
        %266 = vst.msk [vmem:[#allocation2] sm:$0xff] %vm265, -1e+30
        %267 = vst.msk [vmem:[#allocation2 + $0x8] sm:$0xff] %vm265, -1e+30
        %268 = vst.msk [vmem:[#allocation2 + $0x10] sm:$0xff] %vm265, -1e+30
        %269 = vst.msk [vmem:[#allocation2 + $0x18] sm:$0xff] %vm265, -1e+30
        %270 = vst.msk [vmem:[#allocation3] sm:$0xff] %vm265, 0.0
        %271 = vst.msk [vmem:[#allocation3 + $0x8] sm:$0xff] %vm265, 0.0
        %272 = vst.msk [vmem:[#allocation3 + $0x10] sm:$0xff] %vm265, 0.0
        %273 = vst.msk [vmem:[#allocation3 + $0x18] sm:$0xff] %vm265, 0.0
        %vm274 = vcmask 64512
        %275 = vst.msk [vmem:[#allocation4] sm:$0xff] %vm274, 0.0
        %276 = vst.msk [vmem:[#allocation4 + $0x8] sm:$0xff] %vm274, 0.0
        %277 = vst.msk [vmem:[#allocation4 + $0x10] sm:$0xff] %vm274, 0.0
        %278 = vst.msk [vmem:[#allocation4 + $0x18] sm:$0xff] %vm274, 0.0
      $region36: #{decoder_forward.23} parent=31 // pred_fallthru
        _
      %s279 = smul.u32 %s21, 8
      %s280 = smul.u32 %s20, 8
      %s281 = sadd.s32 %s280, 7
      %p282 = scmp.le.s32.totalorder %s279, %s281
      // Predicated region
      $region37: #{decoder_forward.23} parent=31 // pred_check
        %p283 = pneg %p282
      $region38: #{decoder_forward.23} parent=31 // pred_check_branch
        %285 = sbr.rel (%p283) target = $region40
      $region39: #{decoder_forward.23} parent=31 // pred_region
        %v286 = vld [vmem:[%s238] sm:$0xf]
        %v287 = vld [vmem:[%s245] sm:$0xf]
        %v288 = vld [vmem:[%s252] sm:$0xf]
        %v289 = vlaneseq
        %v290 = vshrl.u32 %v289, 7
        %v291 = vstv %s280
        %v292 = vadd.s32 %v290, %v291
        %v293 = vlaneseq
        %v294 = vand.u32 %v293, 127
        %v295 = vstv %s279
        %v296 = vadd.s32 %v294, %v295
        %vm297 = vcmp.le.s32.totalorder %v296, %v292
        %vm298 = vcmask 64512
        %v300 = vsel %vm298, %v286, 0
        %v303 = vsel %vm298, %v287, 0
        %305 = vmatprep.subr.bf16.mxu0 0
        %306 = vmatpush1.bf16.xpose.msra.mxu0 0
        %307 = vmatprep.subr.bf16.mxu0 0
        %308 = vmatpush1.bf16.xpose.msra.mxu0 0
        %309 = vmatprep.subr.bf16.mxu0 0
        %310 = vmatpush1.bf16.xpose.msra.mxu0 0
        %311 = vmatprep.subr.bf16.mxu0 0
        %312 = vmatpush1.bf16.xpose.msra.mxu0 0
        %313 = vmatprep.subr.bf16.mxu0 0
        %314 = vmatpush1.bf16.xpose.msra.mxu0 0
        %315 = vmatprep.subr.bf16.mxu0 0
        %316 = vmatpush1.bf16.xpose.msra.mxu0 0
        %317 = vmatprep.subr.bf16.mxu0 0
        %318 = vmatpush1.bf16.xpose.msra.mxu0 0
        %319 = vmatprep.subr.bf16.mxu0 0
        %320 = vmatpush1.bf16.xpose.msra.mxu0 %v303
        %321 = vmatprep.subr.bf16.mxu0 0
        %322 = vmatpush2.bf16.xpose.msra.mxu0 0
        %323 = vmatprep.subr.bf16.mxu0 0
        %324 = vmatpush2.bf16.xpose.msra.mxu0 0
        %325 = vmatprep.subr.bf16.mxu0 0
        %326 = vmatpush2.bf16.xpose.msra.mxu0 0
        %327 = vmatprep.subr.bf16.mxu0 0
        %328 = vmatpush2.bf16.xpose.msra.mxu0 0
        %329 = vmatprep.subr.bf16.mxu0 0
        %330 = vmatpush2.bf16.xpose.msra.mxu0 0
        %331 = vmatprep.subr.bf16.mxu0 0
        %332 = vmatpush2.bf16.xpose.msra.mxu0 0
        %333 = vmatprep.subr.bf16.mxu0 0
        %334 = vmatpush2.bf16.xpose.msra.mxu0 0
        %335 = vmatprep.subr.bf16.mxu0 0
        %336 = vmatpush2.bf16.xpose.msra.mxu0 0
        %337 = vmatprep.mubr.bf16.mxu0 0
        %338 = vmatmul.mubr.bf16.gmra.mxu0 %v300
        %v339 = vpop.f32.mrf.mxu0
        %v340 = vadd.f32 0.0, %v339
        %v341 = vpop.f32.mrf.mxu0
        %v342 = vpop.f32.mrf.mxu0
        %v343 = vpop.f32.mrf.mxu0
        %344 = vdwg.mxu0
        %v345 = vsel %vm297, %v340, -1e+30
        %v346 = vld [vmem:[#allocation2] sm:$0xff]
        %v347 = vsel %vm298, %v345, -inf
        %348 = vmax.xlane.f32.xlu0 %v347
        %v349 = vpop.xlane.xlu0 %348
        %v350 = vmax.f32 %v346, %v349
        %v351 = vsub.f32 %v346, %v350
        %v352 = vmul.f32 %v351, 1.442695
        %v353 = vpow.pop %v352
        %355 = vset.pattern.permute.xlu0 0
        %356 = vperm.xlu0 %355, %v350
        %v357 = vpop.permute.xlu0 %356
        %v359 = vsub.f32 %v345, %v357
        %v360 = vmul.f32 %v359, 1.442695
        %v361 = vpow.pop %v360
        %v362 = vld [vmem:[#allocation3] sm:$0xff]
        %v363 = vmul.f32 %v353, %v362
        %v364 = vsel %vm298, %v361, 0.0
        %365 = vadd.xlane.f32.xlu0 %v364
        %v366 = vpop.xlane.xlu0 %365
        %v367 = vadd.f32 %v363, %v366
        %vm368 = vcmask 7168
        %369 = vst.msk [vmem:[#allocation3] sm:$0xff] %vm368, %v367
        %v370 = vld [vmem:[#allocation4] sm:$0xff]
        %372 = vset.pattern.permute.xlu0 0
        %373 = vperm.xlu0 %372, %v353
        %v374 = vpop.permute.xlu0 %373
        %v376 = vmul.f32 %v374, %v370
        %v377 = vpack.c.bf16 %v361, %v361
        %v379 = vsel %vm298, %v377, 0
        %vm381 = vcmask 1043456
        %v383 = vsel %vm381, %v288, 0
        %385 = vmatprep.subr.bf16.mxu0 0
        %386 = vmatpush1.bf16.msra.mxu0 0
        %387 = vmatprep.subr.bf16.mxu0 0
        %388 = vmatpush1.bf16.msra.mxu0 0
        %389 = vmatprep.subr.bf16.mxu0 0
        %390 = vmatpush1.bf16.msra.mxu0 0
        %391 = vmatprep.subr.bf16.mxu0 0
        %392 = vmatpush1.bf16.msra.mxu0 0
        %393 = vmatprep.subr.bf16.mxu0 0
        %394 = vmatpush1.bf16.msra.mxu0 0
        %395 = vmatprep.subr.bf16.mxu0 0
        %396 = vmatpush1.bf16.msra.mxu0 0
        %397 = vmatprep.subr.bf16.mxu0 0
        %398 = vmatpush1.bf16.msra.mxu0 0
        %399 = vmatprep.subr.bf16.mxu0 0
        %400 = vmatpush1.bf16.msra.mxu0 %v383
        %401 = vmatprep.subr.bf16.mxu0 0
        %402 = vmatpush2.bf16.msra.mxu0 0
        %403 = vmatprep.subr.bf16.mxu0 0
        %404 = vmatpush2.bf16.msra.mxu0 0
        %405 = vmatprep.subr.bf16.mxu0 0
        %406 = vmatpush2.bf16.msra.mxu0 0
        %407 = vmatprep.subr.bf16.mxu0 0
        %408 = vmatpush2.bf16.msra.mxu0 0
        %409 = vmatprep.subr.bf16.mxu0 0
        %410 = vmatpush2.bf16.msra.mxu0 0
        %411 = vmatprep.subr.bf16.mxu0 0
        %412 = vmatpush2.bf16.msra.mxu0 0
        %413 = vmatprep.subr.bf16.mxu0 0
        %414 = vmatpush2.bf16.msra.mxu0 0
        %415 = vmatprep.subr.bf16.mxu0 0
        %416 = vmatpush2.bf16.msra.mxu0 0
        %417 = vmatprep.mubr.bf16.mxu0 0
        %418 = vmatmul.mubr.bf16.gmra.mxu0 %v379
        %v419 = vpop.f32.mrf.mxu0
        %v420 = vadd.f32 0.0, %v419
        %v421 = vpop.f32.mrf.mxu0
        %v422 = vpop.f32.mrf.mxu0
        %v423 = vpop.f32.mrf.mxu0
        %424 = vdwg.mxu0
        %v425 = vadd.f32 %v376, %v420
        %426 = vst.msk [vmem:[#allocation4] sm:$0xff] %vm298, %v425
        %427 = vst.msk [vmem:[#allocation2] sm:$0xff] %vm368, %v350
        %v429 = vunpack.c.l.b16 %v286
        %v430 = vpack.c.b16 %v429, %v429
        %431 = vrot.lane.b32.xlu0 %v430, 120
        %v432 = vpop.permute.xlu0 %431
        %v434 = vunpack.c.l.b16 %v287
        %v435 = vpack.c.b16 %v434, %v434
        %436 = vrot.lane.b32.xlu0 %v435, 120
        %v437 = vpop.permute.xlu0 %436
        %v439 = vsel %vm298, %v432, 0
        %v442 = vsel %vm298, %v437, 0
        %444 = vmatprep.subr.bf16.mxu0 0
        %445 = vmatpush1.bf16.xpose.msra.mxu0 0
        %446 = vmatprep.subr.bf16.mxu0 0
        %447 = vmatpush1.bf16.xpose.msra.mxu0 0
        %448 = vmatprep.subr.bf16.mxu0 0
        %449 = vmatpush1.bf16.xpose.msra.mxu0 0
        %450 = vmatprep.subr.bf16.mxu0 0
        %451 = vmatpush1.bf16.xpose.msra.mxu0 0
        %452 = vmatprep.subr.bf16.mxu0 0
        %453 = vmatpush1.bf16.xpose.msra.mxu0 0
        %454 = vmatprep.subr.bf16.mxu0 0
        %455 = vmatpush1.bf16.xpose.msra.mxu0 0
        %456 = vmatprep.subr.bf16.mxu0 0
        %457 = vmatpush1.bf16.xpose.msra.mxu0 0
        %458 = vmatprep.subr.bf16.mxu0 0
        %459 = vmatpush1.bf16.xpose.msra.mxu0 %v442
        %460 = vmatprep.subr.bf16.mxu0 0
        %461 = vmatpush2.bf16.xpose.msra.mxu0 0
        %462 = vmatprep.subr.bf16.mxu0 0
        %463 = vmatpush2.bf16.xpose.msra.mxu0 0
        %464 = vmatprep.subr.bf16.mxu0 0
        %465 = vmatpush2.bf16.xpose.msra.mxu0 0
        %466 = vmatprep.subr.bf16.mxu0 0
        %467 = vmatpush2.bf16.xpose.msra.mxu0 0
        %468 = vmatprep.subr.bf16.mxu0 0
        %469 = vmatpush2.bf16.xpose.msra.mxu0 0
        %470 = vmatprep.subr.bf16.mxu0 0
        %471 = vmatpush2.bf16.xpose.msra.mxu0 0
        %472 = vmatprep.subr.bf16.mxu0 0
        %473 = vmatpush2.bf16.xpose.msra.mxu0 0
        %474 = vmatprep.subr.bf16.mxu0 0
        %475 = vmatpush2.bf16.xpose.msra.mxu0 0
        %476 = vmatprep.mubr.bf16.mxu0 0
        %477 = vmatmul.mubr.bf16.gmra.mxu0 %v439
        %v478 = vpop.f32.mrf.mxu0
        %v479 = vadd.f32 0.0, %v478
        %v480 = vpop.f32.mrf.mxu0
        %v481 = vpop.f32.mrf.mxu0
        %v482 = vpop.f32.mrf.mxu0
        %483 = vdwg.mxu0
        %v484 = vsel %vm297, %v479, -1e+30
        %s485 = scalar_lea.vmem [#allocation2], 8
        %v486 = vld [vmem:[%s485] sm:$0xff]
        %v487 = vsel %vm298, %v484, -inf
        %488 = vmax.xlane.f32.xlu0 %v487
        %v489 = vpop.xlane.xlu0 %488
        %v490 = vmax.f32 %v486, %v489
        %v491 = vsub.f32 %v486, %v490
        %v492 = vmul.f32 %v491, 1.442695
        %v493 = vpow.pop %v492
        %495 = vset.pattern.permute.xlu0 0
        %496 = vperm.xlu0 %495, %v490
        %v497 = vpop.permute.xlu0 %496
        %v499 = vsub.f32 %v484, %v497
        %v500 = vmul.f32 %v499, 1.442695
        %v501 = vpow.pop %v500
        %s502 = scalar_lea.vmem [#allocation3], 8
        %v503 = vld [vmem:[%s502] sm:$0xff]
        %v504 = vmul.f32 %v493, %v503
        %v505 = vsel %vm298, %v501, 0.0
        %506 = vadd.xlane.f32.xlu0 %v505
        %v507 = vpop.xlane.xlu0 %506
        %v508 = vadd.f32 %v504, %v507
        %509 = vst.msk [vmem:[%s502] sm:$0xff] %vm368, %v508
        %s510 = scalar_lea.vmem [#allocation4], 8
        %v511 = vld [vmem:[%s510] sm:$0xff]
        %513 = vset.pattern.permute.xlu0 0
        %514 = vperm.xlu0 %513, %v493
        %v515 = vpop.permute.xlu0 %514
        %v517 = vmul.f32 %v515, %v511
        %v518 = vpack.c.bf16 %v501, %v501
        %v520 = vunpack.c.l.b16 %v288
        %v521 = vpack.c.b16 %v520, %v520
        %522 = vrot.lane.b32.xlu0 %v521, 120
        %v523 = vpop.permute.xlu0 %522
        %v525 = vsel %vm298, %v518, 0
        %v528 = vsel %vm381, %v523, 0
        %530 = vmatprep.subr.bf16.mxu0 0
        %531 = vmatpush1.bf16.msra.mxu0 0
        %532 = vmatprep.subr.bf16.mxu0 0
        %533 = vmatpush1.bf16.msra.mxu0 0
        %534 = vmatprep.subr.bf16.mxu0 0
        %535 = vmatpush1.bf16.msra.mxu0 0
        %536 = vmatprep.subr.bf16.mxu0 0
        %537 = vmatpush1.bf16.msra.mxu0 0
        %538 = vmatprep.subr.bf16.mxu0 0
        %539 = vmatpush1.bf16.msra.mxu0 0
        %540 = vmatprep.subr.bf16.mxu0 0
        %541 = vmatpush1.bf16.msra.mxu0 0
        %542 = vmatprep.subr.bf16.mxu0 0
        %543 = vmatpush1.bf16.msra.mxu0 0
        %544 = vmatprep.subr.bf16.mxu0 0
        %545 = vmatpush1.bf16.msra.mxu0 %v528
        %546 = vmatprep.subr.bf16.mxu0 0
        %547 = vmatpush2.bf16.msra.mxu0 0
        %548 = vmatprep.subr.bf16.mxu0 0
        %549 = vmatpush2.bf16.msra.mxu0 0
        %550 = vmatprep.subr.bf16.mxu0 0
        %551 = vmatpush2.bf16.msra.mxu0 0
        %552 = vmatprep.subr.bf16.mxu0 0
        %553 = vmatpush2.bf16.msra.mxu0 0
        %554 = vmatprep.subr.bf16.mxu0 0
        %555 = vmatpush2.bf16.msra.mxu0 0
        %556 = vmatprep.subr.bf16.mxu0 0
        %557 = vmatpush2.bf16.msra.mxu0 0
        %558 = vmatprep.subr.bf16.mxu0 0
        %559 = vmatpush2.bf16.msra.mxu0 0
        %560 = vmatprep.subr.bf16.mxu0 0
        %561 = vmatpush2.bf16.msra.mxu0 0
        %562 = vmatprep.mubr.bf16.mxu0 0
        %563 = vmatmul.mubr.bf16.gmra.mxu0 %v525
        %v564 = vpop.f32.mrf.mxu0
        %v565 = vadd.f32 0.0, %v564
        %v566 = vpop.f32.mrf.mxu0
        %v567 = vpop.f32.mrf.mxu0
        %v568 = vpop.f32.mrf.mxu0
        %569 = vdwg.mxu0
        %v570 = vadd.f32 %v517, %v565
        %571 = vst.msk [vmem:[%s510] sm:$0xff] %vm298, %v570
        %572 = vst.msk [vmem:[%s485] sm:$0xff] %vm368, %v490
        %573 = vrot.lane.b32.xlu0 %v430, 112
        %v574 = vpop.permute.xlu0 %573
        %575 = vrot.lane.b32.xlu0 %v435, 112
        %v576 = vpop.permute.xlu0 %575
        %v578 = vsel %vm298, %v574, 0
        %v581 = vsel %vm298, %v576, 0
        %583 = vmatprep.subr.bf16.mxu0 0
        %584 = vmatpush1.bf16.xpose.msra.mxu0 0
        %585 = vmatprep.subr.bf16.mxu0 0
        %586 = vmatpush1.bf16.xpose.msra.mxu0 0
        %587 = vmatprep.subr.bf16.mxu0 0
        %588 = vmatpush1.bf16.xpose.msra.mxu0 0
        %589 = vmatprep.subr.bf16.mxu0 0
        %590 = vmatpush1.bf16.xpose.msra.mxu0 0
        %591 = vmatprep.subr.bf16.mxu0 0
        %592 = vmatpush1.bf16.xpose.msra.mxu0 0
        %593 = vmatprep.subr.bf16.mxu0 0
        %594 = vmatpush1.bf16.xpose.msra.mxu0 0
        %595 = vmatprep.subr.bf16.mxu0 0
        %596 = vmatpush1.bf16.xpose.msra.mxu0 0
        %597 = vmatprep.subr.bf16.mxu0 0
        %598 = vmatpush1.bf16.xpose.msra.mxu0 %v581
        %599 = vmatprep.subr.bf16.mxu0 0
        %600 = vmatpush2.bf16.xpose.msra.mxu0 0
        %601 = vmatprep.subr.bf16.mxu0 0
        %602 = vmatpush2.bf16.xpose.msra.mxu0 0
        %603 = vmatprep.subr.bf16.mxu0 0
        %604 = vmatpush2.bf16.xpose.msra.mxu0 0
        %605 = vmatprep.subr.bf16.mxu0 0
        %606 = vmatpush2.bf16.xpose.msra.mxu0 0
        %607 = vmatprep.subr.bf16.mxu0 0
        %608 = vmatpush2.bf16.xpose.msra.mxu0 0
        %609 = vmatprep.subr.bf16.mxu0 0
        %610 = vmatpush2.bf16.xpose.msra.mxu0 0
        %611 = vmatprep.subr.bf16.mxu0 0
        %612 = vmatpush2.bf16.xpose.msra.mxu0 0
        %613 = vmatprep.subr.bf16.mxu0 0
        %614 = vmatpush2.bf16.xpose.msra.mxu0 0
        %615 = vmatprep.mubr.bf16.mxu0 0
        %616 = vmatmul.mubr.bf16.gmra.mxu0 %v578
        %v617 = vpop.f32.mrf.mxu0
        %v618 = vadd.f32 0.0, %v617
        %v619 = vpop.f32.mrf.mxu0
        %v620 = vpop.f32.mrf.mxu0
        %v621 = vpop.f32.mrf.mxu0
        %622 = vdwg.mxu0
        %v623 = vsel %vm297, %v618, -1e+30
        %s624 = scalar_lea.vmem [#allocation2], 16
        %v625 = vld [vmem:[%s624] sm:$0xff]
        %v626 = vsel %vm298, %v623, -inf
        %627 = vmax.xlane.f32.xlu0 %v626
        %v628 = vpop.xlane.xlu0 %627
        %v629 = vmax.f32 %v625, %v628
        %v630 = vsub.f32 %v625, %v629
        %v631 = vmul.f32 %v630, 1.442695
        %v632 = vpow.pop %v631
        %634 = vset.pattern.permute.xlu0 0
        %635 = vperm.xlu0 %634, %v629
        %v636 = vpop.permute.xlu0 %635
        %v638 = vsub.f32 %v623, %v636
        %v639 = vmul.f32 %v638, 1.442695
        %v640 = vpow.pop %v639
        %s641 = scalar_lea.vmem [#allocation3], 16
        %v642 = vld [vmem:[%s641] sm:$0xff]
        %v643 = vmul.f32 %v632, %v642
        %v644 = vsel %vm298, %v640, 0.0
        %645 = vadd.xlane.f32.xlu0 %v644
        %v646 = vpop.xlane.xlu0 %645
        %v647 = vadd.f32 %v643, %v646
        %648 = vst.msk [vmem:[%s641] sm:$0xff] %vm368, %v647
        %s649 = scalar_lea.vmem [#allocation4], 16
        %v650 = vld [vmem:[%s649] sm:$0xff]
        %652 = vset.pattern.permute.xlu0 0
        %653 = vperm.xlu0 %652, %v632
        %v654 = vpop.permute.xlu0 %653
        %v656 = vmul.f32 %v654, %v650
        %v657 = vpack.c.bf16 %v640, %v640
        %658 = vrot.lane.b32.xlu0 %v521, 112
        %v659 = vpop.permute.xlu0 %658
        %v661 = vsel %vm298, %v657, 0
        %v664 = vsel %vm381, %v659, 0
        %666 = vmatprep.subr.bf16.mxu0 0
        %667 = vmatpush1.bf16.msra.mxu0 0
        %668 = vmatprep.subr.bf16.mxu0 0
        %669 = vmatpush1.bf16.msra.mxu0 0
        %670 = vmatprep.subr.bf16.mxu0 0
        %671 = vmatpush1.bf16.msra.mxu0 0
        %672 = vmatprep.subr.bf16.mxu0 0
        %673 = vmatpush1.bf16.msra.mxu0 0
        %674 = vmatprep.subr.bf16.mxu0 0
        %675 = vmatpush1.bf16.msra.mxu0 0
        %676 = vmatprep.subr.bf16.mxu0 0
        %677 = vmatpush1.bf16.msra.mxu0 0
        %678 = vmatprep.subr.bf16.mxu0 0
        %679 = vmatpush1.bf16.msra.mxu0 0
        %680 = vmatprep.subr.bf16.mxu0 0
        %681 = vmatpush1.bf16.msra.mxu0 %v664
        %682 = vmatprep.subr.bf16.mxu0 0
        %683 = vmatpush2.bf16.msra.mxu0 0
        %684 = vmatprep.subr.bf16.mxu0 0
        %685 = vmatpush2.bf16.msra.mxu0 0
        %686 = vmatprep.subr.bf16.mxu0 0
        %687 = vmatpush2.bf16.msra.mxu0 0
        %688 = vmatprep.subr.bf16.mxu0 0
        %689 = vmatpush2.bf16.msra.mxu0 0
        %690 = vmatprep.subr.bf16.mxu0 0
        %691 = vmatpush2.bf16.msra.mxu0 0
        %692 = vmatprep.subr.bf16.mxu0 0
        %693 = vmatpush2.bf16.msra.mxu0 0
        %694 = vmatprep.subr.bf16.mxu0 0
        %695 = vmatpush2.bf16.msra.mxu0 0
        %696 = vmatprep.subr.bf16.mxu0 0
        %697 = vmatpush2.bf16.msra.mxu0 0
        %698 = vmatprep.mubr.bf16.mxu0 0
        %699 = vmatmul.mubr.bf16.gmra.mxu0 %v661
        %v700 = vpop.f32.mrf.mxu0
        %v701 = vadd.f32 0.0, %v700
        %v702 = vpop.f32.mrf.mxu0
        %v703 = vpop.f32.mrf.mxu0
        %v704 = vpop.f32.mrf.mxu0
        %705 = vdwg.mxu0
        %v706 = vadd.f32 %v656, %v701
        %707 = vst.msk [vmem:[%s649] sm:$0xff] %vm298, %v706
        %708 = vst.msk [vmem:[%s624] sm:$0xff] %vm368, %v629
        %709 = vrot.lane.b32.xlu0 %v430, 104
        %v710 = vpop.permute.xlu0 %709
        %711 = vrot.lane.b32.xlu0 %v435, 104
        %v712 = vpop.permute.xlu0 %711
        %v714 = vsel %vm298, %v710, 0
        %v717 = vsel %vm298, %v712, 0
        %719 = vmatprep.subr.bf16.mxu0 0
        %720 = vmatpush1.bf16.xpose.msra.mxu0 0
        %721 = vmatprep.subr.bf16.mxu0 0
        %722 = vmatpush1.bf16.xpose.msra.mxu0 0
        %723 = vmatprep.subr.bf16.mxu0 0
        %724 = vmatpush1.bf16.xpose.msra.mxu0 0
        %725 = vmatprep.subr.bf16.mxu0 0
        %726 = vmatpush1.bf16.xpose.msra.mxu0 0
        %727 = vmatprep.subr.bf16.mxu0 0
        %728 = vmatpush1.bf16.xpose.msra.mxu0 0
        %729 = vmatprep.subr.bf16.mxu0 0
        %730 = vmatpush1.bf16.xpose.msra.mxu0 0
        %731 = vmatprep.subr.bf16.mxu0 0
        %732 = vmatpush1.bf16.xpose.msra.mxu0 0
        %733 = vmatprep.subr.bf16.mxu0 0
        %734 = vmatpush1.bf16.xpose.msra.mxu0 %v717
        %735 = vmatprep.subr.bf16.mxu0 0
        %736 = vmatpush2.bf16.xpose.msra.mxu0 0
        %737 = vmatprep.subr.bf16.mxu0 0
        %738 = vmatpush2.bf16.xpose.msra.mxu0 0
        %739 = vmatprep.subr.bf16.mxu0 0
        %740 = vmatpush2.bf16.xpose.msra.mxu0 0
        %741 = vmatprep.subr.bf16.mxu0 0
        %742 = vmatpush2.bf16.xpose.msra.mxu0 0
        %743 = vmatprep.subr.bf16.mxu0 0
        %744 = vmatpush2.bf16.xpose.msra.mxu0 0
        %745 = vmatprep.subr.bf16.mxu0 0
        %746 = vmatpush2.bf16.xpose.msra.mxu0 0
        %747 = vmatprep.subr.bf16.mxu0 0
        %748 = vmatpush2.bf16.xpose.msra.mxu0 0
        %749 = vmatprep.subr.bf16.mxu0 0
        %750 = vmatpush2.bf16.xpose.msra.mxu0 0
        %751 = vmatprep.mubr.bf16.mxu0 0
        %752 = vmatmul.mubr.bf16.gmra.mxu0 %v714
        %v753 = vpop.f32.mrf.mxu0
        %v754 = vadd.f32 0.0, %v753
        %v755 = vpop.f32.mrf.mxu0
        %v756 = vpop.f32.mrf.mxu0
        %v757 = vpop.f32.mrf.mxu0
        %758 = vdwg.mxu0
        %v759 = vsel %vm297, %v754, -1e+30
        %s760 = scalar_lea.vmem [#allocation2], 24
        %v761 = vld [vmem:[%s760] sm:$0xff]
        %v762 = vsel %vm298, %v759, -inf
        %763 = vmax.xlane.f32.xlu0 %v762
        %v764 = vpop.xlane.xlu0 %763
        %v765 = vmax.f32 %v761, %v764
        %v766 = vsub.f32 %v761, %v765
        %v767 = vmul.f32 %v766, 1.442695
        %v768 = vpow.pop %v767
        %770 = vset.pattern.permute.xlu0 0
        %771 = vperm.xlu0 %770, %v765
        %v772 = vpop.permute.xlu0 %771
        %v774 = vsub.f32 %v759, %v772
        %v775 = vmul.f32 %v774, 1.442695
        %v776 = vpow.pop %v775
        %s777 = scalar_lea.vmem [#allocation3], 24
        %v778 = vld [vmem:[%s777] sm:$0xff]
        %v779 = vmul.f32 %v768, %v778
        %v780 = vsel %vm298, %v776, 0.0
        %781 = vadd.xlane.f32.xlu0 %v780
        %v782 = vpop.xlane.xlu0 %781
        %v783 = vadd.f32 %v779, %v782
        %784 = vst.msk [vmem:[%s777] sm:$0xff] %vm368, %v783
        %s785 = scalar_lea.vmem [#allocation4], 24
        %v786 = vld [vmem:[%s785] sm:$0xff]
        %788 = vset.pattern.permute.xlu0 0
        %789 = vperm.xlu0 %788, %v768
        %v790 = vpop.permute.xlu0 %789
        %v792 = vmul.f32 %v790, %v786
        %v793 = vpack.c.bf16 %v776, %v776
        %794 = vrot.lane.b32.xlu0 %v521, 104
        %v795 = vpop.permute.xlu0 %794
        %v797 = vsel %vm298, %v793, 0
        %v800 = vsel %vm381, %v795, 0
        %802 = vmatprep.subr.bf16.mxu0 0
        %803 = vmatpush1.bf16.msra.mxu0 0
        %804 = vmatprep.subr.bf16.mxu0 0
        %805 = vmatpush1.bf16.msra.mxu0 0
        %806 = vmatprep.subr.bf16.mxu0 0
        %807 = vmatpush1.bf16.msra.mxu0 0
        %808 = vmatprep.subr.bf16.mxu0 0
        %809 = vmatpush1.bf16.msra.mxu0 0
        %810 = vmatprep.subr.bf16.mxu0 0
        %811 = vmatpush1.bf16.msra.mxu0 0
        %812 = vmatprep.subr.bf16.mxu0 0
        %813 = vmatpush1.bf16.msra.mxu0 0
        %814 = vmatprep.subr.bf16.mxu0 0
        %815 = vmatpush1.bf16.msra.mxu0 0
        %816 = vmatprep.subr.bf16.mxu0 0
        %817 = vmatpush1.bf16.msra.mxu0 %v800
        %818 = vmatprep.subr.bf16.mxu0 0
        %819 = vmatpush2.bf16.msra.mxu0 0
        %820 = vmatprep.subr.bf16.mxu0 0
        %821 = vmatpush2.bf16.msra.mxu0 0
        %822 = vmatprep.subr.bf16.mxu0 0
        %823 = vmatpush2.bf16.msra.mxu0 0
        %824 = vmatprep.subr.bf16.mxu0 0
        %825 = vmatpush2.bf16.msra.mxu0 0
        %826 = vmatprep.subr.bf16.mxu0 0
        %827 = vmatpush2.bf16.msra.mxu0 0
        %828 = vmatprep.subr.bf16.mxu0 0
        %829 = vmatpush2.bf16.msra.mxu0 0
        %830 = vmatprep.subr.bf16.mxu0 0
        %831 = vmatpush2.bf16.msra.mxu0 0
        %832 = vmatprep.subr.bf16.mxu0 0
        %833 = vmatpush2.bf16.msra.mxu0 0
        %834 = vmatprep.mubr.bf16.mxu0 0
        %835 = vmatmul.mubr.bf16.gmra.mxu0 %v797
        %v836 = vpop.f32.mrf.mxu0
        %v837 = vadd.f32 0.0, %v836
        %v838 = vpop.f32.mrf.mxu0
        %v839 = vpop.f32.mrf.mxu0
        %v840 = vpop.f32.mrf.mxu0
        %841 = vdwg.mxu0
        %v842 = vadd.f32 %v792, %v837
        %843 = vst.msk [vmem:[%s785] sm:$0xff] %vm298, %v842
        %844 = vst.msk [vmem:[%s760] sm:$0xff] %vm368, %v765
      $region40: #{decoder_forward.23} parent=31 // pred_fallthru
        _
      // Predicated region
      $region41: #{decoder_forward.23} parent=31 // pred_check
        %p845 = pneg %p261
      $region42: #{decoder_forward.23} parent=31 // pred_check_branch
        %847 = sbr.rel (%p845) target = $region44
      $region43: #{decoder_forward.23} parent=31 // pred_region
        %v848 = vld [vmem:[#allocation3] sm:$0xff]
        %v849 = vrcp.pop %v848
        %v850 = vld [vmem:[#allocation4] sm:$0xff]
        %852 = vset.pattern.permute.xlu0 0
        %853 = vperm.xlu0 %852, %v849
        %v854 = vpop.permute.xlu0 %853
        %v856 = vmul.f32 %v850, %v854
        %s857 = scalar_lea.vmem [#allocation3], 8
        %v858 = vld [vmem:[%s857] sm:$0xff]
        %v859 = vrcp.pop %v858
        %s860 = scalar_lea.vmem [#allocation4], 8
        %v861 = vld [vmem:[%s860] sm:$0xff]
        %863 = vset.pattern.permute.xlu0 0
        %864 = vperm.xlu0 %863, %v859
        %v865 = vpop.permute.xlu0 %864
        %v867 = vmul.f32 %v861, %v865
        %s868 = scalar_lea.vmem [#allocation3], 16
        %v869 = vld [vmem:[%s868] sm:$0xff]
        %v870 = vrcp.pop %v869
        %s871 = scalar_lea.vmem [#allocation4], 16
        %v872 = vld [vmem:[%s871] sm:$0xff]
        %874 = vset.pattern.permute.xlu0 0
        %875 = vperm.xlu0 %874, %v870
        %v876 = vpop.permute.xlu0 %875
        %v878 = vmul.f32 %v872, %v876
        %s879 = scalar_lea.vmem [#allocation3], 24
        %v880 = vld [vmem:[%s879] sm:$0xff]
        %v881 = vrcp.pop %v880
        %s882 = scalar_lea.vmem [#allocation4], 24
        %v883 = vld [vmem:[%s882] sm:$0xff]
        %885 = vset.pattern.permute.xlu0 0
        %886 = vperm.xlu0 %885, %v881
        %v887 = vpop.permute.xlu0 %886
        %v889 = vmul.f32 %v883, %v887
        %891 = vrot.lane.b32.xlu0 %v867, 8
        %v892 = vpop.permute.xlu0 %891
        %895 = vrot.lane.b32.xlu0 %v878, 16
        %v896 = vpop.permute.xlu0 %895
        %899 = vrot.lane.b32.xlu0 %v889, 24
        %v900 = vpop.permute.xlu0 %899
        %vm902 = vcmask 64512
        %v903 = vsel %vm902, %v856, %v892
        %vm904 = vcmask 130048
        %v905 = vsel %vm904, %v903, %v896
        %vm906 = vcmask 195584
        %v907 = vsel %vm906, %v905, %v900
        %v908 = vpack.c.bf16 %v907, %v907
        %vm909 = vcmask 257024
        %910 = vst.msk [vmem:[%s259] sm:$0xf] %vm909, %v908
      $region44: #{decoder_forward.23} parent=31 // pred_fallthru
        _
      %p911 = scmp.lt.s32.totalorder %s19, 1
      %s912 = scalar_select %p911, %s19, 1
      %p913 = scmp.lt.s32.totalorder %s20, 0
      %s914 = scalar_select %p913, %s20, 0
      %s915 = sadd.s32 %s914, %s912
      %s916 = smul.addr %s915, 4
      %s917 = scalar_lea.vmem %s3, %s916
      // Predicated region
      $region45: #{decoder_forward.23} parent=31 // pred_check
        %p918 = pneg %p137
      $region46: #{decoder_forward.23} parent=31 // pred_check_branch
        %920 = sbr.rel (%p918) target = $region48
      $region47: #{decoder_forward.23} parent=31 // pred_region
        _
      $region48: #{decoder_forward.23} parent=31 // pred_fallthru
        _
    $region32: #{decoder_forward.23} parent=5 // pred_fallthru
      _
    %p921 = scmp.le.s32.totalorder 2, %s9
    // Predicated region
    $region49: #{decoder_forward.23} parent=5 // pred_check
      %p922 = pneg %p921
    $region50: #{decoder_forward.23} parent=5 // pred_check_branch
      %924 = sbr.rel (%p922) target = $region52
    $region51: #{decoder_forward.23} parent=5 // pred_region
      %s925 = ssub.s32 %s9, 2
      // Predicated region
      $region53: #{decoder_forward.23} parent=51 // pred_check
        %p926 = pneg %p143
      $region54: #{decoder_forward.23} parent=51 // pred_check_branch
        %928 = sbr.rel (%p926) target = $region56
      $region55: #{decoder_forward.23} parent=51 // pred_region
        %p929 = scmp.lt.s32.totalorder %s22, 1
        %s930 = scalar_select %p929, %s22, 1
        %p931 = scmp.lt.s32.totalorder %s23, 0
        %s932 = scalar_select %p931, %s23, 0
        %s933 = sadd.s32 %s932, %s930
        %s934 = smul.addr %s933, 4
        %s935 = scalar_lea.vmem %s3, %s934
      $region56: #{decoder_forward.23} parent=51 // pred_fallthru
        _
    $region52: #{decoder_forward.23} parent=5 // pred_fallthru
      _
  $region6: #{decoder_forward.23} parent=0 // loop_footer
    %s13 = sadd.s32 1, %s9
  $region7: #{decoder_forward.23} parent=0 // loop_footer_branch
    %8 = sbr.rel target = $region3
  $region8: #{decoder_forward.23} parent=0 // loop_exit
    _

// kernel: decoder_forward.24
$region0: #{decoder_forward.24}
  #allocation0 [shape = 'u32[]', space=smem, size = 0x4, offset = 0x4, fixed_abs, tag = 'smem constant byte address 0x4 - core index']
  #allocation1 [shape = 'u32[144,128]{1,0:T(1,128)}', space=vmem, size = 0x12000, scoped, tag = 'internal scratch']
  #allocation2 [shape = 'f32[16,32]{1,0:T(8,128)}', space=vmem, size = 0x2000, scoped, tag = 'scratch operand']
  %s0 = inlined_call_operand.vmem [shape: bf16[16,32], index: 0, kind: input, shape index: {}]
  %s1 = inlined_call_operand.vmem [shape: bf16[32,32], index: 1, kind: input, shape index: {}]
  %s2 = inlined_call_operand.vmem [shape: bf16[1,32], index: 2, kind: input, shape index: {}]
  %s3 = inlined_call_operand.vmem [shape: bf16[16,32], index: 3, kind: output, shape index: {}]
  %s4 = sld [smem:[#allocation0]]
  $region30: #{decoder_forward.24} parent=0
    _
  %s6 = ssub.s32 1, %s4
  %s7 = scalar_select 0, %s6, %s4
  // Predicated region
  $region2: #{decoder_forward.24} parent=0 // pred_check
    _
  $region3: #{decoder_forward.24} parent=0 // pred_check_branch
    %9 = sbr.rel (0) target = $region5
  $region4: #{decoder_forward.24} parent=0 // pred_region
    _
  $region5: #{decoder_forward.24} parent=0 // pred_fallthru
    _
  // Predicated region
  $region6: #{decoder_forward.24} parent=0 // pred_check
    _
  $region7: #{decoder_forward.24} parent=0 // pred_check_branch
    %11 = sbr.rel (0) target = $region9
  $region8: #{decoder_forward.24} parent=0 // pred_region
    _
  $region9: #{decoder_forward.24} parent=0 // pred_fallthru
    _
  // Predicated region
  $region10: #{decoder_forward.24} parent=0 // pred_check
    _
  $region11: #{decoder_forward.24} parent=0 // pred_check_branch
    %13 = sbr.rel (0) target = $region13
  $region12: #{decoder_forward.24} parent=0 // pred_region
    _
  $region13: #{decoder_forward.24} parent=0 // pred_fallthru
    _
  %p15 = scmp.eq.s32.totalorder 0, 0
  // Predicated region
  $region14: #{decoder_forward.24} parent=0 // pred_check
    %p16 = pneg %p15
  $region15: #{decoder_forward.24} parent=0 // pred_check_branch
    %18 = sbr.rel (%p16) target = $region17
  $region16: #{decoder_forward.24} parent=0 // pred_region
    %vm19 = vcmask 261120
    %20 = vst.msk [vmem:[#allocation2] sm:$0xff] %vm19, 0.0
    %21 = vst.msk [vmem:[#allocation2 + $0x8] sm:$0xff] %vm19, 0.0
  $region17: #{decoder_forward.24} parent=0 // pred_fallthru
    _
  %v22 = vld [vmem:[#allocation2] sm:$0xff]
  %v23 = vld [vmem:[#allocation2 + $0x8] sm:$0xff]
  %v24 = vld [vmem:[%s0] sm:$0xf]
  %v25 = vld [vmem:[%s0 + $0x4] sm:$0xf]
  %v26 = vld [vmem:[%s1] sm:$0xf]
  %v27 = vld [vmem:[%s1 + $0x4] sm:$0xf]
  %v28 = vld [vmem:[%s1 + $0x8] sm:$0xf]
  %v29 = vld [vmem:[%s1 + $0xc] sm:$0xf]
  %v32 = vunpack.c.l.b16 %v24
  %v33 = vunpack.c.l.b16 %v25
  %v34 = vpack.c.b16 %v33, %v32
  %v39 = vunpack.c.l.b16 %v26
  %v40 = vunpack.c.l.b16 %v27
  %v41 = vunpack.c.l.b16 %v28
  %v42 = vunpack.c.l.b16 %v29
  %v43 = vpack.c.b16 %v40, %v39
  %v44 = vpack.c.b16 %v42, %v41
  %vm47 = vcmask 261120
  %v49 = vsel %vm47, %v34, 0
  %51 = vmatprep.subr.bf16.mxu0 0
  %52 = vmatpush1.bf16.msra.mxu0 0
  %53 = vmatprep.subr.bf16.mxu0 0
  %54 = vmatpush1.bf16.msra.mxu0 0
  %55 = vmatprep.subr.bf16.mxu0 0
  %56 = vmatpush1.bf16.msra.mxu0 0
  %57 = vmatprep.subr.bf16.mxu0 0
  %58 = vmatpush1.bf16.msra.mxu0 0
  %59 = vmatprep.subr.bf16.mxu0 0
  %60 = vmatpush1.bf16.msra.mxu0 0
  %61 = vmatprep.subr.bf16.mxu0 0
  %62 = vmatpush1.bf16.msra.mxu0 0
  %63 = vmatprep.subr.bf16.mxu0 0
  %64 = vmatpush1.bf16.msra.mxu0 %v44
  %65 = vmatprep.subr.bf16.mxu0 0
  %66 = vmatpush1.bf16.msra.mxu0 %v43
  %67 = vmatprep.subr.bf16.mxu0 0
  %68 = vmatpush2.bf16.msra.mxu0 0
  %69 = vmatprep.subr.bf16.mxu0 0
  %70 = vmatpush2.bf16.msra.mxu0 0
  %71 = vmatprep.subr.bf16.mxu0 0
  %72 = vmatpush2.bf16.msra.mxu0 0
  %73 = vmatprep.subr.bf16.mxu0 0
  %74 = vmatpush2.bf16.msra.mxu0 0
  %75 = vmatprep.subr.bf16.mxu0 0
  %76 = vmatpush2.bf16.msra.mxu0 0
  %77 = vmatprep.subr.bf16.mxu0 0
  %78 = vmatpush2.bf16.msra.mxu0 0
  %79 = vmatprep.subr.bf16.mxu0 0
  %80 = vmatpush2.bf16.msra.mxu0 0
  %81 = vmatprep.subr.bf16.mxu0 0
  %82 = vmatpush2.bf16.msra.mxu0 0
  %83 = vmatprep.mubr.bf16.mxu0 0
  %84 = vmatmul.mubr.bf16.gmra.mxu0 %v49
  %v85 = vpop.f32.mrf.mxu0
  %v86 = vadd.f32 0.0, %v85
  %v87 = vpop.f32.mrf.mxu0
  %v88 = vpop.f32.mrf.mxu0
  %v89 = vadd.f32 0.0, %v88
  %v90 = vpop.f32.mrf.mxu0
  %91 = vdwg.mxu0
  %v92 = vadd.f32 %v22, %v86
  %v93 = vadd.f32 %v23, %v89
  %94 = vst.msk [vmem:[#allocation2] sm:$0xff] %vm47, %v92
  %95 = vst.msk [vmem:[#allocation2 + $0x8] sm:$0xff] %vm47, %v93
  // Predicated region
  $region18: #{decoder_forward.24} parent=0 // pred_check
    %p96 = pneg %p15
  $region19: #{decoder_forward.24} parent=0 // pred_check_branch
    %98 = sbr.rel (%p96) target = $region21
  $region20: #{decoder_forward.24} parent=0 // pred_region
    %v99 = vld [vmem:[#allocation2] sm:$0xff]
    %v100 = vld [vmem:[#allocation2 + $0x8] sm:$0xff]
    %v101 = vld [vmem:[%s2] sm:$0x1]
    %v102 = vunpack.c.l.bf16 %v101
    %v103 = vlaneseq
    %v104 = vshrl.u32 %v103, 7
    %v105 = vsub.s32 0, %v104
    %v106 = vrot.slane %v102, %v105
    %v107 = vadd.f32 %v99, %v106
    %v108 = vadd.f32 %v100, %v106
    %v109 = vpack.c.bf16 %v108, %v107
    %v111 = vunpack.c.l.b16 %v109
    %v112 = vunpack.c.h.b16 %v109
    %v113 = vpack.c.b16 %v111, %v111
    %v114 = vpack.c.b16 %v112, %v112
    %vm117 = vcmask 257024
    %118 = vst.msk [vmem:[%s3] sm:$0xf] %vm117, %v113
    %119 = vst.msk [vmem:[%s3 + $0x4] sm:$0xf] %vm117, %v114
  $region21: #{decoder_forward.24} parent=0 // pred_fallthru
    _
  // Predicated region
  $region22: #{decoder_forward.24} parent=0 // pred_check
    _
  $region23: #{decoder_forward.24} parent=0 // pred_check_branch
    %121 = sbr.rel (0) target = $region25
  $region24: #{decoder_forward.24} parent=0 // pred_region
    _
  $region25: #{decoder_forward.24} parent=0 // pred_fallthru
    _
  // Predicated region
  $region26: #{decoder_forward.24} parent=0 // pred_check
    _
  $region27: #{decoder_forward.24} parent=0 // pred_check_branch
    %123 = sbr.rel (0) target = $region29
  $region28: #{decoder_forward.24} parent=0 // pred_region
    _
  $region29: #{decoder_forward.24} parent=0 // pred_fallthru
    _

// kernel: decoder_forward.31
$region0: #{decoder_forward.31}
  #allocation0 [shape = 'u32[]', space=smem, size = 0x4, offset = 0x4, fixed_abs, tag = 'smem constant byte address 0x4 - core index']
  #allocation1 [shape = 'u32[144,128]{1,0:T(1,128)}', space=vmem, size = 0x12000, scoped, tag = 'internal scratch']
  %s0 = inlined_call_operand.vmem [shape: bf16[16,32], index: 0, kind: input, shape index: {}]
  %s1 = inlined_call_operand.vmem [shape: bf16[32,64], index: 1, kind: input, shape index: {}]
  %s2 = inlined_call_operand.vmem [shape: bf16[1,64], index: 2, kind: input, shape index: {}]
  %s3 = inlined_call_operand.vmem [shape: bf16[64,32], index: 3, kind: input, shape index: {}]
  %s4 = inlined_call_operand.vmem [shape: bf16[1,32], index: 4, kind: input, shape index: {}]
  %s5 = inlined_call_operand.vmem [shape: bf16[16,32], index: 5, kind: output, shape index: {}]
  %s6 = sld [smem:[#allocation0]]
  $region30: #{decoder_forward.31} parent=0
    _
  %s8 = ssub.s32 1, %s6
  %s9 = scalar_select 0, %s8, %s6
  // Predicated region
  $region2: #{decoder_forward.31} parent=0 // pred_check
    _
  $region3: #{decoder_forward.31} parent=0 // pred_check_branch
    %11 = sbr.rel (0) target = $region5
  $region4: #{decoder_forward.31} parent=0 // pred_region
    _
  $region5: #{decoder_forward.31} parent=0 // pred_fallthru
    _
  // Predicated region
  $region6: #{decoder_forward.31} parent=0 // pred_check
    _
  $region7: #{decoder_forward.31} parent=0 // pred_check_branch
    %13 = sbr.rel (0) target = $region9
  $region8: #{decoder_forward.31} parent=0 // pred_region
    _
  $region9: #{decoder_forward.31} parent=0 // pred_fallthru
    _
  // Predicated region
  $region10: #{decoder_forward.31} parent=0 // pred_check
    _
  $region11: #{decoder_forward.31} parent=0 // pred_check_branch
    %15 = sbr.rel (0) target = $region13
  $region12: #{decoder_forward.31} parent=0 // pred_region
    _
  $region13: #{decoder_forward.31} parent=0 // pred_fallthru
    _
  // Predicated region
  $region14: #{decoder_forward.31} parent=0 // pred_check
    _
  $region15: #{decoder_forward.31} parent=0 // pred_check_branch
    %17 = sbr.rel (0) target = $region17
  $region16: #{decoder_forward.31} parent=0 // pred_region
    _
  $region17: #{decoder_forward.31} parent=0 // pred_fallthru
    _
  // Predicated region
  $region18: #{decoder_forward.31} parent=0 // pred_check
    _
  $region19: #{decoder_forward.31} parent=0 // pred_check_branch
    %19 = sbr.rel (0) target = $region21
  $region20: #{decoder_forward.31} parent=0 // pred_region
    _
  $region21: #{decoder_forward.31} parent=0 // pred_fallthru
    _
  %v21 = vld [vmem:[%s0] sm:$0xf]
  %v22 = vld [vmem:[%s0 + $0x4] sm:$0xf]
  %v23 = vld [vmem:[%s1] sm:$0xf]
  %v24 = vld [vmem:[%s1 + $0x4] sm:$0xf]
  %v25 = vld [vmem:[%s1 + $0x8] sm:$0xf]
  %v26 = vld [vmem:[%s1 + $0xc] sm:$0xf]
  %v27 = vld [vmem:[%s2] sm:$0x1]
  %v28 = vunpack.c.l.bf16 %v27
  %v29 = vlaneseq
  %v30 = vshrl.u32 %v29, 7
  %v31 = vsub.s32 0, %v30
  %v32 = vrot.slane %v28, %v31
  %v35 = vunpack.c.l.b16 %v21
  %v36 = vunpack.c.l.b16 %v22
  %v37 = vpack.c.b16 %v36, %v35
  %v42 = vunpack.c.l.b16 %v23
  %v43 = vunpack.c.l.b16 %v24
  %v44 = vunpack.c.l.b16 %v25
  %v45 = vunpack.c.l.b16 %v26
  %v46 = vpack.c.b16 %v43, %v42
  %v47 = vpack.c.b16 %v45, %v44
  %vm50 = vcmask 261120
  %v52 = vsel %vm50, %v37, 0
  %54 = vmatprep.subr.bf16.mxu0 0
  %55 = vmatpush1.bf16.msra.mxu0 0
  %56 = vmatprep.subr.bf16.mxu0 0
  %57 = vmatpush1.bf16.msra.mxu0 0
  %58 = vmatprep.subr.bf16.mxu0 0
  %59 = vmatpush1.bf16.msra.mxu0 0
  %60 = vmatprep.subr.bf16.mxu0 0
  %61 = vmatpush1.bf16.msra.mxu0 0
  %62 = vmatprep.subr.bf16.mxu0 0
  %63 = vmatpush1.bf16.msra.mxu0 0
  %64 = vmatprep.subr.bf16.mxu0 0
  %65 = vmatpush1.bf16.msra.mxu0 0
  %66 = vmatprep.subr.bf16.mxu0 0
  %67 = vmatpush1.bf16.msra.mxu0 %v47
  %68 = vmatprep.subr.bf16.mxu0 0
  %69 = vmatpush1.bf16.msra.mxu0 %v46
  %70 = vmatprep.subr.bf16.mxu0 0
  %71 = vmatpush2.bf16.msra.mxu0 0
  %72 = vmatprep.subr.bf16.mxu0 0
  %73 = vmatpush2.bf16.msra.mxu0 0
  %74 = vmatprep.subr.bf16.mxu0 0
  %75 = vmatpush2.bf16.msra.mxu0 0
  %76 = vmatprep.subr.bf16.mxu0 0
  %77 = vmatpush2.bf16.msra.mxu0 0
  %78 = vmatprep.subr.bf16.mxu0 0
  %79 = vmatpush2.bf16.msra.mxu0 0
  %80 = vmatprep.subr.bf16.mxu0 0
  %81 = vmatpush2.bf16.msra.mxu0 0
  %82 = vmatprep.subr.bf16.mxu0 0
  %83 = vmatpush2.bf16.msra.mxu0 0
  %84 = vmatprep.subr.bf16.mxu0 0
  %85 = vmatpush2.bf16.msra.mxu0 0
  %86 = vmatprep.mubr.bf16.mxu0 0
  %87 = vmatmul.mubr.bf16.gmra.mxu0 %v52
  %v88 = vpop.f32.mrf.mxu0
  %v89 = vadd.f32 %v32, %v88
  %v90 = vpop.f32.mrf.mxu0
  %v91 = vpop.f32.mrf.mxu0
  %v92 = vadd.f32 %v32, %v91
  %v93 = vpop.f32.mrf.mxu0
  %94 = vdwg.mxu0
  %v95 = vmax.f32 %v89, 0.0
  %v96 = vmax.f32 %v92, 0.0
  %v97 = vpack.c.bf16 %v96, %v95
  %v98 = vld [vmem:[%s3] sm:$0xf]
  %v99 = vld [vmem:[%s3 + $0x4] sm:$0xf]
  %v100 = vld [vmem:[%s3 + $0x8] sm:$0xf]
  %v101 = vld [vmem:[%s3 + $0xc] sm:$0xf]
  %v102 = vld [vmem:[%s3 + $0x10] sm:$0xf]
  %v103 = vld [vmem:[%s3 + $0x14] sm:$0xf]
  %v104 = vld [vmem:[%s3 + $0x18] sm:$0xf]
  %v105 = vld [vmem:[%s3 + $0x1c] sm:$0xf]
  %v106 = vld [vmem:[%s4] sm:$0x1]
  %v107 = vunpack.c.l.bf16 %v106
  %v108 = vlaneseq
  %v109 = vshrl.u32 %v108, 7
  %v110 = vsub.s32 0, %v109
  %v111 = vrot.slane %v107, %v110
  %v120 = vunpack.c.l.b16 %v98
  %v121 = vunpack.c.l.b16 %v99
  %v122 = vunpack.c.l.b16 %v100
  %v123 = vunpack.c.l.b16 %v101
  %v124 = vunpack.c.l.b16 %v102
  %v125 = vunpack.c.l.b16 %v103
  %v126 = vunpack.c.l.b16 %v104
  %v127 = vunpack.c.l.b16 %v105
  %v128 = vpack.c.b16 %v121, %v120
  %v129 = vpack.c.b16 %v123, %v122
  %v130 = vpack.c.b16 %v125, %v124
  %v131 = vpack.c.b16 %v127, %v126
  %vm136 = vcmask 523264
  %v138 = vsel %vm136, %v97, 0
  %140 = vmatprep.subr.bf16.mxu0 0
  %141 = vmatpush1.bf16.msra.mxu0 0
  %142 = vmatprep.subr.bf16.mxu0 0
  %143 = vmatpush1.bf16.msra.mxu0 0
  %144 = vmatprep.subr.bf16.mxu0 0
  %145 = vmatpush1.bf16.msra.mxu0 0
  %146 = vmatprep.subr.bf16.mxu0 0
  %147 = vmatpush1.bf16.msra.mxu0 0
  %148 = vmatprep.subr.bf16.mxu0 0
  %149 = vmatpush1.bf16.msra.mxu0 %v131
  %150 = vmatprep.subr.bf16.mxu0 0
  %151 = vmatpush1.bf16.msra.mxu0 %v130
  %152 = vmatprep.subr.bf16.mxu0 0
  %153 = vmatpush1.bf16.msra.mxu0 %v129
  %154 = vmatprep.subr.bf16.mxu0 0
  %155 = vmatpush1.bf16.msra.mxu0 %v128
  %156 = vmatprep.subr.bf16.mxu0 0
  %157 = vmatpush2.bf16.msra.mxu0 0
  %158 = vmatprep.subr.bf16.mxu0 0
  %159 = vmatpush2.bf16.msra.mxu0 0
  %160 = vmatprep.subr.bf16.mxu0 0
  %161 = vmatpush2.bf16.msra.mxu0 0
  %162 = vmatprep.subr.bf16.mxu0 0
  %163 = vmatpush2.bf16.msra.mxu0 0
  %164 = vmatprep.subr.bf16.mxu0 0
  %165 = vmatpush2.bf16.msra.mxu0 0
  %166 = vmatprep.subr.bf16.mxu0 0
  %167 = vmatpush2.bf16.msra.mxu0 0
  %168 = vmatprep.subr.bf16.mxu0 0
  %169 = vmatpush2.bf16.msra.mxu0 0
  %170 = vmatprep.subr.bf16.mxu0 0
  %171 = vmatpush2.bf16.msra.mxu0 0
  %172 = vmatprep.mubr.bf16.mxu0 0
  %173 = vmatmul.mubr.bf16.gmra.mxu0 %v138
  %v174 = vpop.f32.mrf.mxu0
  %v175 = vadd.f32 %v111, %v174
  %v176 = vpop.f32.mrf.mxu0
  %v177 = vpop.f32.mrf.mxu0
  %v178 = vadd.f32 %v111, %v177
  %v179 = vpop.f32.mrf.mxu0
  %180 = vdwg.mxu0
  %v181 = vpack.c.bf16 %v178, %v175
  %v183 = vunpack.c.l.b16 %v181
  %v184 = vunpack.c.h.b16 %v181
  %v185 = vpack.c.b16 %v183, %v183
  %v186 = vpack.c.b16 %v184, %v184
  %vm189 = vcmask 257024
  %190 = vst.msk [vmem:[%s5] sm:$0xf] %vm189, %v185
  %191 = vst.msk [vmem:[%s5 + $0x4] sm:$0xf] %vm189, %v186
  // Predicated region
  $region22: #{decoder_forward.31} parent=0 // pred_check
    _
  $region23: #{decoder_forward.31} parent=0 // pred_check_branch
    %193 = sbr.rel (0) target = $region25
  $region24: #{decoder_forward.31} parent=0 // pred_region
    _
  $region25: #{decoder_forward.31} parent=0 // pred_fallthru
    _
  // Predicated region
  $region26: #{decoder_forward.31} parent=0 // pred_check
    _
  $region27: #{decoder_forward.31} parent=0 // pred_check_branch
    %195 = sbr.rel (0) target = $region29
  $region28: #{decoder_forward.31} parent=0 // pred_region
    _
  $region29: #{decoder_forward.31} parent=0 // pred_fallthru
    _

// kernel: decoder_forward.27
$region0: #{decoder_forward.27}
  #allocation0 [shape = 'u32[]', space=smem, size = 0x4, offset = 0x4, fixed_abs, tag = 'smem constant byte address 0x4 - core index']
  #allocation1 [shape = 'u32[144,128]{1,0:T(1,128)}', space=vmem, size = 0x12000, scoped, tag = 'internal scratch']
  #allocation2 [shape = 'f32[16,64]{1,0:T(8,128)}', space=vmem, size = 0x2000, scoped, tag = 'scratch operand']
  %s0 = inlined_call_operand.vmem [shape: bf16[16,32], index: 0, kind: input, shape index: {}]
  %s1 = inlined_call_operand.vmem [shape: bf16[32,64], index: 1, kind: input, shape index: {}]
  %s2 = inlined_call_operand.vmem [shape: bf16[1,64], index: 2, kind: input, shape index: {}]
  %s3 = inlined_call_operand.vmem [shape: bf16[16,64], index: 3, kind: output, shape index: {}]
  %s4 = sld [smem:[#allocation0]]
  $region30: #{decoder_forward.27} parent=0
    _
  %s6 = ssub.s32 1, %s4
  %s7 = scalar_select 0, %s6, %s4
  // Predicated region
  $region2: #{decoder_forward.27} parent=0 // pred_check
    _
  $region3: #{decoder_forward.27} parent=0 // pred_check_branch
    %9 = sbr.rel (0) target = $region5
  $region4: #{decoder_forward.27} parent=0 // pred_region
    _
  $region5: #{decoder_forward.27} parent=0 // pred_fallthru
    _
  // Predicated region
  $region6: #{decoder_forward.27} parent=0 // pred_check
    _
  $region7: #{decoder_forward.27} parent=0 // pred_check_branch
    %11 = sbr.rel (0) target = $region9
  $region8: #{decoder_forward.27} parent=0 // pred_region
    _
  $region9: #{decoder_forward.27} parent=0 // pred_fallthru
    _
  // Predicated region
  $region10: #{decoder_forward.27} parent=0 // pred_check
    _
  $region11: #{decoder_forward.27} parent=0 // pred_check_branch
    %13 = sbr.rel (0) target = $region13
  $region12: #{decoder_forward.27} parent=0 // pred_region
    _
  $region13: #{decoder_forward.27} parent=0 // pred_fallthru
    _
  %p15 = scmp.eq.s32.totalorder 0, 0
  // Predicated region
  $region14: #{decoder_forward.27} parent=0 // pred_check
    %p16 = pneg %p15
  $region15: #{decoder_forward.27} parent=0 // pred_check_branch
    %18 = sbr.rel (%p16) target = $region17
  $region16: #{decoder_forward.27} parent=0 // pred_region
    %vm19 = vcmask 523264
    %20 = vst.msk [vmem:[#allocation2] sm:$0xff] %vm19, 0.0
    %21 = vst.msk [vmem:[#allocation2 + $0x8] sm:$0xff] %vm19, 0.0
  $region17: #{decoder_forward.27} parent=0 // pred_fallthru
    _
  %v22 = vld [vmem:[#allocation2] sm:$0xff]
  %v23 = vld [vmem:[#allocation2 + $0x8] sm:$0xff]
  %v24 = vld [vmem:[%s0] sm:$0xf]
  %v25 = vld [vmem:[%s0 + $0x4] sm:$0xf]
  %v26 = vld [vmem:[%s1] sm:$0xf]
  %v27 = vld [vmem:[%s1 + $0x4] sm:$0xf]
  %v28 = vld [vmem:[%s1 + $0x8] sm:$0xf]
  %v29 = vld [vmem:[%s1 + $0xc] sm:$0xf]
  %v32 = vunpack.c.l.b16 %v24
  %v33 = vunpack.c.l.b16 %v25
  %v34 = vpack.c.b16 %v33, %v32
  %v39 = vunpack.c.l.b16 %v26
  %v40 = vunpack.c.l.b16 %v27
  %v41 = vunpack.c.l.b16 %v28
  %v42 = vunpack.c.l.b16 %v29
  %v43 = vpack.c.b16 %v40, %v39
  %v44 = vpack.c.b16 %v42, %v41
  %vm47 = vcmask 261120
  %v49 = vsel %vm47, %v34, 0
  %51 = vmatprep.subr.bf16.mxu0 0
  %52 = vmatpush1.bf16.msra.mxu0 0
  %53 = vmatprep.subr.bf16.mxu0 0
  %54 = vmatpush1.bf16.msra.mxu0 0
  %55 = vmatprep.subr.bf16.mxu0 0
  %56 = vmatpush1.bf16.msra.mxu0 0
  %57 = vmatprep.subr.bf16.mxu0 0
  %58 = vmatpush1.bf16.msra.mxu0 0
  %59 = vmatprep.subr.bf16.mxu0 0
  %60 = vmatpush1.bf16.msra.mxu0 0
  %61 = vmatprep.subr.bf16.mxu0 0
  %62 = vmatpush1.bf16.msra.mxu0 0
  %63 = vmatprep.subr.bf16.mxu0 0
  %64 = vmatpush1.bf16.msra.mxu0 %v44
  %65 = vmatprep.subr.bf16.mxu0 0
  %66 = vmatpush1.bf16.msra.mxu0 %v43
  %67 = vmatprep.subr.bf16.mxu0 0
  %68 = vmatpush2.bf16.msra.mxu0 0
  %69 = vmatprep.subr.bf16.mxu0 0
  %70 = vmatpush2.bf16.msra.mxu0 0
  %71 = vmatprep.subr.bf16.mxu0 0
  %72 = vmatpush2.bf16.msra.mxu0 0
  %73 = vmatprep.subr.bf16.mxu0 0
  %74 = vmatpush2.bf16.msra.mxu0 0
  %75 = vmatprep.subr.bf16.mxu0 0
  %76 = vmatpush2.bf16.msra.mxu0 0
  %77 = vmatprep.subr.bf16.mxu0 0
  %78 = vmatpush2.bf16.msra.mxu0 0
  %79 = vmatprep.subr.bf16.mxu0 0
  %80 = vmatpush2.bf16.msra.mxu0 0
  %81 = vmatprep.subr.bf16.mxu0 0
  %82 = vmatpush2.bf16.msra.mxu0 0
  %83 = vmatprep.mubr.bf16.mxu0 0
  %84 = vmatmul.mubr.bf16.gmra.mxu0 %v49
  %v85 = vpop.f32.mrf.mxu0
  %v86 = vadd.f32 0.0, %v85
  %v87 = vpop.f32.mrf.mxu0
  %v88 = vpop.f32.mrf.mxu0
  %v89 = vadd.f32 0.0, %v88
  %v90 = vpop.f32.mrf.mxu0
  %91 = vdwg.mxu0
  %v92 = vadd.f32 %v22, %v86
  %v93 = vadd.f32 %v23, %v89
  %vm94 = vcmask 523264
  %95 = vst.msk [vmem:[#allocation2] sm:$0xff] %vm94, %v92
  %96 = vst.msk [vmem:[#allocation2 + $0x8] sm:$0xff] %vm94, %v93
  // Predicated region
  $region18: #{decoder_forward.27} parent=0 // pred_check
    %p97 = pneg %p15
  $region19: #{decoder_forward.27} parent=0 // pred_check_branch
    %99 = sbr.rel (%p97) target = $region21
  $region20: #{decoder_forward.27} parent=0 // pred_region
    %v100 = vld [vmem:[#allocation2] sm:$0xff]
    %v101 = vld [vmem:[#allocation2 + $0x8] sm:$0xff]
    %v102 = vld [vmem:[%s2] sm:$0x1]
    %v103 = vunpack.c.l.bf16 %v102
    %v104 = vlaneseq
    %v105 = vshrl.u32 %v104, 7
    %v106 = vsub.s32 0, %v105
    %v107 = vrot.slane %v103, %v106
    %v108 = vadd.f32 %v100, %v107
    %v109 = vadd.f32 %v101, %v107
    %v110 = vpack.c.bf16 %v109, %v108
    %v112 = vunpack.c.l.b16 %v110
    %v113 = vunpack.c.h.b16 %v110
    %v114 = vpack.c.b16 %v112, %v112
    %v115 = vpack.c.b16 %v113, %v113
    %vm118 = vcmask 519168
    %119 = vst.msk [vmem:[%s3] sm:$0xf] %vm118, %v114
    %120 = vst.msk [vmem:[%s3 + $0x4] sm:$0xf] %vm118, %v115
  $region21: #{decoder_forward.27} parent=0 // pred_fallthru
    _
  // Predicated region
  $region22: #{decoder_forward.27} parent=0 // pred_check
    _
  $region23: #{decoder_forward.27} parent=0 // pred_check_branch
    %122 = sbr.rel (0) target = $region25
  $region24: #{decoder_forward.27} parent=0 // pred_region
    _
  $region25: #{decoder_forward.27} parent=0 // pred_fallthru
    _
  // Predicated region
  $region26: #{decoder_forward.27} parent=0 // pred_check
    _
  $region27: #{decoder_forward.27} parent=0 // pred_check_branch
    %124 = sbr.rel (0) target = $region29
  $region28: #{decoder_forward.27} parent=0 // pred_region
    _
  $region29: #{decoder_forward.27} parent=0 // pred_fallthru
    _

// kernel: decoder_forward.28
$region0: #{decoder_forward.28}
  #allocation0 [shape = 'u32[]', space=smem, size = 0x4, offset = 0x4, fixed_abs, tag = 'smem constant byte address 0x4 - core index']
  #allocation1 [shape = 'u32[144,128]{1,0:T(1,128)}', space=vmem, size = 0x12000, scoped, tag = 'internal scratch']
  #allocation2 [shape = 'f32[4,8,1]{2,1,0:T(8,128)}', space=vmem, size = 0x4000, scoped, tag = 'scratch operand']
  #allocation3 [shape = 'f32[4,8,1]{2,1,0:T(8,128)}', space=vmem, size = 0x4000, scoped, tag = 'scratch operand']
  #allocation4 [shape = 'f32[4,8,8]{2,1,0:T(8,128)}', space=vmem, size = 0x4000, scoped, tag = 'scratch operand']
  %s0 = inlined_call_operand.vmem [shape: bf16[2,8,32], index: 0, kind: input, shape index: {}]
  %s1 = inlined_call_operand.vmem [shape: bf16[2,8,32], index: 1, kind: input, shape index: {}]
  %s2 = inlined_call_operand.vmem [shape: bf16[2,8,32], index: 2, kind: input, shape index: {}]
  %s3 = inlined_call_operand.vmem [shape: bf16[2,8,32], index: 3, kind: output, shape index: {}]
  %s4 = sld [smem:[#allocation0]]
  $region53: #{decoder_forward.28} parent=0
    _
  %s6 = ssub.s32 1, %s4
  %s7 = scalar_select 0, %s6, %s4
  loop: start=0, step=1, limit=4
  $region2: #{decoder_forward.28} parent=0 // loop_pre_header
    _
  $region3: #{decoder_forward.28} parent=0 // loop_header
    %s9 = sphi 0, %s13
    %p10 = scmp.ge.s32.totalorder %s9, 4
    %s16 = sphi 0, %s35
    %s17 = sphi 0, %s31
    %s18 = sphi 0, %s27
    %s19 = sphi 0, %s16
    %s20 = sphi 0, %s17
    %s21 = sphi 0, %s18
    %s22 = sphi 0, %s19
    %s23 = sphi 0, %s20
    %s24 = sphi 0, %s21
    %s40 = sphi 0, %s42
    %s43 = sphi 0, %s40
    %s44 = sphi 0, %s43
    %s60 = sphi 0, %s44
    %s68 = sphi 0, %s70
    %s71 = sphi 0, %s68
    %s72 = sphi 0, %s71
    %s88 = sphi 0, %s72
    %s96 = sphi 0, %s98
    %s99 = sphi 0, %s96
    %s100 = sphi 0, %s99
    %s116 = sphi 0, %s100
    %s124 = sphi 0, %s126
    %s127 = sphi 0, %s124
    %s128 = sphi 0, %s127
    %s144 = sphi 0, %s128
  $region4: #{decoder_forward.28} parent=0 // loop_header_branch
    %12 = sbr.rel (%p10) target = $region8
  $region5: #{decoder_forward.28} parent=0 // loop_body
    %s14 = ssub.s32 %s9, 1
    %s15 = ssub.s32 %s9, 2
    %s25 = sadd.s32 1, %s18
    %p26 = scmp.ge.s32.totalorder %s25, 1
    %s27 = scalar_select %p26, 0, %s25
    %s28 = sadd.s32 1, %s17
    %s29 = scalar_select %p26, %s28, %s17
    %p30 = scmp.ge.s32.totalorder %s29, 1
    %s31 = scalar_select %p30, 0, %s29
    %s32 = sadd.s32 1, %s16
    %s33 = scalar_select %p30, %s32, %s16
    %p34 = scmp.ge.s32.totalorder %s33, 2
    %s35 = scalar_select %p34, 0, %s33
    %s36 = ssub.s32 %s16, %s35
    %s37 = ssub.s32 %s17, %s31
    %s38 = sor.u32 %s36, %s37
    %p39 = scmp.eq.s32.totalorder %s38, 0
    %s41 = sadd.s32 %s40, 1
    %s42 = scalar_select %p39, %s40, %s41
    %p45 = pneg %p39
    %p46 = scmp.eq.s32.totalorder %s9, 1
    %p47 = por %p45, %p46
    %p48 = scmp.ne.s32.totalorder %s40, %s43
    %p49 = scmp.eq.s32.totalorder %s9, 0
    %p50 = por %p48, %p49
    %p51 = scmp.ne.s32.totalorder %s40, %s43
    %p52 = scmp.eq.s32.totalorder %s14, 1
    %p53 = por %p51, %p52
    %p54 = scmp.ne.s32.totalorder %s43, %s44
    %p55 = scmp.eq.s32.totalorder %s14, 0
    %p56 = por %p54, %p55
    %p57 = scmp.ne.s32.totalorder %s43, %s44
    %p58 = scmp.eq.s32.totalorder %s15, 1
    %p59 = por %p57, %p58
    %p61 = scmp.ne.s32.totalorder %s44, %s60
    %p62 = scmp.eq.s32.totalorder %s15, 0
    %p63 = por %p61, %p62
    %s64 = ssub.s32 %s16, %s35
    %s65 = ssub.s32 %s18, %s27
    %s66 = sor.u32 %s64, %s65
    %p67 = scmp.eq.s32.totalorder %s66, 0
    %s69 = sadd.s32 %s68, 1
    %s70 = scalar_select %p67, %s68, %s69
    %p73 = pneg %p67
    %p74 = scmp.eq.s32.totalorder %s9, 1
    %p75 = por %p73, %p74
    %p76 = scmp.ne.s32.totalorder %s68, %s71
    %p77 = scmp.eq.s32.totalorder %s9, 0
    %p78 = por %p76, %p77
    %p79 = scmp.ne.s32.totalorder %s68, %s71
    %p80 = scmp.eq.s32.totalorder %s14, 1
    %p81 = por %p79, %p80
    %p82 = scmp.ne.s32.totalorder %s71, %s72
    %p83 = scmp.eq.s32.totalorder %s14, 0
    %p84 = por %p82, %p83
    %p85 = scmp.ne.s32.totalorder %s71, %s72
    %p86 = scmp.eq.s32.totalorder %s15, 1
    %p87 = por %p85, %p86
    %p89 = scmp.ne.s32.totalorder %s72, %s88
    %p90 = scmp.eq.s32.totalorder %s15, 0
    %p91 = por %p89, %p90
    %s92 = ssub.s32 %s16, %s35
    %s93 = ssub.s32 %s18, %s27
    %s94 = sor.u32 %s92, %s93
    %p95 = scmp.eq.s32.totalorder %s94, 0
    %s97 = sadd.s32 %s96, 1
    %s98 = scalar_select %p95, %s96, %s97
    %p101 = pneg %p95
    %p102 = scmp.eq.s32.totalorder %s9, 1
    %p103 = por %p101, %p102
    %p104 = scmp.ne.s32.totalorder %s96, %s99
    %p105 = scmp.eq.s32.totalorder %s9, 0
    %p106 = por %p104, %p105
    %p107 = scmp.ne.s32.totalorder %s96, %s99
    %p108 = scmp.eq.s32.totalorder %s14, 1
    %p109 = por %p107, %p108
    %p110 = scmp.ne.s32.totalorder %s99, %s100
    %p111 = scmp.eq.s32.totalorder %s14, 0
    %p112 = por %p110, %p111
    %p113 = scmp.ne.s32.totalorder %s99, %s100
    %p114 = scmp.eq.s32.totalorder %s15, 1
    %p115 = por %p113, %p114
    %p117 = scmp.ne.s32.totalorder %s100, %s116
    %p118 = scmp.eq.s32.totalorder %s15, 0
    %p119 = por %p117, %p118
    %s120 = ssub.s32 %s16, %s35
    %s121 = ssub.s32 %s17, %s31
    %s122 = sor.u32 %s120, %s121
    %p123 = scmp.eq.s32.totalorder %s122, 0
    %s125 = sadd.s32 %s124, 1
    %s126 = scalar_select %p123, %s124, %s125
    %p129 = pneg %p123
    %p130 = scmp.eq.s32.totalorder %s9, 1
    %p131 = por %p129, %p130
    %p132 = scmp.ne.s32.totalorder %s124, %s127
    %p133 = scmp.eq.s32.totalorder %s9, 0
    %p134 = por %p132, %p133
    %p135 = scmp.ne.s32.totalorder %s124, %s127
    %p136 = scmp.eq.s32.totalorder %s14, 1
    %p137 = por %p135, %p136
    %p138 = scmp.ne.s32.totalorder %s127, %s128
    %p139 = scmp.eq.s32.totalorder %s14, 0
    %p140 = por %p138, %p139
    %p141 = scmp.ne.s32.totalorder %s127, %s128
    %p142 = scmp.eq.s32.totalorder %s15, 1
    %p143 = por %p141, %p142
    %p145 = scmp.ne.s32.totalorder %s128, %s144
    %p146 = scmp.eq.s32.totalorder %s15, 0
    %p147 = por %p145, %p146
    %p148 = scmp.le.s32.totalorder 1, %s9
    %p149 = scmp.lt.s32.totalorder %s9, 3
    %p150 = pnand %p148, %p149
    %p151 = pneg %p150
    // Predicated region
    $region9: #{decoder_forward.28} parent=5 // pred_check
      _
    $region10: #{decoder_forward.28} parent=5 // pred_check_branch
      %153 = sbr.rel (%p150) target = $region12
    $region11: #{decoder_forward.28} parent=5 // pred_region
      %s154 = ssub.s32 %s9, 1
    $region12: #{decoder_forward.28} parent=5 // pred_fallthru
      _
    %p155 = scmp.lt.s32.totalorder %s9, 2
    // Predicated region
    $region13: #{decoder_forward.28} parent=5 // pred_check
      %p156 = pneg %p155
    $region14: #{decoder_forward.28} parent=5 // pred_check_branch
      %158 = sbr.rel (%p156) target = $region16
    $region15: #{decoder_forward.28} parent=5 // pred_region
      // Predicated region
      $region17: #{decoder_forward.28} parent=15 // pred_check
        %p159 = pneg %p50
      $region18: #{decoder_forward.28} parent=15 // pred_check_branch
        %161 = sbr.rel (%p159) target = $region20
      $region19: #{decoder_forward.28} parent=15 // pred_region
        %p162 = scmp.lt.s32.totalorder %s16, 1
        %s163 = scalar_select %p162, %s16, 1
        %p164 = scmp.lt.s32.totalorder %s17, 0
        %s165 = scalar_select %p164, %s17, 0
        %s166 = sadd.s32 %s165, %s163
        %s167 = smul.addr %s166, 4
        %s168 = scalar_lea.vmem %s0, %s167
      $region20: #{decoder_forward.28} parent=15 // pred_fallthru
        _
      // Predicated region
      $region21: #{decoder_forward.28} parent=15 // pred_check
        %p169 = pneg %p78
      $region22: #{decoder_forward.28} parent=15 // pred_check_branch
        %171 = sbr.rel (%p169) target = $region24
      $region23: #{decoder_forward.28} parent=15 // pred_region
        %p172 = scmp.lt.s32.totalorder %s16, 1
        %s173 = scalar_select %p172, %s16, 1
        %p174 = scmp.lt.s32.totalorder %s18, 0
        %s175 = scalar_select %p174, %s18, 0
        %s176 = sadd.s32 %s175, %s173
        %s177 = smul.addr %s176, 4
        %s178 = scalar_lea.vmem %s1, %s177
      $region24: #{decoder_forward.28} parent=15 // pred_fallthru
        _
      // Predicated region
      $region25: #{decoder_forward.28} parent=15 // pred_check
        %p179 = pneg %p106
      $region26: #{decoder_forward.28} parent=15 // pred_check_branch
        %181 = sbr.rel (%p179) target = $region28
      $region27: #{decoder_forward.28} parent=15 // pred_region
        %p182 = scmp.lt.s32.totalorder %s16, 1
        %s183 = scalar_select %p182, %s16, 1
        %p184 = scmp.lt.s32.totalorder %s18, 0
        %s185 = scalar_select %p184, %s18, 0
        %s186 = sadd.s32 %s185, %s183
        %s187 = smul.addr %s186, 4
        %s188 = scalar_lea.vmem %s2, %s187
      $region28: #{decoder_forward.28} parent=15 // pred_fallthru
        _
    $region16: #{decoder_forward.28} parent=5 // pred_fallthru
      _
    %p189 = scmp.le.s32.totalorder 1, %s9
    %p190 = scmp.lt.s32.totalorder %s9, 3
    %p191 = pnand %p189, %p190
    %p192 = pneg %p191
    // Predicated region
    $region29: #{decoder_forward.28} parent=5 // pred_check
      _
    $region30: #{decoder_forward.28} parent=5 // pred_check_branch
      %194 = sbr.rel (%p191) target = $region32
    $region31: #{decoder_forward.28} parent=5 // pred_region
      %s195 = ssub.s32 %s9, 1
      %p196 = scmp.lt.s32.totalorder %s19, 1
      %s197 = scalar_select %p196, %s19, 1
      %p198 = scmp.lt.s32.totalorder %s20, 0
      %s199 = scalar_select %p198, %s20, 0
      %s200 = sadd.s32 %s199, %s197
      %s201 = smul.addr %s200, 4
      %s202 = scalar_lea.vmem %s0, %s201
      %p203 = pneg %p56
      %p204 = pneg %p53
      %p205 = scmp.lt.s32.totalorder %s19, 1
      %s206 = scalar_select %p205, %s19, 1
      %p207 = scmp.lt.s32.totalorder %s21, 0
      %s208 = scalar_select %p207, %s21, 0
      %s209 = sadd.s32 %s208, %s206
      %s210 = smul.addr %s209, 4
      %s211 = scalar_lea.vmem %s1, %s210
      %p212 = pneg %p84
      %p213 = pneg %p81
      %p214 = scmp.lt.s32.totalorder %s19, 1
      %s215 = scalar_select %p214, %s19, 1
      %p216 = scmp.lt.s32.totalorder %s21, 0
      %s217 = scalar_select %p216, %s21, 0
      %s218 = sadd.s32 %s217, %s215
      %s219 = smul.addr %s218, 4
      %s220 = scalar_lea.vmem %s2, %s219
      %p221 = pneg %p112
      %p222 = pneg %p109
      %p223 = pneg %p140
      %p224 = pneg %p137
      %p225 = scmp.lt.s32.totalorder %s19, 1
      %s226 = scalar_select %p225, %s19, 1
      %p227 = scmp.lt.s32.totalorder %s20, 0
      %s228 = scalar_select %p227, %s20, 0
      %s229 = sadd.s32 %s228, %s226
      %s230 = smul.addr %s229, 4
      %s231 = scalar_lea.vmem %s3, %s230
      %p232 = scmp.lt.s32.totalorder %s19, 1
      %s233 = scalar_select %p232, %s19, 1
      %p234 = scmp.lt.s32.totalorder %s20, 0
      %s235 = scalar_select %p234, %s20, 0
      %s236 = sadd.s32 %s235, %s233
      %s237 = smul.addr %s236, 4
      %s238 = scalar_lea.vmem %s0, %s237
      %p239 = scmp.lt.s32.totalorder %s19, 1
      %s240 = scalar_select %p239, %s19, 1
      %p241 = scmp.lt.s32.totalorder %s21, 0
      %s242 = scalar_select %p241, %s21, 0
      %s243 = sadd.s32 %s242, %s240
      %s244 = smul.addr %s243, 4
      %s245 = scalar_lea.vmem %s1, %s244
      %p246 = scmp.lt.s32.totalorder %s19, 1
      %s247 = scalar_select %p246, %s19, 1
      %p248 = scmp.lt.s32.totalorder %s21, 0
      %s249 = scalar_select %p248, %s21, 0
      %s250 = sadd.s32 %s249, %s247
      %s251 = smul.addr %s250, 4
      %s252 = scalar_lea.vmem %s2, %s251
      %p253 = scmp.lt.s32.totalorder %s19, 1
      %s254 = scalar_select %p253, %s19, 1
      %p255 = scmp.lt.s32.totalorder %s20, 0
      %s256 = scalar_select %p255, %s20, 0
      %s257 = sadd.s32 %s256, %s254
      %s258 = smul.addr %s257, 4
      %s259 = scalar_lea.vmem %s3, %s258
      %p261 = scmp.eq.s32.totalorder %s21, 0
      // Predicated region
      $region33: #{decoder_forward.28} parent=31 // pred_check
        %p262 = pneg %p261
      $region34: #{decoder_forward.28} parent=31 // pred_check_branch
        %264 = sbr.rel (%p262) target = $region36
      $region35: #{decoder_forward.28} parent=31 // pred_region
        %vm265 = vcmask 7168
        %266 = vst.msk [vmem:[#allocation2] sm:$0xff] %vm265, -1e+30
        %267 = vst.msk [vmem:[#allocation2 + $0x8] sm:$0xff] %vm265, -1e+30
        %268 = vst.msk [vmem:[#allocation2 + $0x10] sm:$0xff] %vm265, -1e+30
        %269 = vst.msk [vmem:[#allocation2 + $0x18] sm:$0xff] %vm265, -1e+30
        %270 = vst.msk [vmem:[#allocation3] sm:$0xff] %vm265, 0.0
        %271 = vst.msk [vmem:[#allocation3 + $0x8] sm:$0xff] %vm265, 0.0
        %272 = vst.msk [vmem:[#allocation3 + $0x10] sm:$0xff] %vm265, 0.0
        %273 = vst.msk [vmem:[#allocation3 + $0x18] sm:$0xff] %vm265, 0.0
        %vm274 = vcmask 64512
        %275 = vst.msk [vmem:[#allocation4] sm:$0xff] %vm274, 0.0
        %276 = vst.msk [vmem:[#allocation4 + $0x8] sm:$0xff] %vm274, 0.0
        %277 = vst.msk [vmem:[#allocation4 + $0x10] sm:$0xff] %vm274, 0.0
        %278 = vst.msk [vmem:[#allocation4 + $0x18] sm:$0xff] %vm274, 0.0
      $region36: #{decoder_forward.28} parent=31 // pred_fallthru
        _
      %v279 = vld [vmem:[%s238] sm:$0xf]
      %v280 = vld [vmem:[%s245] sm:$0xf]
      %v281 = vld [vmem:[%s252] sm:$0xf]
      %vm282 = vcmask 64512
      %v284 = vsel %vm282, %v279, 0
      %v287 = vsel %vm282, %v280, 0
      %289 = vmatprep.subr.bf16.mxu0 0
      %290 = vmatpush1.bf16.xpose.msra.mxu0 0
      %291 = vmatprep.subr.bf16.mxu0 0
      %292 = vmatpush1.bf16.xpose.msra.mxu0 0
      %293 = vmatprep.subr.bf16.mxu0 0
      %294 = vmatpush1.bf16.xpose.msra.mxu0 0
      %295 = vmatprep.subr.bf16.mxu0 0
      %296 = vmatpush1.bf16.xpose.msra.mxu0 0
      %297 = vmatprep.subr.bf16.mxu0 0
      %298 = vmatpush1.bf16.xpose.msra.mxu0 0
      %299 = vmatprep.subr.bf16.mxu0 0
      %300 = vmatpush1.bf16.xpose.msra.mxu0 0
      %301 = vmatprep.subr.bf16.mxu0 0
      %302 = vmatpush1.bf16.xpose.msra.mxu0 0
      %303 = vmatprep.subr.bf16.mxu0 0
      %304 = vmatpush1.bf16.xpose.msra.mxu0 %v287
      %305 = vmatprep.subr.bf16.mxu0 0
      %306 = vmatpush2.bf16.xpose.msra.mxu0 0
      %307 = vmatprep.subr.bf16.mxu0 0
      %308 = vmatpush2.bf16.xpose.msra.mxu0 0
      %309 = vmatprep.subr.bf16.mxu0 0
      %310 = vmatpush2.bf16.xpose.msra.mxu0 0
      %311 = vmatprep.subr.bf16.mxu0 0
      %312 = vmatpush2.bf16.xpose.msra.mxu0 0
      %313 = vmatprep.subr.bf16.mxu0 0
      %314 = vmatpush2.bf16.xpose.msra.mxu0 0
      %315 = vmatprep.subr.bf16.mxu0 0
      %316 = vmatpush2.bf16.xpose.msra.mxu0 0
      %317 = vmatprep.subr.bf16.mxu0 0
      %318 = vmatpush2.bf16.xpose.msra.mxu0 0
      %319 = vmatprep.subr.bf16.mxu0 0
      %320 = vmatpush2.bf16.xpose.msra.mxu0 0
      %321 = vmatprep.mubr.bf16.mxu0 0
      %322 = vmatmul.mubr.bf16.gmra.mxu0 %v284
      %v323 = vpop.f32.mrf.mxu0
      %v324 = vadd.f32 0.0, %v323
      %v325 = vpop.f32.mrf.mxu0
      %v326 = vpop.f32.mrf.mxu0
      %v327 = vpop.f32.mrf.mxu0
      %328 = vdwg.mxu0
      %v329 = vld [vmem:[#allocation2] sm:$0xff]
      %v330 = vsel %vm282, %v324, -inf
      %331 = vmax.xlane.f32.xlu0 %v330
      %v332 = vpop.xlane.xlu0 %331
      %v333 = vmax.f32 %v329, %v332
      %v334 = vsub.f32 %v329, %v333
      %v335 = vmul.f32 %v334, 1.442695
      %v336 = vpow.pop %v335
      %338 = vset.pattern.permute.xlu0 0
      %339 = vperm.xlu0 %338, %v333
      %v340 = vpop.permute.xlu0 %339
      %v342 = vsub.f32 %v324, %v340
      %v343 = vmul.f32 %v342, 1.442695
      %v344 = vpow.pop %v343
      %v345 = vld [vmem:[#allocation3] sm:$0xff]
      %v346 = vmul.f32 %v336, %v345
      %v347 = vsel %vm282, %v344, 0.0
      %348 = vadd.xlane.f32.xlu0 %v347
      %v349 = vpop.xlane.xlu0 %348
      %v350 = vadd.f32 %v346, %v349
      %vm351 = vcmask 7168
      %352 = vst.msk [vmem:[#allocation3] sm:$0xff] %vm351, %v350
      %v353 = vld [vmem:[#allocation4] sm:$0xff]
      %355 = vset.pattern.permute.xlu0 0
      %356 = vperm.xlu0 %355, %v336
      %v357 = vpop.permute.xlu0 %356
      %v359 = vmul.f32 %v357, %v353
      %v360 = vpack.c.bf16 %v344, %v344
      %v362 = vsel %vm282, %v360, 0
      %vm364 = vcmask 1043456
      %v366 = vsel %vm364, %v281, 0
      %368 = vmatprep.subr.bf16.mxu0 0
      %369 = vmatpush1.bf16.msra.mxu0 0
      %370 = vmatprep.subr.bf16.mxu0 0
      %371 = vmatpush1.bf16.msra.mxu0 0
      %372 = vmatprep.subr.bf16.mxu0 0
      %373 = vmatpush1.bf16.msra.mxu0 0
      %374 = vmatprep.subr.bf16.mxu0 0
      %375 = vmatpush1.bf16.msra.mxu0 0
      %376 = vmatprep.subr.bf16.mxu0 0
      %377 = vmatpush1.bf16.msra.mxu0 0
      %378 = vmatprep.subr.bf16.mxu0 0
      %379 = vmatpush1.bf16.msra.mxu0 0
      %380 = vmatprep.subr.bf16.mxu0 0
      %381 = vmatpush1.bf16.msra.mxu0 0
      %382 = vmatprep.subr.bf16.mxu0 0
      %383 = vmatpush1.bf16.msra.mxu0 %v366
      %384 = vmatprep.subr.bf16.mxu0 0
      %385 = vmatpush2.bf16.msra.mxu0 0
      %386 = vmatprep.subr.bf16.mxu0 0
      %387 = vmatpush2.bf16.msra.mxu0 0
      %388 = vmatprep.subr.bf16.mxu0 0
      %389 = vmatpush2.bf16.msra.mxu0 0
      %390 = vmatprep.subr.bf16.mxu0 0
      %391 = vmatpush2.bf16.msra.mxu0 0
      %392 = vmatprep.subr.bf16.mxu0 0
      %393 = vmatpush2.bf16.msra.mxu0 0
      %394 = vmatprep.subr.bf16.mxu0 0
      %395 = vmatpush2.bf16.msra.mxu0 0
      %396 = vmatprep.subr.bf16.mxu0 0
      %397 = vmatpush2.bf16.msra.mxu0 0
      %398 = vmatprep.subr.bf16.mxu0 0
      %399 = vmatpush2.bf16.msra.mxu0 0
      %400 = vmatprep.mubr.bf16.mxu0 0
      %401 = vmatmul.mubr.bf16.gmra.mxu0 %v362
      %v402 = vpop.f32.mrf.mxu0
      %v403 = vadd.f32 0.0, %v402
      %v404 = vpop.f32.mrf.mxu0
      %v405 = vpop.f32.mrf.mxu0
      %v406 = vpop.f32.mrf.mxu0
      %407 = vdwg.mxu0
      %v408 = vadd.f32 %v359, %v403
      %409 = vst.msk [vmem:[#allocation4] sm:$0xff] %vm282, %v408
      %410 = vst.msk [vmem:[#allocation2] sm:$0xff] %vm351, %v333
      %v412 = vunpack.c.l.b16 %v279
      %v413 = vpack.c.b16 %v412, %v412
      %414 = vrot.lane.b32.xlu0 %v413, 120
      %v415 = vpop.permute.xlu0 %414
      %v417 = vunpack.c.l.b16 %v280
      %v418 = vpack.c.b16 %v417, %v417
      %419 = vrot.lane.b32.xlu0 %v418, 120
      %v420 = vpop.permute.xlu0 %419
      %v422 = vsel %vm282, %v415, 0
      %v425 = vsel %vm282, %v420, 0
      %427 = vmatprep.subr.bf16.mxu0 0
      %428 = vmatpush1.bf16.xpose.msra.mxu0 0
      %429 = vmatprep.subr.bf16.mxu0 0
      %430 = vmatpush1.bf16.xpose.msra.mxu0 0
      %431 = vmatprep.subr.bf16.mxu0 0
      %432 = vmatpush1.bf16.xpose.msra.mxu0 0
      %433 = vmatprep.subr.bf16.mxu0 0
      %434 = vmatpush1.bf16.xpose.msra.mxu0 0
      %435 = vmatprep.subr.bf16.mxu0 0
      %436 = vmatpush1.bf16.xpose.msra.mxu0 0
      %437 = vmatprep.subr.bf16.mxu0 0
      %438 = vmatpush1.bf16.xpose.msra.mxu0 0
      %439 = vmatprep.subr.bf16.mxu0 0
      %440 = vmatpush1.bf16.xpose.msra.mxu0 0
      %441 = vmatprep.subr.bf16.mxu0 0
      %442 = vmatpush1.bf16.xpose.msra.mxu0 %v425
      %443 = vmatprep.subr.bf16.mxu0 0
      %444 = vmatpush2.bf16.xpose.msra.mxu0 0
      %445 = vmatprep.subr.bf16.mxu0 0
      %446 = vmatpush2.bf16.xpose.msra.mxu0 0
      %447 = vmatprep.subr.bf16.mxu0 0
      %448 = vmatpush2.bf16.xpose.msra.mxu0 0
      %449 = vmatprep.subr.bf16.mxu0 0
      %450 = vmatpush2.bf16.xpose.msra.mxu0 0
      %451 = vmatprep.subr.bf16.mxu0 0
      %452 = vmatpush2.bf16.xpose.msra.mxu0 0
      %453 = vmatprep.subr.bf16.mxu0 0
      %454 = vmatpush2.bf16.xpose.msra.mxu0 0
      %455 = vmatprep.subr.bf16.mxu0 0
      %456 = vmatpush2.bf16.xpose.msra.mxu0 0
      %457 = vmatprep.subr.bf16.mxu0 0
      %458 = vmatpush2.bf16.xpose.msra.mxu0 0
      %459 = vmatprep.mubr.bf16.mxu0 0
      %460 = vmatmul.mubr.bf16.gmra.mxu0 %v422
      %v461 = vpop.f32.mrf.mxu0
      %v462 = vadd.f32 0.0, %v461
      %v463 = vpop.f32.mrf.mxu0
      %v464 = vpop.f32.mrf.mxu0
      %v465 = vpop.f32.mrf.mxu0
      %466 = vdwg.mxu0
      %s467 = scalar_lea.vmem [#allocation2], 8
      %v468 = vld [vmem:[%s467] sm:$0xff]
      %v469 = vsel %vm282, %v462, -inf
      %470 = vmax.xlane.f32.xlu0 %v469
      %v471 = vpop.xlane.xlu0 %470
      %v472 = vmax.f32 %v468, %v471
      %v473 = vsub.f32 %v468, %v472
      %v474 = vmul.f32 %v473, 1.442695
      %v475 = vpow.pop %v474
      %477 = vset.pattern.permute.xlu0 0
      %478 = vperm.xlu0 %477, %v472
      %v479 = vpop.permute.xlu0 %478
      %v481 = vsub.f32 %v462, %v479
      %v482 = vmul.f32 %v481, 1.442695
      %v483 = vpow.pop %v482
      %s484 = scalar_lea.vmem [#allocation3], 8
      %v485 = vld [vmem:[%s484] sm:$0xff]
      %v486 = vmul.f32 %v475, %v485
      %v487 = vsel %vm282, %v483, 0.0
      %488 = vadd.xlane.f32.xlu0 %v487
      %v489 = vpop.xlane.xlu0 %488
      %v490 = vadd.f32 %v486, %v489
      %491 = vst.msk [vmem:[%s484] sm:$0xff] %vm351, %v490
      %s492 = scalar_lea.vmem [#allocation4], 8
      %v493 = vld [vmem:[%s492] sm:$0xff]
      %495 = vset.pattern.permute.xlu0 0
      %496 = vperm.xlu0 %495, %v475
      %v497 = vpop.permute.xlu0 %496
      %v499 = vmul.f32 %v497, %v493
      %v500 = vpack.c.bf16 %v483, %v483
      %v502 = vunpack.c.l.b16 %v281
      %v503 = vpack.c.b16 %v502, %v502
      %504 = vrot.lane.b32.xlu0 %v503, 120
      %v505 = vpop.permute.xlu0 %504
      %v507 = vsel %vm282, %v500, 0
      %v510 = vsel %vm364, %v505, 0
      %512 = vmatprep.subr.bf16.mxu0 0
      %513 = vmatpush1.bf16.msra.mxu0 0
      %514 = vmatprep.subr.bf16.mxu0 0
      %515 = vmatpush1.bf16.msra.mxu0 0
      %516 = vmatprep.subr.bf16.mxu0 0
      %517 = vmatpush1.bf16.msra.mxu0 0
      %518 = vmatprep.subr.bf16.mxu0 0
      %519 = vmatpush1.bf16.msra.mxu0 0
      %520 = vmatprep.subr.bf16.mxu0 0
      %521 = vmatpush1.bf16.msra.mxu0 0
      %522 = vmatprep.subr.bf16.mxu0 0
      %523 = vmatpush1.bf16.msra.mxu0 0
      %524 = vmatprep.subr.bf16.mxu0 0
      %525 = vmatpush1.bf16.msra.mxu0 0
      %526 = vmatprep.subr.bf16.mxu0 0
      %527 = vmatpush1.bf16.msra.mxu0 %v510
      %528 = vmatprep.subr.bf16.mxu0 0
      %529 = vmatpush2.bf16.msra.mxu0 0
      %530 = vmatprep.subr.bf16.mxu0 0
      %531 = vmatpush2.bf16.msra.mxu0 0
      %532 = vmatprep.subr.bf16.mxu0 0
      %533 = vmatpush2.bf16.msra.mxu0 0
      %534 = vmatprep.subr.bf16.mxu0 0
      %535 = vmatpush2.bf16.msra.mxu0 0
      %536 = vmatprep.subr.bf16.mxu0 0
      %537 = vmatpush2.bf16.msra.mxu0 0
      %538 = vmatprep.subr.bf16.mxu0 0
      %539 = vmatpush2.bf16.msra.mxu0 0
      %540 = vmatprep.subr.bf16.mxu0 0
      %541 = vmatpush2.bf16.msra.mxu0 0
      %542 = vmatprep.subr.bf16.mxu0 0
      %543 = vmatpush2.bf16.msra.mxu0 0
      %544 = vmatprep.mubr.bf16.mxu0 0
      %545 = vmatmul.mubr.bf16.gmra.mxu0 %v507
      %v546 = vpop.f32.mrf.mxu0
      %v547 = vadd.f32 0.0, %v546
      %v548 = vpop.f32.mrf.mxu0
      %v549 = vpop.f32.mrf.mxu0
      %v550 = vpop.f32.mrf.mxu0
      %551 = vdwg.mxu0
      %v552 = vadd.f32 %v499, %v547
      %553 = vst.msk [vmem:[%s492] sm:$0xff] %vm282, %v552
      %554 = vst.msk [vmem:[%s467] sm:$0xff] %vm351, %v472
      %555 = vrot.lane.b32.xlu0 %v413, 112
      %v556 = vpop.permute.xlu0 %555
      %557 = vrot.lane.b32.xlu0 %v418, 112
      %v558 = vpop.permute.xlu0 %557
      %v560 = vsel %vm282, %v556, 0
      %v563 = vsel %vm282, %v558, 0
      %565 = vmatprep.subr.bf16.mxu0 0
      %566 = vmatpush1.bf16.xpose.msra.mxu0 0
      %567 = vmatprep.subr.bf16.mxu0 0
      %568 = vmatpush1.bf16.xpose.msra.mxu0 0
      %569 = vmatprep.subr.bf16.mxu0 0
      %570 = vmatpush1.bf16.xpose.msra.mxu0 0
      %571 = vmatprep.subr.bf16.mxu0 0
      %572 = vmatpush1.bf16.xpose.msra.mxu0 0
      %573 = vmatprep.subr.bf16.mxu0 0
      %574 = vmatpush1.bf16.xpose.msra.mxu0 0
      %575 = vmatprep.subr.bf16.mxu0 0
      %576 = vmatpush1.bf16.xpose.msra.mxu0 0
      %577 = vmatprep.subr.bf16.mxu0 0
      %578 = vmatpush1.bf16.xpose.msra.mxu0 0
      %579 = vmatprep.subr.bf16.mxu0 0
      %580 = vmatpush1.bf16.xpose.msra.mxu0 %v563
      %581 = vmatprep.subr.bf16.mxu0 0
      %582 = vmatpush2.bf16.xpose.msra.mxu0 0
      %583 = vmatprep.subr.bf16.mxu0 0
      %584 = vmatpush2.bf16.xpose.msra.mxu0 0
      %585 = vmatprep.subr.bf16.mxu0 0
      %586 = vmatpush2.bf16.xpose.msra.mxu0 0
      %587 = vmatprep.subr.bf16.mxu0 0
      %588 = vmatpush2.bf16.xpose.msra.mxu0 0
      %589 = vmatprep.subr.bf16.mxu0 0
      %590 = vmatpush2.bf16.xpose.msra.mxu0 0
      %591 = vmatprep.subr.bf16.mxu0 0
      %592 = vmatpush2.bf16.xpose.msra.mxu0 0
      %593 = vmatprep.subr.bf16.mxu0 0
      %594 = vmatpush2.bf16.xpose.msra.mxu0 0
      %595 = vmatprep.subr.bf16.mxu0 0
      %596 = vmatpush2.bf16.xpose.msra.mxu0 0
      %597 = vmatprep.mubr.bf16.mxu0 0
      %598 = vmatmul.mubr.bf16.gmra.mxu0 %v560
      %v599 = vpop.f32.mrf.mxu0
      %v600 = vadd.f32 0.0, %v599
      %v601 = vpop.f32.mrf.mxu0
      %v602 = vpop.f32.mrf.mxu0
      %v603 = vpop.f32.mrf.mxu0
      %604 = vdwg.mxu0
      %s605 = scalar_lea.vmem [#allocation2], 16
      %v606 = vld [vmem:[%s605] sm:$0xff]
      %v607 = vsel %vm282, %v600, -inf
      %608 = vmax.xlane.f32.xlu0 %v607
      %v609 = vpop.xlane.xlu0 %608
      %v610 = vmax.f32 %v606, %v609
      %v611 = vsub.f32 %v606, %v610
      %v612 = vmul.f32 %v611, 1.442695
      %v613 = vpow.pop %v612
      %615 = vset.pattern.permute.xlu0 0
      %616 = vperm.xlu0 %615, %v610
      %v617 = vpop.permute.xlu0 %616
      %v619 = vsub.f32 %v600, %v617
      %v620 = vmul.f32 %v619, 1.442695
      %v621 = vpow.pop %v620
      %s622 = scalar_lea.vmem [#allocation3], 16
      %v623 = vld [vmem:[%s622] sm:$0xff]
      %v624 = vmul.f32 %v613, %v623
      %v625 = vsel %vm282, %v621, 0.0
      %626 = vadd.xlane.f32.xlu0 %v625
      %v627 = vpop.xlane.xlu0 %626
      %v628 = vadd.f32 %v624, %v627
      %629 = vst.msk [vmem:[%s622] sm:$0xff] %vm351, %v628
      %s630 = scalar_lea.vmem [#allocation4], 16
      %v631 = vld [vmem:[%s630] sm:$0xff]
      %633 = vset.pattern.permute.xlu0 0
      %634 = vperm.xlu0 %633, %v613
      %v635 = vpop.permute.xlu0 %634
      %v637 = vmul.f32 %v635, %v631
      %v638 = vpack.c.bf16 %v621, %v621
      %639 = vrot.lane.b32.xlu0 %v503, 112
      %v640 = vpop.permute.xlu0 %639
      %v642 = vsel %vm282, %v638, 0
      %v645 = vsel %vm364, %v640, 0
      %647 = vmatprep.subr.bf16.mxu0 0
      %648 = vmatpush1.bf16.msra.mxu0 0
      %649 = vmatprep.subr.bf16.mxu0 0
      %650 = vmatpush1.bf16.msra.mxu0 0
      %651 = vmatprep.subr.bf16.mxu0 0
      %652 = vmatpush1.bf16.msra.mxu0 0
      %653 = vmatprep.subr.bf16.mxu0 0
      %654 = vmatpush1.bf16.msra.mxu0 0
      %655 = vmatprep.subr.bf16.mxu0 0
      %656 = vmatpush1.bf16.msra.mxu0 0
      %657 = vmatprep.subr.bf16.mxu0 0
      %658 = vmatpush1.bf16.msra.mxu0 0
      %659 = vmatprep.subr.bf16.mxu0 0
      %660 = vmatpush1.bf16.msra.mxu0 0
      %661 = vmatprep.subr.bf16.mxu0 0
      %662 = vmatpush1.bf16.msra.mxu0 %v645
      %663 = vmatprep.subr.bf16.mxu0 0
      %664 = vmatpush2.bf16.msra.mxu0 0
      %665 = vmatprep.subr.bf16.mxu0 0
      %666 = vmatpush2.bf16.msra.mxu0 0
      %667 = vmatprep.subr.bf16.mxu0 0
      %668 = vmatpush2.bf16.msra.mxu0 0
      %669 = vmatprep.subr.bf16.mxu0 0
      %670 = vmatpush2.bf16.msra.mxu0 0
      %671 = vmatprep.subr.bf16.mxu0 0
      %672 = vmatpush2.bf16.msra.mxu0 0
      %673 = vmatprep.subr.bf16.mxu0 0
      %674 = vmatpush2.bf16.msra.mxu0 0
      %675 = vmatprep.subr.bf16.mxu0 0
      %676 = vmatpush2.bf16.msra.mxu0 0
      %677 = vmatprep.subr.bf16.mxu0 0
      %678 = vmatpush2.bf16.msra.mxu0 0
      %679 = vmatprep.mubr.bf16.mxu0 0
      %680 = vmatmul.mubr.bf16.gmra.mxu0 %v642
      %v681 = vpop.f32.mrf.mxu0
      %v682 = vadd.f32 0.0, %v681
      %v683 = vpop.f32.mrf.mxu0
      %v684 = vpop.f32.mrf.mxu0
      %v685 = vpop.f32.mrf.mxu0
      %686 = vdwg.mxu0
      %v687 = vadd.f32 %v637, %v682
      %688 = vst.msk [vmem:[%s630] sm:$0xff] %vm282, %v687
      %689 = vst.msk [vmem:[%s605] sm:$0xff] %vm351, %v610
      %690 = vrot.lane.b32.xlu0 %v413, 104
      %v691 = vpop.permute.xlu0 %690
      %692 = vrot.lane.b32.xlu0 %v418, 104
      %v693 = vpop.permute.xlu0 %692
      %v695 = vsel %vm282, %v691, 0
      %v698 = vsel %vm282, %v693, 0
      %700 = vmatprep.subr.bf16.mxu0 0
      %701 = vmatpush1.bf16.xpose.msra.mxu0 0
      %702 = vmatprep.subr.bf16.mxu0 0
      %703 = vmatpush1.bf16.xpose.msra.mxu0 0
      %704 = vmatprep.subr.bf16.mxu0 0
      %705 = vmatpush1.bf16.xpose.msra.mxu0 0
      %706 = vmatprep.subr.bf16.mxu0 0
      %707 = vmatpush1.bf16.xpose.msra.mxu0 0
      %708 = vmatprep.subr.bf16.mxu0 0
      %709 = vmatpush1.bf16.xpose.msra.mxu0 0
      %710 = vmatprep.subr.bf16.mxu0 0
      %711 = vmatpush1.bf16.xpose.msra.mxu0 0
      %712 = vmatprep.subr.bf16.mxu0 0
      %713 = vmatpush1.bf16.xpose.msra.mxu0 0
      %714 = vmatprep.subr.bf16.mxu0 0
      %715 = vmatpush1.bf16.xpose.msra.mxu0 %v698
      %716 = vmatprep.subr.bf16.mxu0 0
      %717 = vmatpush2.bf16.xpose.msra.mxu0 0
      %718 = vmatprep.subr.bf16.mxu0 0
      %719 = vmatpush2.bf16.xpose.msra.mxu0 0
      %720 = vmatprep.subr.bf16.mxu0 0
      %721 = vmatpush2.bf16.xpose.msra.mxu0 0
      %722 = vmatprep.subr.bf16.mxu0 0
      %723 = vmatpush2.bf16.xpose.msra.mxu0 0
      %724 = vmatprep.subr.bf16.mxu0 0
      %725 = vmatpush2.bf16.xpose.msra.mxu0 0
      %726 = vmatprep.subr.bf16.mxu0 0
      %727 = vmatpush2.bf16.xpose.msra.mxu0 0
      %728 = vmatprep.subr.bf16.mxu0 0
      %729 = vmatpush2.bf16.xpose.msra.mxu0 0
      %730 = vmatprep.subr.bf16.mxu0 0
      %731 = vmatpush2.bf16.xpose.msra.mxu0 0
      %732 = vmatprep.mubr.bf16.mxu0 0
      %733 = vmatmul.mubr.bf16.gmra.mxu0 %v695
      %v734 = vpop.f32.mrf.mxu0
      %v735 = vadd.f32 0.0, %v734
      %v736 = vpop.f32.mrf.mxu0
      %v737 = vpop.f32.mrf.mxu0
      %v738 = vpop.f32.mrf.mxu0
      %739 = vdwg.mxu0
      %s740 = scalar_lea.vmem [#allocation2], 24
      %v741 = vld [vmem:[%s740] sm:$0xff]
      %v742 = vsel %vm282, %v735, -inf
      %743 = vmax.xlane.f32.xlu0 %v742
      %v744 = vpop.xlane.xlu0 %743
      %v745 = vmax.f32 %v741, %v744
      %v746 = vsub.f32 %v741, %v745
      %v747 = vmul.f32 %v746, 1.442695
      %v748 = vpow.pop %v747
      %750 = vset.pattern.permute.xlu0 0
      %751 = vperm.xlu0 %750, %v745
      %v752 = vpop.permute.xlu0 %751
      %v754 = vsub.f32 %v735, %v752
      %v755 = vmul.f32 %v754, 1.442695
      %v756 = vpow.pop %v755
      %s757 = scalar_lea.vmem [#allocation3], 24
      %v758 = vld [vmem:[%s757] sm:$0xff]
      %v759 = vmul.f32 %v748, %v758
      %v760 = vsel %vm282, %v756, 0.0
      %761 = vadd.xlane.f32.xlu0 %v760
      %v762 = vpop.xlane.xlu0 %761
      %v763 = vadd.f32 %v759, %v762
      %764 = vst.msk [vmem:[%s757] sm:$0xff] %vm351, %v763
      %s765 = scalar_lea.vmem [#allocation4], 24
      %v766 = vld [vmem:[%s765] sm:$0xff]
      %768 = vset.pattern.permute.xlu0 0
      %769 = vperm.xlu0 %768, %v748
      %v770 = vpop.permute.xlu0 %769
      %v772 = vmul.f32 %v770, %v766
      %v773 = vpack.c.bf16 %v756, %v756
      %774 = vrot.lane.b32.xlu0 %v503, 104
      %v775 = vpop.permute.xlu0 %774
      %v777 = vsel %vm282, %v773, 0
      %v780 = vsel %vm364, %v775, 0
      %782 = vmatprep.subr.bf16.mxu0 0
      %783 = vmatpush1.bf16.msra.mxu0 0
      %784 = vmatprep.subr.bf16.mxu0 0
      %785 = vmatpush1.bf16.msra.mxu0 0
      %786 = vmatprep.subr.bf16.mxu0 0
      %787 = vmatpush1.bf16.msra.mxu0 0
      %788 = vmatprep.subr.bf16.mxu0 0
      %789 = vmatpush1.bf16.msra.mxu0 0
      %790 = vmatprep.subr.bf16.mxu0 0
      %791 = vmatpush1.bf16.msra.mxu0 0
      %792 = vmatprep.subr.bf16.mxu0 0
      %793 = vmatpush1.bf16.msra.mxu0 0
      %794 = vmatprep.subr.bf16.mxu0 0
      %795 = vmatpush1.bf16.msra.mxu0 0
      %796 = vmatprep.subr.bf16.mxu0 0
      %797 = vmatpush1.bf16.msra.mxu0 %v780
      %798 = vmatprep.subr.bf16.mxu0 0
      %799 = vmatpush2.bf16.msra.mxu0 0
      %800 = vmatprep.subr.bf16.mxu0 0
      %801 = vmatpush2.bf16.msra.mxu0 0
      %802 = vmatprep.subr.bf16.mxu0 0
      %803 = vmatpush2.bf16.msra.mxu0 0
      %804 = vmatprep.subr.bf16.mxu0 0
      %805 = vmatpush2.bf16.msra.mxu0 0
      %806 = vmatprep.subr.bf16.mxu0 0
      %807 = vmatpush2.bf16.msra.mxu0 0
      %808 = vmatprep.subr.bf16.mxu0 0
      %809 = vmatpush2.bf16.msra.mxu0 0
      %810 = vmatprep.subr.bf16.mxu0 0
      %811 = vmatpush2.bf16.msra.mxu0 0
      %812 = vmatprep.subr.bf16.mxu0 0
      %813 = vmatpush2.bf16.msra.mxu0 0
      %814 = vmatprep.mubr.bf16.mxu0 0
      %815 = vmatmul.mubr.bf16.gmra.mxu0 %v777
      %v816 = vpop.f32.mrf.mxu0
      %v817 = vadd.f32 0.0, %v816
      %v818 = vpop.f32.mrf.mxu0
      %v819 = vpop.f32.mrf.mxu0
      %v820 = vpop.f32.mrf.mxu0
      %821 = vdwg.mxu0
      %v822 = vadd.f32 %v772, %v817
      %823 = vst.msk [vmem:[%s765] sm:$0xff] %vm282, %v822
      %824 = vst.msk [vmem:[%s740] sm:$0xff] %vm351, %v745
      // Predicated region
      $region37: #{decoder_forward.28} parent=31 // pred_check
        %p825 = pneg %p261
      $region38: #{decoder_forward.28} parent=31 // pred_check_branch
        %827 = sbr.rel (%p825) target = $region40
      $region39: #{decoder_forward.28} parent=31 // pred_region
        %v828 = vld [vmem:[#allocation3] sm:$0xff]
        %v829 = vrcp.pop %v828
        %v830 = vld [vmem:[#allocation4] sm:$0xff]
        %832 = vset.pattern.permute.xlu0 0
        %833 = vperm.xlu0 %832, %v829
        %v834 = vpop.permute.xlu0 %833
        %v836 = vmul.f32 %v830, %v834
        %v837 = vld [vmem:[%s484] sm:$0xff]
        %v838 = vrcp.pop %v837
        %v839 = vld [vmem:[%s492] sm:$0xff]
        %841 = vset.pattern.permute.xlu0 0
        %842 = vperm.xlu0 %841, %v838
        %v843 = vpop.permute.xlu0 %842
        %v845 = vmul.f32 %v839, %v843
        %v846 = vld [vmem:[%s622] sm:$0xff]
        %v847 = vrcp.pop %v846
        %v848 = vld [vmem:[%s630] sm:$0xff]
        %850 = vset.pattern.permute.xlu0 0
        %851 = vperm.xlu0 %850, %v847
        %v852 = vpop.permute.xlu0 %851
        %v854 = vmul.f32 %v848, %v852
        %v855 = vld [vmem:[%s757] sm:$0xff]
        %v856 = vrcp.pop %v855
        %v857 = vld [vmem:[%s765] sm:$0xff]
        %859 = vset.pattern.permute.xlu0 0
        %860 = vperm.xlu0 %859, %v856
        %v861 = vpop.permute.xlu0 %860
        %v863 = vmul.f32 %v857, %v861
        %865 = vrot.lane.b32.xlu0 %v845, 8
        %v866 = vpop.permute.xlu0 %865
        %869 = vrot.lane.b32.xlu0 %v854, 16
        %v870 = vpop.permute.xlu0 %869
        %873 = vrot.lane.b32.xlu0 %v863, 24
        %v874 = vpop.permute.xlu0 %873
        %v876 = vsel %vm282, %v836, %v866
        %vm877 = vcmask 130048
        %v878 = vsel %vm877, %v876, %v870
        %vm879 = vcmask 195584
        %v880 = vsel %vm879, %v878, %v874
        %v881 = vpack.c.bf16 %v880, %v880
        %vm882 = vcmask 257024
        %883 = vst.msk [vmem:[%s259] sm:$0xf] %vm882, %v881
      $region40: #{decoder_forward.28} parent=31 // pred_fallthru
        _
      %p884 = scmp.lt.s32.totalorder %s19, 1
      %s885 = scalar_select %p884, %s19, 1
      %p886 = scmp.lt.s32.totalorder %s20, 0
      %s887 = scalar_select %p886, %s20, 0
      %s888 = sadd.s32 %s887, %s885
      %s889 = smul.addr %s888, 4
      %s890 = scalar_lea.vmem %s3, %s889
      // Predicated region
      $region41: #{decoder_forward.28} parent=31 // pred_check
        %p891 = pneg %p137
      $region42: #{decoder_forward.28} parent=31 // pred_check_branch
        %893 = sbr.rel (%p891) target = $region44
      $region43: #{decoder_forward.28} parent=31 // pred_region
        _
      $region44: #{decoder_forward.28} parent=31 // pred_fallthru
        _
    $region32: #{decoder_forward.28} parent=5 // pred_fallthru
      _
    %p894 = scmp.le.s32.totalorder 2, %s9
    // Predicated region
    $region45: #{decoder_forward.28} parent=5 // pred_check
      %p895 = pneg %p894
    $region46: #{decoder_forward.28} parent=5 // pred_check_branch
      %897 = sbr.rel (%p895) target = $region48
    $region47: #{decoder_forward.28} parent=5 // pred_region
      %s898 = ssub.s32 %s9, 2
      // Predicated region
      $region49: #{decoder_forward.28} parent=47 // pred_check
        %p899 = pneg %p143
      $region50: #{decoder_forward.28} parent=47 // pred_check_branch
        %901 = sbr.rel (%p899) target = $region52
      $region51: #{decoder_forward.28} parent=47 // pred_region
        %p902 = scmp.lt.s32.totalorder %s22, 1
        %s903 = scalar_select %p902, %s22, 1
        %p904 = scmp.lt.s32.totalorder %s23, 0
        %s905 = scalar_select %p904, %s23, 0
        %s906 = sadd.s32 %s905, %s903
        %s907 = smul.addr %s906, 4
        %s908 = scalar_lea.vmem %s3, %s907
      $region52: #{decoder_forward.28} parent=47 // pred_fallthru
        _
    $region48: #{decoder_forward.28} parent=5 // pred_fallthru
      _
  $region6: #{decoder_forward.28} parent=0 // loop_footer
    %s13 = sadd.s32 1, %s9
  $region7: #{decoder_forward.28} parent=0 // loop_footer_branch
    %8 = sbr.rel target = $region3
  $region8: #{decoder_forward.28} parent=0 // loop_exit
    _

</llo_original>
